<compile_context>
chip_gen: v6e
topology: v6e:2x2x1
jax: 0.10.0
libtpu: 0.0.40
codegen_flags: <defaults>
</compile_context>

<pallas_src>
import math
import jax
import jax.numpy as jnp
from jax.experimental import pallas as pl
from jax.experimental.pallas import tpu as pltpu

# ----- small, TPU-friendly config (mirrors GPTConfig fields) -----
B, T = 2, 8                 # batch, sequence
C = 32                      # n_embd
N_HEAD = 4
HEAD_DIM = C // N_HEAD
N_LAYER = 2
VOCAB = 128                 # vocab_size (lane-dense logits: last dim == 128)
BLOCK_SIZE = 16             # block_size (positional table)
EPS = 1e-5                  # nn.LayerNorm default eps

# rows in the packed "small params" array (per layer):
#   0 ln1_w, 1 ln1_b, 2 b_q, 3 b_k, 4 b_v, 5 b_proj,
#   6 ln2_w, 7 ln2_b, 8..11 b_fc (4 chunks of C), 12 b_proj2, 13..15 pad
# layer index N_LAYER holds the final LayerNorm: 0 lnf_w, 1 lnf_b.
_SMALL_ROWS = 16


# ---------------- shared math helpers (pure jnp, usable in-kernel) ----------
def _layernorm(x, w, b):
    mu = jnp.mean(x, axis=-1, keepdims=True)
    var = jnp.mean((x - mu) ** 2, axis=-1, keepdims=True)
    return (x - mu) * jax.lax.rsqrt(var + EPS) * w + b


def _gelu_tanh(x):
    c = math.sqrt(2.0 / math.pi)
    return 0.5 * x * (1.0 + jnp.tanh(c * (x + 0.044715 * x * x * x)))


def _split_heads(z2d):
    # (T, C) -> (N_HEAD, T, HEAD_DIM): leading-batch layout for batched einsum.
    return jnp.concatenate(
        [z2d[None, :, h * HEAD_DIM:(h + 1) * HEAD_DIM] for h in range(N_HEAD)],
        axis=0)


def _merge_heads(z3d):
    # (N_HEAD, T, HEAD_DIM) -> (T, C)
    return jnp.concatenate([z3d[h] for h in range(N_HEAD)], axis=-1)


# ---------------- fused GPT forward kernel ----------------------------------
def gpt_kernel(x_ref, wcat_ref, wproj2_ref, small_ref, wlm_ref, o_ref):
    """One batch element (one grid step): all blocks + final LN + lm_head."""
    xf = x_ref[...]                                     # (T, C) f32 residual

    scale = 1.0 / math.sqrt(HEAD_DIM)
    row = jax.lax.broadcasted_iota(jnp.int32, (T, T), 0)
    col = jax.lax.broadcasted_iota(jnp.int32, (T, T), 1)
    # additive causal mask bias (add, not select; finite => NaN-safe)
    mask_bias = jnp.where(col <= row, jnp.float32(0.0), jnp.float32(-1e30))

    for l in range(N_LAYER):                            # static unroll (tiny)
        sp = small_ref[l]                               # (16, C) f32 small params
        wcat = wcat_ref[l]                              # (C, 8C) bf16: [Wqkv|Wproj|Wfc]

        # ---- causal self-attention: x = x + proj(attn(ln1(x))) ----
        h = _layernorm(xf, sp[0:1], sp[1:2])
        qkv = jnp.dot(h.astype(jnp.bfloat16), wcat[:, 0:3 * C],
                      preferred_element_type=jnp.float32)        # (T, 3C) f32
        q = _split_heads(qkv[:, 0 * C:1 * C] + sp[2:3])          # (H, T, d)
        k = _split_heads(qkv[:, 1 * C:2 * C] + sp[3:4])
        v = _split_heads(qkv[:, 2 * C:3 * C] + sp[4:5])

        # one head-batched score matmul + softmax + one context matmul
        s = jnp.einsum('htd,hsd->hts', q, k,
                       preferred_element_type=jnp.float32) * scale
        s = s + mask_bias[None, :, :]
        s = s - jnp.max(s, axis=-1, keepdims=True)
        p = jnp.exp(s)
        p = p * pl.reciprocal(jnp.sum(p, axis=-1, keepdims=True), approx=True)
        ctx = jnp.einsum('hts,hsd->htd', p, v,
                         preferred_element_type=jnp.float32)     # (H, T, d)
        y = _merge_heads(ctx)                                    # (T, C)
        xf = xf + jnp.dot(y.astype(jnp.bfloat16), wcat[:, 3 * C:4 * C],
                          preferred_element_type=jnp.float32) + sp[5:6]

        # ---- MLP: x = x + proj2(gelu(fc(ln2(x)))) ----
        h2 = _layernorm(xf, sp[6:7], sp[7:8])
        b_fc = jnp.concatenate([sp[8:9], sp[9:10], sp[10:11], sp[11:12]],
                               axis=-1)                          # (1, 4C)
        hfc = jnp.dot(h2.astype(jnp.bfloat16), wcat[:, 4 * C:8 * C],
                      preferred_element_type=jnp.float32) + b_fc
        hfc = _gelu_tanh(hfc)
        xf = xf + jnp.dot(hfc.astype(jnp.bfloat16), wproj2_ref[l],
                          preferred_element_type=jnp.float32) + sp[12:13]

    # ---- final LayerNorm + tied lm_head (no bias) ----
    spf = small_ref[N_LAYER]
    hf = _layernorm(xf, spf[0:1], spf[1:2])
    o_ref[...] = jnp.dot(hf.astype(jnp.bfloat16), wlm_ref[...],  # (T, 128) lanes
                         preferred_element_type=jnp.float32)


# ---------------- wrapper ----------------------------------------------------
def gpt_pallas(x_flat, wcat, wproj2, small, wlm_t):
    return pl.pallas_call(
        gpt_kernel,
        out_shape=jax.ShapeDtypeStruct((B * T, VOCAB), jnp.float32),
        grid=(B,),
        in_specs=[
            pl.BlockSpec((T, C), lambda b: (b, 0)),                      # x rows
            pl.BlockSpec((N_LAYER, C, 8 * C), lambda b: (0, 0, 0)),      # big W (in-dim C)
            pl.BlockSpec((N_LAYER, 4 * C, C), lambda b: (0, 0, 0)),      # W_proj2
            pl.BlockSpec((N_LAYER + 1, _SMALL_ROWS, C), lambda b: (0, 0, 0)),
            pl.BlockSpec((C, VOCAB), lambda b: (0, 0)),                  # tied lm_head.T
        ],
        out_specs=pl.BlockSpec((T, VOCAB), lambda b: (b, 0)),
        compiler_params=pltpu.CompilerParams(
            dimension_semantics=("parallel",),        # v7x: both TCs get a batch
            vmem_limit_bytes=32 * 1024 * 1024),
    )(x_flat, wcat, wproj2, small, wlm_t)


def gpt_forward(idx, params):
    pos = jnp.arange(T, dtype=jnp.int32)
    # token/position embedding gather kept as JAX glue (data-dependent gather)
    x = params["wte"][idx] + params["wpe"][pos][None, :, :]        # (B, T, C) f32
    logits = gpt_pallas(x.reshape(B * T, C), params["wcat"], params["wproj2"],
                        params["small"], params["wlm_t"])
    return logits.reshape(B, T, VOCAB), None   # targets=None path of GPT.forward


# ---------------- deterministic parameter init ------------------------------
def init_params(seed=0):
    key = jax.random.PRNGKey(seed)
    std = 0.02
    proj_std = 0.02 * (2 * N_LAYER) ** (-0.5)   # NANOGPT_SCALE_INIT layers

    def nrm(k, shape, s):
        return s * jax.random.normal(k, shape, dtype=jnp.float32)

    keys = list(jax.random.split(key, 2 + N_LAYER * 4))
    ki = iter(keys)

    wte = nrm(next(ki), (VOCAB, C), std)            # tied with lm_head.weight
    wpe = nrm(next(ki), (BLOCK_SIZE, C), std)

    blocks, wcat_l, wproj2_l, small_l = [], [], [], []
    for _ in range(N_LAYER):
        ln1w = jnp.ones((1, C), jnp.float32); ln1b = jnp.zeros((1, C), jnp.float32)
        ln2w = jnp.ones((1, C), jnp.float32); ln2b = jnp.zeros((1, C), jnp.float32)
        w_attn = nrm(next(ki), (3 * C, C), std)         # torch layout (out, in)
        b_attn = jnp.zeros((3 * C,), jnp.float32)
        w_proj = nrm(next(ki), (C, C), proj_std)
        b_proj = jnp.zeros((C,), jnp.float32)
        w_fc = nrm(next(ki), (4 * C, C), std)
        b_fc = jnp.zeros((4 * C,), jnp.float32)
        w_proj2 = nrm(next(ki), (C, 4 * C), proj_std)
        b_proj2 = jnp.zeros((C,), jnp.float32)

        blocks.append((ln1w, ln1b, w_attn.T, b_attn.reshape(1, -1),
                       w_proj.T, b_proj.reshape(1, -1),
                       ln2w, ln2b, w_fc.T, b_fc.reshape(1, -1),
                       w_proj2.T, b_proj2.reshape(1, -1)))

        # packed big weights (jax layout, bf16 at the end)
        wcat_l.append(jnp.concatenate([w_attn.T, w_proj.T, w_fc.T], axis=1))  # (C, 8C)
        wproj2_l.append(w_proj2.T)                                            # (4C, C)

        rows = jnp.zeros((_SMALL_ROWS, C), jnp.float32)
        rows = rows.at[0].set(ln1w[0]).at[1].set(ln1b[0])
        rows = rows.at[2:5].set(b_attn.reshape(3, C))
        rows = rows.at[5].set(b_proj)
        rows = rows.at[6].set(ln2w[0]).at[7].set(ln2b[0])
        rows = rows.at[8:12].set(b_fc.reshape(4, C))
        rows = rows.at[12].set(b_proj2)
        small_l.append(rows)

    lnf_w = jnp.ones((1, C), jnp.float32)
    lnf_b = jnp.zeros((1, C), jnp.float32)
    small_l.append(jnp.zeros((_SMALL_ROWS, C), jnp.float32)
                   .at[0].set(lnf_w[0]).at[1].set(lnf_b[0]))

    return dict(
        wte=wte, wpe=wpe,
        blocks=blocks,                                     # f32 per-layer (reference)
        lnf_w=lnf_w, lnf_b=lnf_b,
        wcat=jnp.stack(wcat_l).astype(jnp.bfloat16),       # (L, C, 8C) bf16
        wproj2=jnp.stack(wproj2_l).astype(jnp.bfloat16),   # (L, 4C, C) bf16
        small=jnp.stack(small_l),                          # (L+1, 16, C) f32
        wlm_t=wte.T.astype(jnp.bfloat16),                  # tied lm_head, transposed once
    )


# ---------------- pure-JAX reference (for correctness check) ----------------
def ref_block(x, p):
    (ln1w, ln1b, wqkv, bqkv, wproj, bproj,
     ln2w, ln2b, wfc, bfc, wproj2, bproj2) = p
    xf = x.reshape(B * T, C)
    h = _layernorm(xf, ln1w, ln1b)
    qkv = (h @ wqkv + bqkv).reshape(B, T, 3 * C)
    q, k, v = jnp.split(qkv, 3, axis=-1)
    q = q.reshape(B, T, N_HEAD, HEAD_DIM).transpose(0, 2, 1, 3)
    k = k.reshape(B, T, N_HEAD, HEAD_DIM).transpose(0, 2, 1, 3)
    v = v.reshape(B, T, N_HEAD, HEAD_DIM).transpose(0, 2, 1, 3)
    s = jnp.einsum("bhtd,bhsd->bhts", q, k) / math.sqrt(HEAD_DIM)
    mask = jnp.tril(jnp.ones((T, T), bool))
    s = jnp.where(mask, s, -jnp.inf)
    p_att = jax.nn.softmax(s, axis=-1)
    y = jnp.einsum("bhts,bhsd->bhtd", p_att, v)
    y = y.transpose(0, 2, 1, 3).reshape(B * T, C)
    xf = xf + y @ wproj + bproj
    h2 = _layernorm(xf, ln2w, ln2b)
    xf = xf + _gelu_tanh(h2 @ wfc + bfc) @ wproj2 + bproj2
    return xf.reshape(B, T, C)


def ref_forward(idx, params):
    pos = jnp.arange(T, dtype=jnp.int32)
    x = params["wte"][idx] + params["wpe"][pos][None, :, :]
    for blk in params["blocks"]:
        x = ref_block(x, blk)
    xf = _layernorm(x.reshape(B * T, C), params["lnf_w"], params["lnf_b"])
    return (xf @ params["wte"].T).reshape(B, T, VOCAB)


# ---------------- main -------------------------------------------------------
if __name__ == "__main__":
    params = init_params(seed=0)
    idx = jax.random.randint(jax.random.PRNGKey(0), (B, T), 0, VOCAB, dtype=jnp.int32)

    logits, loss = gpt_forward(idx, params)
    logits = jax.block_until_ready(logits)

    ref = jax.block_until_ready(ref_forward(idx, params))
    assert logits.shape == (B, T, VOCAB)
    max_err = float(jnp.max(jnp.abs(logits - ref)))
    # kernel uses bf16 matmul operands (f32 accumulation); reference is pure f32
    assert jnp.allclose(logits, ref, atol=3e-2, rtol=3e-2), max_err

    print("KERNEL_OK")
</pallas_src>

<mosaic_0001>
module attributes {stable_mosaic.version = 11 : i64} {
  func.func @gpt_kernel(%arg0: i32, %arg1: memref<8x32xf32, #tpu.memory_space<vmem>>, %arg2: memref<2x32x256xbf16, #tpu.memory_space<vmem>>, %arg3: memref<2x128x32xbf16, #tpu.memory_space<vmem>>, %arg4: memref<3x16x32xf32, #tpu.memory_space<vmem>>, %arg5: memref<32x128xbf16, #tpu.memory_space<vmem>>, %arg6: memref<8x128xf32, #tpu.memory_space<vmem>>) attributes {dimension_semantics = [#tpu.dimension_semantics<parallel>], iteration_bounds = array<i64: 2>, scalar_prefetch = 0 : i64, scratch_operands = 0 : i64, tpu.core_type = #tpu.core_type<tc>, window_params = [{transform_indices = @transform_0, window_bounds = array<i64: 8, 32>}, {pipeline_mode = #tpu.pipeline_mode<synchronous>, transform_indices = @transform_1, window_bounds = array<i64: 2, 32, 256>}, {pipeline_mode = #tpu.pipeline_mode<synchronous>, transform_indices = @transform_2, window_bounds = array<i64: 2, 128, 32>}, {pipeline_mode = #tpu.pipeline_mode<synchronous>, transform_indices = @transform_3, window_bounds = array<i64: 3, 16, 32>}, {pipeline_mode = #tpu.pipeline_mode<synchronous>, transform_indices = @transform_4, window_bounds = array<i64: 32, 128>}, {transform_indices = @transform_5, window_bounds = array<i64: 8, 128>}]} {
    %c0 = arith.constant 0 : index
    %c0_0 = arith.constant 0 : index
    %0 = vector.load %arg1[%c0, %c0_0] : memref<8x32xf32, #tpu.memory_space<vmem>>, vector<8x32xf32>
    %1 = tpu.iota {dimensions = array<i32: 0>} : vector<8x8xi32>
    %2 = tpu.iota {dimensions = array<i32: 1>} : vector<8x8xi32>
    %3 = arith.cmpi sle, %2, %1 : vector<8x8xi32>
    %cst = arith.constant 0.000000e+00 : f32
    %cst_1 = arith.constant -1.000000e+30 : f32
    %4 = vector.broadcast %cst : f32 to vector<8x8xf32>
    %5 = vector.broadcast %cst_1 : f32 to vector<8x8xf32>
    %6 = arith.select %3, %4, %5 : vector<8x8xi1>, vector<8x8xf32>
    %c0_2 = arith.constant 0 : index
    %c0_3 = arith.constant 0 : index
    %c0_4 = arith.constant 0 : index
    %7 = vector.load %arg4[%c0_2, %c0_3, %c0_4] : memref<3x16x32xf32, #tpu.memory_space<vmem>>, vector<1x16x32xf32>
    %8 = vector.shape_cast %7 : vector<1x16x32xf32> to vector<16x32xf32>
    %c0_5 = arith.constant 0 : index
    %c0_6 = arith.constant 0 : index
    %c0_7 = arith.constant 0 : index
    %9 = vector.load %arg2[%c0_5, %c0_6, %c0_7] : memref<2x32x256xbf16, #tpu.memory_space<vmem>>, vector<1x32x256xbf16>
    %10 = vector.shape_cast %9 : vector<1x32x256xbf16> to vector<32x256xbf16>
    %11 = vector.extract_strided_slice %8 {offsets = [0, 0], sizes = [1, 32], strides = [1, 1]} : vector<16x32xf32> to vector<1x32xf32>
    %12 = vector.extract_strided_slice %8 {offsets = [1, 0], sizes = [1, 32], strides = [1, 1]} : vector<16x32xf32> to vector<1x32xf32>
    %cst_8 = arith.constant dense<0.000000e+00> : vector<8xf32>
    %13 = vector.multi_reduction <add>, %0, %cst_8 [1] : vector<8x32xf32> to vector<8xf32>
    %14 = vector.shape_cast %13 : vector<8xf32> to vector<8x1xf32>
    %cst_9 = arith.constant 3.200000e+01 : f32
    %15 = vector.broadcast %cst_9 : f32 to vector<8x1xf32>
    %16 = arith.divf %14, %15 : vector<8x1xf32>
    %17 = vector.broadcast %16 : vector<8x1xf32> to vector<8x32xf32>
    %18 = arith.subf %0, %17 : vector<8x32xf32>
    %19 = arith.mulf %18, %18 : vector<8x32xf32>
    %cst_10 = arith.constant dense<0.000000e+00> : vector<8xf32>
    %20 = vector.multi_reduction <add>, %19, %cst_10 [1] : vector<8x32xf32> to vector<8xf32>
    %21 = vector.shape_cast %20 : vector<8xf32> to vector<8x1xf32>
    %cst_11 = arith.constant 3.200000e+01 : f32
    %22 = vector.broadcast %cst_11 : f32 to vector<8x1xf32>
    %23 = arith.divf %21, %22 : vector<8x1xf32>
    %24 = vector.broadcast %16 : vector<8x1xf32> to vector<8x32xf32>
    %25 = arith.subf %0, %24 : vector<8x32xf32>
    %cst_12 = arith.constant 9.99999974E-6 : f32
    %26 = vector.broadcast %cst_12 : f32 to vector<8x1xf32>
    %27 = arith.addf %23, %26 : vector<8x1xf32>
    %28 = math.rsqrt %27 : vector<8x1xf32>
    %29 = vector.broadcast %28 : vector<8x1xf32> to vector<8x32xf32>
    %30 = arith.mulf %25, %29 : vector<8x32xf32>
    %31 = vector.broadcast %11 : vector<1x32xf32> to vector<8x32xf32>
    %32 = arith.mulf %30, %31 : vector<8x32xf32>
    %33 = vector.broadcast %12 : vector<1x32xf32> to vector<8x32xf32>
    %34 = arith.addf %32, %33 : vector<8x32xf32>
    %35 = arith.truncf %34 : vector<8x32xf32> to vector<8x32xbf16>
    %36 = vector.extract_strided_slice %10 {offsets = [0, 0], sizes = [32, 96], strides = [1, 1]} : vector<32x256xbf16> to vector<32x96xbf16>
    %cst_13 = arith.constant dense<0.000000e+00> : vector<8x96xf32>
    %37 = tpu.matmul %35, %36, %cst_13 {dimension_numbers = #tpu.dot_dimension_numbers<[1], [0], [0], [1], [0, 0, 1, 1], [], []>} : vector<8x32xbf16>, vector<32x96xbf16>, vector<8x96xf32> -> vector<8x96xf32>
    %38 = vector.extract_strided_slice %37 {offsets = [0, 0], sizes = [8, 32], strides = [1, 1]} : vector<8x96xf32> to vector<8x32xf32>
    %39 = vector.extract_strided_slice %8 {offsets = [2, 0], sizes = [1, 32], strides = [1, 1]} : vector<16x32xf32> to vector<1x32xf32>
    %40 = vector.broadcast %39 : vector<1x32xf32> to vector<8x32xf32>
    %41 = arith.addf %38, %40 : vector<8x32xf32>
    %42 = vector.extract_strided_slice %41 {offsets = [0, 0], sizes = [8, 8], strides = [1, 1]} : vector<8x32xf32> to vector<8x8xf32>
    %43 = vector.shape_cast %42 : vector<8x8xf32> to vector<1x8x8xf32>
    %44 = vector.extract_strided_slice %41 {offsets = [0, 8], sizes = [8, 8], strides = [1, 1]} : vector<8x32xf32> to vector<8x8xf32>
    %45 = vector.shape_cast %44 : vector<8x8xf32> to vector<1x8x8xf32>
    %46 = vector.extract_strided_slice %41 {offsets = [0, 16], sizes = [8, 8], strides = [1, 1]} : vector<8x32xf32> to vector<8x8xf32>
    %47 = vector.shape_cast %46 : vector<8x8xf32> to vector<1x8x8xf32>
    %48 = vector.extract_strided_slice %41 {offsets = [0, 24], sizes = [8, 8], strides = [1, 1]} : vector<8x32xf32> to vector<8x8xf32>
    %49 = vector.shape_cast %48 : vector<8x8xf32> to vector<1x8x8xf32>
    %50 = tpu.concatenate %43, %45, %47, %49 in 0 : vector<1x8x8xf32>, vector<1x8x8xf32>, vector<1x8x8xf32>, vector<1x8x8xf32> -> vector<4x8x8xf32>
    %51 = vector.extract_strided_slice %37 {offsets = [0, 32], sizes = [8, 32], strides = [1, 1]} : vector<8x96xf32> to vector<8x32xf32>
    %52 = vector.extract_strided_slice %8 {offsets = [3, 0], sizes = [1, 32], strides = [1, 1]} : vector<16x32xf32> to vector<1x32xf32>
    %53 = vector.broadcast %52 : vector<1x32xf32> to vector<8x32xf32>
    %54 = arith.addf %51, %53 : vector<8x32xf32>
    %55 = vector.extract_strided_slice %54 {offsets = [0, 0], sizes = [8, 8], strides = [1, 1]} : vector<8x32xf32> to vector<8x8xf32>
    %56 = vector.shape_cast %55 : vector<8x8xf32> to vector<1x8x8xf32>
    %57 = vector.extract_strided_slice %54 {offsets = [0, 8], sizes = [8, 8], strides = [1, 1]} : vector<8x32xf32> to vector<8x8xf32>
    %58 = vector.shape_cast %57 : vector<8x8xf32> to vector<1x8x8xf32>
    %59 = vector.extract_strided_slice %54 {offsets = [0, 16], sizes = [8, 8], strides = [1, 1]} : vector<8x32xf32> to vector<8x8xf32>
    %60 = vector.shape_cast %59 : vector<8x8xf32> to vector<1x8x8xf32>
    %61 = vector.extract_strided_slice %54 {offsets = [0, 24], sizes = [8, 8], strides = [1, 1]} : vector<8x32xf32> to vector<8x8xf32>
    %62 = vector.shape_cast %61 : vector<8x8xf32> to vector<1x8x8xf32>
    %63 = tpu.concatenate %56, %58, %60, %62 in 0 : vector<1x8x8xf32>, vector<1x8x8xf32>, vector<1x8x8xf32>, vector<1x8x8xf32> -> vector<4x8x8xf32>
    %64 = vector.extract_strided_slice %37 {offsets = [0, 64], sizes = [8, 32], strides = [1, 1]} : vector<8x96xf32> to vector<8x32xf32>
    %65 = vector.extract_strided_slice %8 {offsets = [4, 0], sizes = [1, 32], strides = [1, 1]} : vector<16x32xf32> to vector<1x32xf32>
    %66 = vector.broadcast %65 : vector<1x32xf32> to vector<8x32xf32>
    %67 = arith.addf %64, %66 : vector<8x32xf32>
    %68 = vector.extract_strided_slice %67 {offsets = [0, 0], sizes = [8, 8], strides = [1, 1]} : vector<8x32xf32> to vector<8x8xf32>
    %69 = vector.shape_cast %68 : vector<8x8xf32> to vector<1x8x8xf32>
    %70 = vector.extract_strided_slice %67 {offsets = [0, 8], sizes = [8, 8], strides = [1, 1]} : vector<8x32xf32> to vector<8x8xf32>
    %71 = vector.shape_cast %70 : vector<8x8xf32> to vector<1x8x8xf32>
    %72 = vector.extract_strided_slice %67 {offsets = [0, 16], sizes = [8, 8], strides = [1, 1]} : vector<8x32xf32> to vector<8x8xf32>
    %73 = vector.shape_cast %72 : vector<8x8xf32> to vector<1x8x8xf32>
    %74 = vector.extract_strided_slice %67 {offsets = [0, 24], sizes = [8, 8], strides = [1, 1]} : vector<8x32xf32> to vector<8x8xf32>
    %75 = vector.shape_cast %74 : vector<8x8xf32> to vector<1x8x8xf32>
    %76 = tpu.concatenate %69, %71, %73, %75 in 0 : vector<1x8x8xf32>, vector<1x8x8xf32>, vector<1x8x8xf32>, vector<1x8x8xf32> -> vector<4x8x8xf32>
    "tpu.trace_start"() <{level = 10 : i32, message = "htd,hsd->hts"}> : () -> ()
    %cst_14 = arith.constant dense<0.000000e+00> : vector<4x8x8xf32>
    %77 = tpu.matmul %50, %63, %cst_14 {dimension_numbers = #tpu.dot_dimension_numbers<[2], [2], [1], [1], [0, 0, 0, 1, 1, 1], [0], [0]>} : vector<4x8x8xf32>, vector<4x8x8xf32>, vector<4x8x8xf32> -> vector<4x8x8xf32>
    "tpu.trace_stop"() : () -> ()
    %cst_15 = arith.constant 0.353553385 : f32
    %78 = vector.broadcast %cst_15 : f32 to vector<4x8x8xf32>
    %79 = arith.mulf %77, %78 : vector<4x8x8xf32>
    %80 = vector.shape_cast %6 : vector<8x8xf32> to vector<1x8x8xf32>
    %81 = vector.broadcast %80 : vector<1x8x8xf32> to vector<4x8x8xf32>
    %82 = arith.addf %79, %81 : vector<4x8x8xf32>
    %cst_16 = arith.constant dense<0xFF800000> : vector<4x8xf32>
    %83 = vector.multi_reduction <maximumf>, %82, %cst_16 [2] : vector<4x8x8xf32> to vector<4x8xf32>
    %84 = vector.shape_cast %83 : vector<4x8xf32> to vector<4x8x1xf32>
    %85 = vector.broadcast %84 : vector<4x8x1xf32> to vector<4x8x8xf32>
    %86 = arith.subf %82, %85 : vector<4x8x8xf32>
    %87 = math.exp %86 : vector<4x8x8xf32>
    %cst_17 = arith.constant dense<0.000000e+00> : vector<4x8xf32>
    %88 = vector.multi_reduction <add>, %87, %cst_17 [2] : vector<4x8x8xf32> to vector<4x8xf32>
    %89 = vector.shape_cast %88 : vector<4x8xf32> to vector<4x8x1xf32>
    %90 = tpu.reciprocal %89 {approx = true} : vector<4x8x1xf32> -> vector<4x8x1xf32>
    %91 = vector.broadcast %90 : vector<4x8x1xf32> to vector<4x8x8xf32>
    %92 = arith.mulf %87, %91 : vector<4x8x8xf32>
    "tpu.trace_start"() <{level = 10 : i32, message = "hts,hsd->htd"}> : () -> ()
    %cst_18 = arith.constant dense<0.000000e+00> : vector<4x8x8xf32>
    %93 = tpu.matmul %92, %76, %cst_18 {dimension_numbers = #tpu.dot_dimension_numbers<[2], [1], [1], [2], [0, 0, 0, 1, 1, 2], [0], [0]>} : vector<4x8x8xf32>, vector<4x8x8xf32>, vector<4x8x8xf32> -> vector<4x8x8xf32>
    "tpu.trace_stop"() : () -> ()
    %94 = vector.extract_strided_slice %93 {offsets = [0, 0, 0], sizes = [1, 8, 8], strides = [1, 1, 1]} : vector<4x8x8xf32> to vector<1x8x8xf32>
    %95 = vector.shape_cast %94 : vector<1x8x8xf32> to vector<8x8xf32>
    %96 = vector.extract_strided_slice %93 {offsets = [1, 0, 0], sizes = [1, 8, 8], strides = [1, 1, 1]} : vector<4x8x8xf32> to vector<1x8x8xf32>
    %97 = vector.shape_cast %96 : vector<1x8x8xf32> to vector<8x8xf32>
    %98 = vector.extract_strided_slice %93 {offsets = [2, 0, 0], sizes = [1, 8, 8], strides = [1, 1, 1]} : vector<4x8x8xf32> to vector<1x8x8xf32>
    %99 = vector.shape_cast %98 : vector<1x8x8xf32> to vector<8x8xf32>
    %100 = vector.extract_strided_slice %93 {offsets = [3, 0, 0], sizes = [1, 8, 8], strides = [1, 1, 1]} : vector<4x8x8xf32> to vector<1x8x8xf32>
    %101 = vector.shape_cast %100 : vector<1x8x8xf32> to vector<8x8xf32>
    %102 = tpu.concatenate %95, %97, %99, %101 in 1 : vector<8x8xf32>, vector<8x8xf32>, vector<8x8xf32>, vector<8x8xf32> -> vector<8x32xf32>
    %103 = arith.truncf %102 : vector<8x32xf32> to vector<8x32xbf16>
    %104 = vector.extract_strided_slice %10 {offsets = [0, 96], sizes = [32, 32], strides = [1, 1]} : vector<32x256xbf16> to vector<32x32xbf16>
    %cst_19 = arith.constant dense<0.000000e+00> : vector<8x32xf32>
    %105 = tpu.matmul %103, %104, %cst_19 {dimension_numbers = #tpu.dot_dimension_numbers<[1], [0], [0], [1], [0, 0, 1, 1], [], []>} : vector<8x32xbf16>, vector<32x32xbf16>, vector<8x32xf32> -> vector<8x32xf32>
    %106 = arith.addf %0, %105 : vector<8x32xf32>
    %107 = vector.extract_strided_slice %8 {offsets = [5, 0], sizes = [1, 32], strides = [1, 1]} : vector<16x32xf32> to vector<1x32xf32>
    %108 = vector.broadcast %107 : vector<1x32xf32> to vector<8x32xf32>
    %109 = arith.addf %106, %108 : vector<8x32xf32>
    %110 = vector.extract_strided_slice %8 {offsets = [6, 0], sizes = [1, 32], strides = [1, 1]} : vector<16x32xf32> to vector<1x32xf32>
    %111 = vector.extract_strided_slice %8 {offsets = [7, 0], sizes = [1, 32], strides = [1, 1]} : vector<16x32xf32> to vector<1x32xf32>
    %cst_20 = arith.constant dense<0.000000e+00> : vector<8xf32>
    %112 = vector.multi_reduction <add>, %109, %cst_20 [1] : vector<8x32xf32> to vector<8xf32>
    %113 = vector.shape_cast %112 : vector<8xf32> to vector<8x1xf32>
    %cst_21 = arith.constant 3.200000e+01 : f32
    %114 = vector.broadcast %cst_21 : f32 to vector<8x1xf32>
    %115 = arith.divf %113, %114 : vector<8x1xf32>
    %116 = vector.broadcast %115 : vector<8x1xf32> to vector<8x32xf32>
    %117 = arith.subf %109, %116 : vector<8x32xf32>
    %118 = arith.mulf %117, %117 : vector<8x32xf32>
    %cst_22 = arith.constant dense<0.000000e+00> : vector<8xf32>
    %119 = vector.multi_reduction <add>, %118, %cst_22 [1] : vector<8x32xf32> to vector<8xf32>
    %120 = vector.shape_cast %119 : vector<8xf32> to vector<8x1xf32>
    %cst_23 = arith.constant 3.200000e+01 : f32
    %121 = vector.broadcast %cst_23 : f32 to vector<8x1xf32>
    %122 = arith.divf %120, %121 : vector<8x1xf32>
    %123 = vector.broadcast %115 : vector<8x1xf32> to vector<8x32xf32>
    %124 = arith.subf %109, %123 : vector<8x32xf32>
    %cst_24 = arith.constant 9.99999974E-6 : f32
    %125 = vector.broadcast %cst_24 : f32 to vector<8x1xf32>
    %126 = arith.addf %122, %125 : vector<8x1xf32>
    %127 = math.rsqrt %126 : vector<8x1xf32>
    %128 = vector.broadcast %127 : vector<8x1xf32> to vector<8x32xf32>
    %129 = arith.mulf %124, %128 : vector<8x32xf32>
    %130 = vector.broadcast %110 : vector<1x32xf32> to vector<8x32xf32>
    %131 = arith.mulf %129, %130 : vector<8x32xf32>
    %132 = vector.broadcast %111 : vector<1x32xf32> to vector<8x32xf32>
    %133 = arith.addf %131, %132 : vector<8x32xf32>
    %134 = vector.extract_strided_slice %8 {offsets = [8, 0], sizes = [1, 32], strides = [1, 1]} : vector<16x32xf32> to vector<1x32xf32>
    %135 = vector.extract_strided_slice %8 {offsets = [9, 0], sizes = [1, 32], strides = [1, 1]} : vector<16x32xf32> to vector<1x32xf32>
    %136 = vector.extract_strided_slice %8 {offsets = [10, 0], sizes = [1, 32], strides = [1, 1]} : vector<16x32xf32> to vector<1x32xf32>
    %137 = vector.extract_strided_slice %8 {offsets = [11, 0], sizes = [1, 32], strides = [1, 1]} : vector<16x32xf32> to vector<1x32xf32>
    %138 = tpu.concatenate %134, %135, %136, %137 in 1 : vector<1x32xf32>, vector<1x32xf32>, vector<1x32xf32>, vector<1x32xf32> -> vector<1x128xf32>
    %139 = arith.truncf %133 : vector<8x32xf32> to vector<8x32xbf16>
    %140 = vector.extract_strided_slice %10 {offsets = [0, 128], sizes = [32, 128], strides = [1, 1]} : vector<32x256xbf16> to vector<32x128xbf16>
    %cst_25 = arith.constant dense<0.000000e+00> : vector<8x128xf32>
    %141 = tpu.matmul %139, %140, %cst_25 {dimension_numbers = #tpu.dot_dimension_numbers<[1], [0], [0], [1], [0, 0, 1, 1], [], []>} : vector<8x32xbf16>, vector<32x128xbf16>, vector<8x128xf32> -> vector<8x128xf32>
    %142 = vector.broadcast %138 : vector<1x128xf32> to vector<8x128xf32>
    %143 = arith.addf %141, %142 : vector<8x128xf32>
    %cst_26 = arith.constant 5.000000e-01 : f32
    %144 = vector.broadcast %cst_26 : f32 to vector<8x128xf32>
    %145 = arith.mulf %144, %143 : vector<8x128xf32>
    %cst_27 = arith.constant 4.471500e-02 : f32
    %146 = vector.broadcast %cst_27 : f32 to vector<8x128xf32>
    %147 = arith.mulf %146, %143 : vector<8x128xf32>
    %148 = arith.mulf %147, %143 : vector<8x128xf32>
    %149 = arith.mulf %148, %143 : vector<8x128xf32>
    %150 = arith.addf %143, %149 : vector<8x128xf32>
    %cst_28 = arith.constant 0.797884583 : f32
    %151 = vector.broadcast %cst_28 : f32 to vector<8x128xf32>
    %152 = arith.mulf %151, %150 : vector<8x128xf32>
    %153 = math.tanh %152 : vector<8x128xf32>
    %cst_29 = arith.constant 1.000000e+00 : f32
    %154 = vector.broadcast %cst_29 : f32 to vector<8x128xf32>
    %155 = arith.addf %154, %153 : vector<8x128xf32>
    %156 = arith.mulf %145, %155 : vector<8x128xf32>
    %157 = arith.truncf %156 : vector<8x128xf32> to vector<8x128xbf16>
    %c0_30 = arith.constant 0 : index
    %c0_31 = arith.constant 0 : index
    %c0_32 = arith.constant 0 : index
    %158 = vector.load %arg3[%c0_30, %c0_31, %c0_32] : memref<2x128x32xbf16, #tpu.memory_space<vmem>>, vector<1x128x32xbf16>
    %159 = vector.shape_cast %158 : vector<1x128x32xbf16> to vector<128x32xbf16>
    %cst_33 = arith.constant dense<0.000000e+00> : vector<8x32xf32>
    %160 = tpu.matmul %157, %159, %cst_33 {dimension_numbers = #tpu.dot_dimension_numbers<[1], [0], [0], [1], [0, 0, 1, 1], [], []>} : vector<8x128xbf16>, vector<128x32xbf16>, vector<8x32xf32> -> vector<8x32xf32>
    %161 = arith.addf %109, %160 : vector<8x32xf32>
    %162 = vector.extract_strided_slice %8 {offsets = [12, 0], sizes = [1, 32], strides = [1, 1]} : vector<16x32xf32> to vector<1x32xf32>
    %163 = vector.broadcast %162 : vector<1x32xf32> to vector<8x32xf32>
    %164 = arith.addf %161, %163 : vector<8x32xf32>
    %c1 = arith.constant 1 : index
    %c0_34 = arith.constant 0 : index
    %c0_35 = arith.constant 0 : index
    %165 = vector.load %arg4[%c1, %c0_34, %c0_35] : memref<3x16x32xf32, #tpu.memory_space<vmem>>, vector<1x16x32xf32>
    %166 = vector.shape_cast %165 : vector<1x16x32xf32> to vector<16x32xf32>
    %c1_36 = arith.constant 1 : index
    %c0_37 = arith.constant 0 : index
    %c0_38 = arith.constant 0 : index
    %167 = vector.load %arg2[%c1_36, %c0_37, %c0_38] : memref<2x32x256xbf16, #tpu.memory_space<vmem>>, vector<1x32x256xbf16>
    %168 = vector.shape_cast %167 : vector<1x32x256xbf16> to vector<32x256xbf16>
    %169 = vector.extract_strided_slice %166 {offsets = [0, 0], sizes = [1, 32], strides = [1, 1]} : vector<16x32xf32> to vector<1x32xf32>
    %170 = vector.extract_strided_slice %166 {offsets = [1, 0], sizes = [1, 32], strides = [1, 1]} : vector<16x32xf32> to vector<1x32xf32>
    %cst_39 = arith.constant dense<0.000000e+00> : vector<8xf32>
    %171 = vector.multi_reduction <add>, %164, %cst_39 [1] : vector<8x32xf32> to vector<8xf32>
    %172 = vector.shape_cast %171 : vector<8xf32> to vector<8x1xf32>
    %cst_40 = arith.constant 3.200000e+01 : f32
    %173 = vector.broadcast %cst_40 : f32 to vector<8x1xf32>
    %174 = arith.divf %172, %173 : vector<8x1xf32>
    %175 = vector.broadcast %174 : vector<8x1xf32> to vector<8x32xf32>
    %176 = arith.subf %164, %175 : vector<8x32xf32>
    %177 = arith.mulf %176, %176 : vector<8x32xf32>
    %cst_41 = arith.constant dense<0.000000e+00> : vector<8xf32>
    %178 = vector.multi_reduction <add>, %177, %cst_41 [1] : vector<8x32xf32> to vector<8xf32>
    %179 = vector.shape_cast %178 : vector<8xf32> to vector<8x1xf32>
    %cst_42 = arith.constant 3.200000e+01 : f32
    %180 = vector.broadcast %cst_42 : f32 to vector<8x1xf32>
    %181 = arith.divf %179, %180 : vector<8x1xf32>
    %182 = vector.broadcast %174 : vector<8x1xf32> to vector<8x32xf32>
    %183 = arith.subf %164, %182 : vector<8x32xf32>
    %cst_43 = arith.constant 9.99999974E-6 : f32
    %184 = vector.broadcast %cst_43 : f32 to vector<8x1xf32>
    %185 = arith.addf %181, %184 : vector<8x1xf32>
    %186 = math.rsqrt %185 : vector<8x1xf32>
    %187 = vector.broadcast %186 : vector<8x1xf32> to vector<8x32xf32>
    %188 = arith.mulf %183, %187 : vector<8x32xf32>
    %189 = vector.broadcast %169 : vector<1x32xf32> to vector<8x32xf32>
    %190 = arith.mulf %188, %189 : vector<8x32xf32>
    %191 = vector.broadcast %170 : vector<1x32xf32> to vector<8x32xf32>
    %192 = arith.addf %190, %191 : vector<8x32xf32>
    %193 = arith.truncf %192 : vector<8x32xf32> to vector<8x32xbf16>
    %194 = vector.extract_strided_slice %168 {offsets = [0, 0], sizes = [32, 96], strides = [1, 1]} : vector<32x256xbf16> to vector<32x96xbf16>
    %cst_44 = arith.constant dense<0.000000e+00> : vector<8x96xf32>
    %195 = tpu.matmul %193, %194, %cst_44 {dimension_numbers = #tpu.dot_dimension_numbers<[1], [0], [0], [1], [0, 0, 1, 1], [], []>} : vector<8x32xbf16>, vector<32x96xbf16>, vector<8x96xf32> -> vector<8x96xf32>
    %196 = vector.extract_strided_slice %195 {offsets = [0, 0], sizes = [8, 32], strides = [1, 1]} : vector<8x96xf32> to vector<8x32xf32>
    %197 = vector.extract_strided_slice %166 {offsets = [2, 0], sizes = [1, 32], strides = [1, 1]} : vector<16x32xf32> to vector<1x32xf32>
    %198 = vector.broadcast %197 : vector<1x32xf32> to vector<8x32xf32>
    %199 = arith.addf %196, %198 : vector<8x32xf32>
    %200 = vector.extract_strided_slice %199 {offsets = [0, 0], sizes = [8, 8], strides = [1, 1]} : vector<8x32xf32> to vector<8x8xf32>
    %201 = vector.shape_cast %200 : vector<8x8xf32> to vector<1x8x8xf32>
    %202 = vector.extract_strided_slice %199 {offsets = [0, 8], sizes = [8, 8], strides = [1, 1]} : vector<8x32xf32> to vector<8x8xf32>
    %203 = vector.shape_cast %202 : vector<8x8xf32> to vector<1x8x8xf32>
    %204 = vector.extract_strided_slice %199 {offsets = [0, 16], sizes = [8, 8], strides = [1, 1]} : vector<8x32xf32> to vector<8x8xf32>
    %205 = vector.shape_cast %204 : vector<8x8xf32> to vector<1x8x8xf32>
    %206 = vector.extract_strided_slice %199 {offsets = [0, 24], sizes = [8, 8], strides = [1, 1]} : vector<8x32xf32> to vector<8x8xf32>
    %207 = vector.shape_cast %206 : vector<8x8xf32> to vector<1x8x8xf32>
    %208 = tpu.concatenate %201, %203, %205, %207 in 0 : vector<1x8x8xf32>, vector<1x8x8xf32>, vector<1x8x8xf32>, vector<1x8x8xf32> -> vector<4x8x8xf32>
    %209 = vector.extract_strided_slice %195 {offsets = [0, 32], sizes = [8, 32], strides = [1, 1]} : vector<8x96xf32> to vector<8x32xf32>
    %210 = vector.extract_strided_slice %166 {offsets = [3, 0], sizes = [1, 32], strides = [1, 1]} : vector<16x32xf32> to vector<1x32xf32>
    %211 = vector.broadcast %210 : vector<1x32xf32> to vector<8x32xf32>
    %212 = arith.addf %209, %211 : vector<8x32xf32>
    %213 = vector.extract_strided_slice %212 {offsets = [0, 0], sizes = [8, 8], strides = [1, 1]} : vector<8x32xf32> to vector<8x8xf32>
    %214 = vector.shape_cast %213 : vector<8x8xf32> to vector<1x8x8xf32>
    %215 = vector.extract_strided_slice %212 {offsets = [0, 8], sizes = [8, 8], strides = [1, 1]} : vector<8x32xf32> to vector<8x8xf32>
    %216 = vector.shape_cast %215 : vector<8x8xf32> to vector<1x8x8xf32>
    %217 = vector.extract_strided_slice %212 {offsets = [0, 16], sizes = [8, 8], strides = [1, 1]} : vector<8x32xf32> to vector<8x8xf32>
    %218 = vector.shape_cast %217 : vector<8x8xf32> to vector<1x8x8xf32>
    %219 = vector.extract_strided_slice %212 {offsets = [0, 24], sizes = [8, 8], strides = [1, 1]} : vector<8x32xf32> to vector<8x8xf32>
    %220 = vector.shape_cast %219 : vector<8x8xf32> to vector<1x8x8xf32>
    %221 = tpu.concatenate %214, %216, %218, %220 in 0 : vector<1x8x8xf32>, vector<1x8x8xf32>, vector<1x8x8xf32>, vector<1x8x8xf32> -> vector<4x8x8xf32>
    %222 = vector.extract_strided_slice %195 {offsets = [0, 64], sizes = [8, 32], strides = [1, 1]} : vector<8x96xf32> to vector<8x32xf32>
    %223 = vector.extract_strided_slice %166 {offsets = [4, 0], sizes = [1, 32], strides = [1, 1]} : vector<16x32xf32> to vector<1x32xf32>
    %224 = vector.broadcast %223 : vector<1x32xf32> to vector<8x32xf32>
    %225 = arith.addf %222, %224 : vector<8x32xf32>
    %226 = vector.extract_strided_slice %225 {offsets = [0, 0], sizes = [8, 8], strides = [1, 1]} : vector<8x32xf32> to vector<8x8xf32>
    %227 = vector.shape_cast %226 : vector<8x8xf32> to vector<1x8x8xf32>
    %228 = vector.extract_strided_slice %225 {offsets = [0, 8], sizes = [8, 8], strides = [1, 1]} : vector<8x32xf32> to vector<8x8xf32>
    %229 = vector.shape_cast %228 : vector<8x8xf32> to vector<1x8x8xf32>
    %230 = vector.extract_strided_slice %225 {offsets = [0, 16], sizes = [8, 8], strides = [1, 1]} : vector<8x32xf32> to vector<8x8xf32>
    %231 = vector.shape_cast %230 : vector<8x8xf32> to vector<1x8x8xf32>
    %232 = vector.extract_strided_slice %225 {offsets = [0, 24], sizes = [8, 8], strides = [1, 1]} : vector<8x32xf32> to vector<8x8xf32>
    %233 = vector.shape_cast %232 : vector<8x8xf32> to vector<1x8x8xf32>
    %234 = tpu.concatenate %227, %229, %231, %233 in 0 : vector<1x8x8xf32>, vector<1x8x8xf32>, vector<1x8x8xf32>, vector<1x8x8xf32> -> vector<4x8x8xf32>
    "tpu.trace_start"() <{level = 10 : i32, message = "htd,hsd->hts"}> : () -> ()
    %cst_45 = arith.constant dense<0.000000e+00> : vector<4x8x8xf32>
    %235 = tpu.matmul %208, %221, %cst_45 {dimension_numbers = #tpu.dot_dimension_numbers<[2], [2], [1], [1], [0, 0, 0, 1, 1, 1], [0], [0]>} : vector<4x8x8xf32>, vector<4x8x8xf32>, vector<4x8x8xf32> -> vector<4x8x8xf32>
    "tpu.trace_stop"() : () -> ()
    %cst_46 = arith.constant 0.353553385 : f32
    %236 = vector.broadcast %cst_46 : f32 to vector<4x8x8xf32>
    %237 = arith.mulf %235, %236 : vector<4x8x8xf32>
    %238 = vector.shape_cast %6 : vector<8x8xf32> to vector<1x8x8xf32>
    %239 = vector.broadcast %238 : vector<1x8x8xf32> to vector<4x8x8xf32>
    %240 = arith.addf %237, %239 : vector<4x8x8xf32>
    %cst_47 = arith.constant dense<0xFF800000> : vector<4x8xf32>
    %241 = vector.multi_reduction <maximumf>, %240, %cst_47 [2] : vector<4x8x8xf32> to vector<4x8xf32>
    %242 = vector.shape_cast %241 : vector<4x8xf32> to vector<4x8x1xf32>
    %243 = vector.broadcast %242 : vector<4x8x1xf32> to vector<4x8x8xf32>
    %244 = arith.subf %240, %243 : vector<4x8x8xf32>
    %245 = math.exp %244 : vector<4x8x8xf32>
    %cst_48 = arith.constant dense<0.000000e+00> : vector<4x8xf32>
    %246 = vector.multi_reduction <add>, %245, %cst_48 [2] : vector<4x8x8xf32> to vector<4x8xf32>
    %247 = vector.shape_cast %246 : vector<4x8xf32> to vector<4x8x1xf32>
    %248 = tpu.reciprocal %247 {approx = true} : vector<4x8x1xf32> -> vector<4x8x1xf32>
    %249 = vector.broadcast %248 : vector<4x8x1xf32> to vector<4x8x8xf32>
    %250 = arith.mulf %245, %249 : vector<4x8x8xf32>
    "tpu.trace_start"() <{level = 10 : i32, message = "hts,hsd->htd"}> : () -> ()
    %cst_49 = arith.constant dense<0.000000e+00> : vector<4x8x8xf32>
    %251 = tpu.matmul %250, %234, %cst_49 {dimension_numbers = #tpu.dot_dimension_numbers<[2], [1], [1], [2], [0, 0, 0, 1, 1, 2], [0], [0]>} : vector<4x8x8xf32>, vector<4x8x8xf32>, vector<4x8x8xf32> -> vector<4x8x8xf32>
    "tpu.trace_stop"() : () -> ()
    %252 = vector.extract_strided_slice %251 {offsets = [0, 0, 0], sizes = [1, 8, 8], strides = [1, 1, 1]} : vector<4x8x8xf32> to vector<1x8x8xf32>
    %253 = vector.shape_cast %252 : vector<1x8x8xf32> to vector<8x8xf32>
    %254 = vector.extract_strided_slice %251 {offsets = [1, 0, 0], sizes = [1, 8, 8], strides = [1, 1, 1]} : vector<4x8x8xf32> to vector<1x8x8xf32>
    %255 = vector.shape_cast %254 : vector<1x8x8xf32> to vector<8x8xf32>
    %256 = vector.extract_strided_slice %251 {offsets = [2, 0, 0], sizes = [1, 8, 8], strides = [1, 1, 1]} : vector<4x8x8xf32> to vector<1x8x8xf32>
    %257 = vector.shape_cast %256 : vector<1x8x8xf32> to vector<8x8xf32>
    %258 = vector.extract_strided_slice %251 {offsets = [3, 0, 0], sizes = [1, 8, 8], strides = [1, 1, 1]} : vector<4x8x8xf32> to vector<1x8x8xf32>
    %259 = vector.shape_cast %258 : vector<1x8x8xf32> to vector<8x8xf32>
    %260 = tpu.concatenate %253, %255, %257, %259 in 1 : vector<8x8xf32>, vector<8x8xf32>, vector<8x8xf32>, vector<8x8xf32> -> vector<8x32xf32>
    %261 = arith.truncf %260 : vector<8x32xf32> to vector<8x32xbf16>
    %262 = vector.extract_strided_slice %168 {offsets = [0, 96], sizes = [32, 32], strides = [1, 1]} : vector<32x256xbf16> to vector<32x32xbf16>
    %cst_50 = arith.constant dense<0.000000e+00> : vector<8x32xf32>
    %263 = tpu.matmul %261, %262, %cst_50 {dimension_numbers = #tpu.dot_dimension_numbers<[1], [0], [0], [1], [0, 0, 1, 1], [], []>} : vector<8x32xbf16>, vector<32x32xbf16>, vector<8x32xf32> -> vector<8x32xf32>
    %264 = arith.addf %164, %263 : vector<8x32xf32>
    %265 = vector.extract_strided_slice %166 {offsets = [5, 0], sizes = [1, 32], strides = [1, 1]} : vector<16x32xf32> to vector<1x32xf32>
    %266 = vector.broadcast %265 : vector<1x32xf32> to vector<8x32xf32>
    %267 = arith.addf %264, %266 : vector<8x32xf32>
    %268 = vector.extract_strided_slice %166 {offsets = [6, 0], sizes = [1, 32], strides = [1, 1]} : vector<16x32xf32> to vector<1x32xf32>
    %269 = vector.extract_strided_slice %166 {offsets = [7, 0], sizes = [1, 32], strides = [1, 1]} : vector<16x32xf32> to vector<1x32xf32>
    %cst_51 = arith.constant dense<0.000000e+00> : vector<8xf32>
    %270 = vector.multi_reduction <add>, %267, %cst_51 [1] : vector<8x32xf32> to vector<8xf32>
    %271 = vector.shape_cast %270 : vector<8xf32> to vector<8x1xf32>
    %cst_52 = arith.constant 3.200000e+01 : f32
    %272 = vector.broadcast %cst_52 : f32 to vector<8x1xf32>
    %273 = arith.divf %271, %272 : vector<8x1xf32>
    %274 = vector.broadcast %273 : vector<8x1xf32> to vector<8x32xf32>
    %275 = arith.subf %267, %274 : vector<8x32xf32>
    %276 = arith.mulf %275, %275 : vector<8x32xf32>
    %cst_53 = arith.constant dense<0.000000e+00> : vector<8xf32>
    %277 = vector.multi_reduction <add>, %276, %cst_53 [1] : vector<8x32xf32> to vector<8xf32>
    %278 = vector.shape_cast %277 : vector<8xf32> to vector<8x1xf32>
    %cst_54 = arith.constant 3.200000e+01 : f32
    %279 = vector.broadcast %cst_54 : f32 to vector<8x1xf32>
    %280 = arith.divf %278, %279 : vector<8x1xf32>
    %281 = vector.broadcast %273 : vector<8x1xf32> to vector<8x32xf32>
    %282 = arith.subf %267, %281 : vector<8x32xf32>
    %cst_55 = arith.constant 9.99999974E-6 : f32
    %283 = vector.broadcast %cst_55 : f32 to vector<8x1xf32>
    %284 = arith.addf %280, %283 : vector<8x1xf32>
    %285 = math.rsqrt %284 : vector<8x1xf32>
    %286 = vector.broadcast %285 : vector<8x1xf32> to vector<8x32xf32>
    %287 = arith.mulf %282, %286 : vector<8x32xf32>
    %288 = vector.broadcast %268 : vector<1x32xf32> to vector<8x32xf32>
    %289 = arith.mulf %287, %288 : vector<8x32xf32>
    %290 = vector.broadcast %269 : vector<1x32xf32> to vector<8x32xf32>
    %291 = arith.addf %289, %290 : vector<8x32xf32>
    %292 = vector.extract_strided_slice %166 {offsets = [8, 0], sizes = [1, 32], strides = [1, 1]} : vector<16x32xf32> to vector<1x32xf32>
    %293 = vector.extract_strided_slice %166 {offsets = [9, 0], sizes = [1, 32], strides = [1, 1]} : vector<16x32xf32> to vector<1x32xf32>
    %294 = vector.extract_strided_slice %166 {offsets = [10, 0], sizes = [1, 32], strides = [1, 1]} : vector<16x32xf32> to vector<1x32xf32>
    %295 = vector.extract_strided_slice %166 {offsets = [11, 0], sizes = [1, 32], strides = [1, 1]} : vector<16x32xf32> to vector<1x32xf32>
    %296 = tpu.concatenate %292, %293, %294, %295 in 1 : vector<1x32xf32>, vector<1x32xf32>, vector<1x32xf32>, vector<1x32xf32> -> vector<1x128xf32>
    %297 = arith.truncf %291 : vector<8x32xf32> to vector<8x32xbf16>
    %298 = vector.extract_strided_slice %168 {offsets = [0, 128], sizes = [32, 128], strides = [1, 1]} : vector<32x256xbf16> to vector<32x128xbf16>
    %cst_56 = arith.constant dense<0.000000e+00> : vector<8x128xf32>
    %299 = tpu.matmul %297, %298, %cst_56 {dimension_numbers = #tpu.dot_dimension_numbers<[1], [0], [0], [1], [0, 0, 1, 1], [], []>} : vector<8x32xbf16>, vector<32x128xbf16>, vector<8x128xf32> -> vector<8x128xf32>
    %300 = vector.broadcast %296 : vector<1x128xf32> to vector<8x128xf32>
    %301 = arith.addf %299, %300 : vector<8x128xf32>
    %cst_57 = arith.constant 5.000000e-01 : f32
    %302 = vector.broadcast %cst_57 : f32 to vector<8x128xf32>
    %303 = arith.mulf %302, %301 : vector<8x128xf32>
    %cst_58 = arith.constant 4.471500e-02 : f32
    %304 = vector.broadcast %cst_58 : f32 to vector<8x128xf32>
    %305 = arith.mulf %304, %301 : vector<8x128xf32>
    %306 = arith.mulf %305, %301 : vector<8x128xf32>
    %307 = arith.mulf %306, %301 : vector<8x128xf32>
    %308 = arith.addf %301, %307 : vector<8x128xf32>
    %cst_59 = arith.constant 0.797884583 : f32
    %309 = vector.broadcast %cst_59 : f32 to vector<8x128xf32>
    %310 = arith.mulf %309, %308 : vector<8x128xf32>
    %311 = math.tanh %310 : vector<8x128xf32>
    %cst_60 = arith.constant 1.000000e+00 : f32
    %312 = vector.broadcast %cst_60 : f32 to vector<8x128xf32>
    %313 = arith.addf %312, %311 : vector<8x128xf32>
    %314 = arith.mulf %303, %313 : vector<8x128xf32>
    %315 = arith.truncf %314 : vector<8x128xf32> to vector<8x128xbf16>
    %c1_61 = arith.constant 1 : index
    %c0_62 = arith.constant 0 : index
    %c0_63 = arith.constant 0 : index
    %316 = vector.load %arg3[%c1_61, %c0_62, %c0_63] : memref<2x128x32xbf16, #tpu.memory_space<vmem>>, vector<1x128x32xbf16>
    %317 = vector.shape_cast %316 : vector<1x128x32xbf16> to vector<128x32xbf16>
    %cst_64 = arith.constant dense<0.000000e+00> : vector<8x32xf32>
    %318 = tpu.matmul %315, %317, %cst_64 {dimension_numbers = #tpu.dot_dimension_numbers<[1], [0], [0], [1], [0, 0, 1, 1], [], []>} : vector<8x128xbf16>, vector<128x32xbf16>, vector<8x32xf32> -> vector<8x32xf32>
    %319 = arith.addf %267, %318 : vector<8x32xf32>
    %320 = vector.extract_strided_slice %166 {offsets = [12, 0], sizes = [1, 32], strides = [1, 1]} : vector<16x32xf32> to vector<1x32xf32>
    %321 = vector.broadcast %320 : vector<1x32xf32> to vector<8x32xf32>
    %322 = arith.addf %319, %321 : vector<8x32xf32>
    %c2 = arith.constant 2 : index
    %c0_65 = arith.constant 0 : index
    %c0_66 = arith.constant 0 : index
    %323 = vector.load %arg4[%c2, %c0_65, %c0_66] : memref<3x16x32xf32, #tpu.memory_space<vmem>>, vector<1x16x32xf32>
    %324 = vector.shape_cast %323 : vector<1x16x32xf32> to vector<16x32xf32>
    %325 = vector.extract_strided_slice %324 {offsets = [0, 0], sizes = [1, 32], strides = [1, 1]} : vector<16x32xf32> to vector<1x32xf32>
    %326 = vector.extract_strided_slice %324 {offsets = [1, 0], sizes = [1, 32], strides = [1, 1]} : vector<16x32xf32> to vector<1x32xf32>
    %cst_67 = arith.constant dense<0.000000e+00> : vector<8xf32>
    %327 = vector.multi_reduction <add>, %322, %cst_67 [1] : vector<8x32xf32> to vector<8xf32>
    %328 = vector.shape_cast %327 : vector<8xf32> to vector<8x1xf32>
    %cst_68 = arith.constant 3.200000e+01 : f32
    %329 = vector.broadcast %cst_68 : f32 to vector<8x1xf32>
    %330 = arith.divf %328, %329 : vector<8x1xf32>
    %331 = vector.broadcast %330 : vector<8x1xf32> to vector<8x32xf32>
    %332 = arith.subf %322, %331 : vector<8x32xf32>
    %333 = arith.mulf %332, %332 : vector<8x32xf32>
    %cst_69 = arith.constant dense<0.000000e+00> : vector<8xf32>
    %334 = vector.multi_reduction <add>, %333, %cst_69 [1] : vector<8x32xf32> to vector<8xf32>
    %335 = vector.shape_cast %334 : vector<8xf32> to vector<8x1xf32>
    %cst_70 = arith.constant 3.200000e+01 : f32
    %336 = vector.broadcast %cst_70 : f32 to vector<8x1xf32>
    %337 = arith.divf %335, %336 : vector<8x1xf32>
    %338 = vector.broadcast %330 : vector<8x1xf32> to vector<8x32xf32>
    %339 = arith.subf %322, %338 : vector<8x32xf32>
    %cst_71 = arith.constant 9.99999974E-6 : f32
    %340 = vector.broadcast %cst_71 : f32 to vector<8x1xf32>
    %341 = arith.addf %337, %340 : vector<8x1xf32>
    %342 = math.rsqrt %341 : vector<8x1xf32>
    %343 = vector.broadcast %342 : vector<8x1xf32> to vector<8x32xf32>
    %344 = arith.mulf %339, %343 : vector<8x32xf32>
    %345 = vector.broadcast %325 : vector<1x32xf32> to vector<8x32xf32>
    %346 = arith.mulf %344, %345 : vector<8x32xf32>
    %347 = vector.broadcast %326 : vector<1x32xf32> to vector<8x32xf32>
    %348 = arith.addf %346, %347 : vector<8x32xf32>
    %349 = arith.truncf %348 : vector<8x32xf32> to vector<8x32xbf16>
    %c0_72 = arith.constant 0 : index
    %c0_73 = arith.constant 0 : index
    %350 = vector.load %arg5[%c0_72, %c0_73] : memref<32x128xbf16, #tpu.memory_space<vmem>>, vector<32x128xbf16>
    %cst_74 = arith.constant dense<0.000000e+00> : vector<8x128xf32>
    %351 = tpu.matmul %349, %350, %cst_74 {dimension_numbers = #tpu.dot_dimension_numbers<[1], [0], [0], [1], [0, 0, 1, 1], [], []>} : vector<8x32xbf16>, vector<32x128xbf16>, vector<8x128xf32> -> vector<8x128xf32>
    %c0_75 = arith.constant 0 : index
    %c0_76 = arith.constant 0 : index
    %352 = vector.load %arg6[%c0_75, %c0_76] : memref<8x128xf32, #tpu.memory_space<vmem>>, vector<8x128xf32>
    tpu.vector_store %arg6[%c0_75, %c0_76], %351 {strides = array<i32>} : memref<8x128xf32, #tpu.memory_space<vmem>>, vector<8x128xf32>,
    return
  }
  func.func @transform_0(%arg0: i32) -> (i32, i32) {
    %c0_i32 = arith.constant 0 : i32
    %c0_i32_0 = arith.constant 0 : i32
    return %arg0, %c0_i32 : i32, i32
  }
  func.func @transform_1(%arg0: i32) -> (i32, i32, i32) {
    %c0_i32 = arith.constant 0 : i32
    %c0_i32_0 = arith.constant 0 : i32
    %c0_i32_1 = arith.constant 0 : i32
    %c0_i32_2 = arith.constant 0 : i32
    return %c0_i32, %c0_i32_0, %c0_i32_1 : i32, i32, i32
  }
  func.func @transform_2(%arg0: i32) -> (i32, i32, i32) {
    %c0_i32 = arith.constant 0 : i32
    %c0_i32_0 = arith.constant 0 : i32
    %c0_i32_1 = arith.constant 0 : i32
    %c0_i32_2 = arith.constant 0 : i32
    return %c0_i32, %c0_i32_0, %c0_i32_1 : i32, i32, i32
  }
  func.func @transform_3(%arg0: i32) -> (i32, i32, i32) {
    %c0_i32 = arith.constant 0 : i32
    %c0_i32_0 = arith.constant 0 : i32
    %c0_i32_1 = arith.constant 0 : i32
    %c0_i32_2 = arith.constant 0 : i32
    return %c0_i32, %c0_i32_0, %c0_i32_1 : i32, i32, i32
  }
  func.func @transform_4(%arg0: i32) -> (i32, i32) {
    %c0_i32 = arith.constant 0 : i32
    %c0_i32_0 = arith.constant 0 : i32
    %c0_i32_1 = arith.constant 0 : i32
    return %c0_i32, %c0_i32_0 : i32, i32
  }
  func.func @transform_5(%arg0: i32) -> (i32, i32) {
    %c0_i32 = arith.constant 0 : i32
    %c0_i32_0 = arith.constant 0 : i32
    return %arg0, %c0_i32 : i32, i32
  }
}

</mosaic_0001>

<llo_original>
// kernel: tpu_custom_call.1
$region0: #{tpu_custom_call.1}
  #allocation0 [shape = 'u32[]', space=smem, size = 0x4, offset = 0x4, fixed_abs, tag = 'smem constant byte address 0x4 - core index']
  #allocation1 [shape = 'u32[144,128]{1,0:T(1,128)}', space=vmem, size = 0x12000, scoped, tag = 'internal scratch']
  %s0 = inlined_call_operand.vmem [shape: f32[16,32], index: 0, kind: input, shape index: {}]
  %s1 = inlined_call_operand.vmem [shape: bf16[2,32,256], index: 1, kind: input, shape index: {}]
  %s2 = inlined_call_operand.vmem [shape: bf16[2,128,32], index: 2, kind: input, shape index: {}]
  %s3 = inlined_call_operand.vmem [shape: f32[3,16,32], index: 3, kind: input, shape index: {}]
  %s4 = inlined_call_operand.vmem [shape: bf16[32,128], index: 4, kind: input, shape index: {}]
  %s5 = inlined_call_operand.hbm [shape: f32[16,128], index: 5, kind: output, shape index: {}]
  %s6 = sld [smem:[#allocation0]]
  $region53: #{tpu_custom_call.1} parent=0
    _
  %s8 = ssub.s32 1, %s6
  %s9 = scalar_select 0, %s8, %s6
  $region1: #{tpu_custom_call.1} parent=0
    #allocation2 [shape = 'u8[8192]{0}', space=vmem, size = 0x2000, scoped, tag = 'output window, operand 0']
    #allocation3 [shape = 's32[2]{0}', space=sflag, size = 0x8, scoped, tag = 'scoped memory for tpu_custom_call.1']
    %10 = vsyncpa [#allocation3], 0
    %s11 = scalar_lea.sflag [#allocation3], 1
    %12 = vsyncpa %s11, 0
    loop: start=0, step=1, limit=4
    $region2: #{tpu_custom_call.1} parent=1 // loop_pre_header
      _
    $region3: #{tpu_custom_call.1} parent=1 // loop_header
      %s14 = sphi 0, %s18
      %p15 = scmp.ge.s32.totalorder %s14, 4
      %s24 = sphi 0, %s26
      %s27 = sphi 0, %s24
      %s28 = sphi 0, %s27
      %s44 = sphi 0, %s28
      %s48 = sphi 0, %s48
      %s50 = sphi 0, %s48
      %s51 = sphi 0, %s50
      %s65 = sphi 0, %s51
      %s69 = sphi 0, %s69
      %s71 = sphi 0, %s69
      %s72 = sphi 0, %s71
      %s86 = sphi 0, %s72
      %s90 = sphi 0, %s90
      %s92 = sphi 0, %s90
      %s93 = sphi 0, %s92
      %s107 = sphi 0, %s93
      %s111 = sphi 0, %s111
      %s113 = sphi 0, %s111
      %s114 = sphi 0, %s113
      %s128 = sphi 0, %s114
      %s134 = sphi 0, %s136
      %s137 = sphi 0, %s134
      %s138 = sphi 0, %s137
      %s154 = sphi 0, %s138
    $region4: #{tpu_custom_call.1} parent=1 // loop_header_branch
      %17 = sbr.rel (%p15) target = $region8
    $region5: #{tpu_custom_call.1} parent=1 // loop_body
      %s19 = ssub.s32 %s14, 1
      %s20 = ssub.s32 %s14, 2
      %s21 = sadd.s32 %s14, 1
      %s22 = ssub.s32 %s14, %s21
      %p23 = scmp.eq.s32.totalorder %s22, 0
      %s25 = sadd.s32 %s24, 1
      %s26 = scalar_select %p23, %s24, %s25
      %p29 = pneg %p23
      %p30 = scmp.eq.s32.totalorder %s14, 1
      %p31 = por %p29, %p30
      %p32 = scmp.ne.s32.totalorder %s24, %s27
      %p33 = scmp.eq.s32.totalorder %s14, 0
      %p34 = por %p32, %p33
      %p35 = scmp.ne.s32.totalorder %s24, %s27
      %p36 = scmp.eq.s32.totalorder %s19, 1
      %p37 = por %p35, %p36
      %p38 = scmp.ne.s32.totalorder %s27, %s28
      %p39 = scmp.eq.s32.totalorder %s19, 0
      %p40 = por %p38, %p39
      %p41 = scmp.ne.s32.totalorder %s27, %s28
      %p42 = scmp.eq.s32.totalorder %s20, 1
      %p43 = por %p41, %p42
      %p45 = scmp.ne.s32.totalorder %s28, %s44
      %p46 = scmp.eq.s32.totalorder %s20, 0
      %p47 = por %p45, %p46
      %s49 = sadd.s32 %s48, 1
      %p52 = scmp.eq.s32.totalorder %s14, 1
      %p53 = scmp.ne.s32.totalorder %s48, %s50
      %p54 = scmp.eq.s32.totalorder %s14, 0
      %p55 = por %p53, %p54
      %p56 = scmp.ne.s32.totalorder %s48, %s50
      %p57 = scmp.eq.s32.totalorder %s19, 1
      %p58 = por %p56, %p57
      %p59 = scmp.ne.s32.totalorder %s50, %s51
      %p60 = scmp.eq.s32.totalorder %s19, 0
      %p61 = por %p59, %p60
      %p62 = scmp.ne.s32.totalorder %s50, %s51
      %p63 = scmp.eq.s32.totalorder %s20, 1
      %p64 = por %p62, %p63
      %p66 = scmp.ne.s32.totalorder %s51, %s65
      %p67 = scmp.eq.s32.totalorder %s20, 0
      %p68 = por %p66, %p67
      %s70 = sadd.s32 %s69, 1
      %p73 = scmp.eq.s32.totalorder %s14, 1
      %p74 = scmp.ne.s32.totalorder %s69, %s71
      %p75 = scmp.eq.s32.totalorder %s14, 0
      %p76 = por %p74, %p75
      %p77 = scmp.ne.s32.totalorder %s69, %s71
      %p78 = scmp.eq.s32.totalorder %s19, 1
      %p79 = por %p77, %p78
      %p80 = scmp.ne.s32.totalorder %s71, %s72
      %p81 = scmp.eq.s32.totalorder %s19, 0
      %p82 = por %p80, %p81
      %p83 = scmp.ne.s32.totalorder %s71, %s72
      %p84 = scmp.eq.s32.totalorder %s20, 1
      %p85 = por %p83, %p84
      %p87 = scmp.ne.s32.totalorder %s72, %s86
      %p88 = scmp.eq.s32.totalorder %s20, 0
      %p89 = por %p87, %p88
      %s91 = sadd.s32 %s90, 1
      %p94 = scmp.eq.s32.totalorder %s14, 1
      %p95 = scmp.ne.s32.totalorder %s90, %s92
      %p96 = scmp.eq.s32.totalorder %s14, 0
      %p97 = por %p95, %p96
      %p98 = scmp.ne.s32.totalorder %s90, %s92
      %p99 = scmp.eq.s32.totalorder %s19, 1
      %p100 = por %p98, %p99
      %p101 = scmp.ne.s32.totalorder %s92, %s93
      %p102 = scmp.eq.s32.totalorder %s19, 0
      %p103 = por %p101, %p102
      %p104 = scmp.ne.s32.totalorder %s92, %s93
      %p105 = scmp.eq.s32.totalorder %s20, 1
      %p106 = por %p104, %p105
      %p108 = scmp.ne.s32.totalorder %s93, %s107
      %p109 = scmp.eq.s32.totalorder %s20, 0
      %p110 = por %p108, %p109
      %s112 = sadd.s32 %s111, 1
      %p115 = scmp.eq.s32.totalorder %s14, 1
      %p116 = scmp.ne.s32.totalorder %s111, %s113
      %p117 = scmp.eq.s32.totalorder %s14, 0
      %p118 = por %p116, %p117
      %p119 = scmp.ne.s32.totalorder %s111, %s113
      %p120 = scmp.eq.s32.totalorder %s19, 1
      %p121 = por %p119, %p120
      %p122 = scmp.ne.s32.totalorder %s113, %s114
      %p123 = scmp.eq.s32.totalorder %s19, 0
      %p124 = por %p122, %p123
      %p125 = scmp.ne.s32.totalorder %s113, %s114
      %p126 = scmp.eq.s32.totalorder %s20, 1
      %p127 = por %p125, %p126
      %p129 = scmp.ne.s32.totalorder %s114, %s128
      %p130 = scmp.eq.s32.totalorder %s20, 0
      %p131 = por %p129, %p130
      %s132 = ssub.s32 %s14, %s21
      %p133 = scmp.eq.s32.totalorder %s132, 0
      %s135 = sadd.s32 %s134, 1
      %s136 = scalar_select %p133, %s134, %s135
      %p139 = pneg %p133
      %p140 = scmp.eq.s32.totalorder %s14, 1
      %p141 = por %p139, %p140
      %p142 = scmp.ne.s32.totalorder %s134, %s137
      %p143 = scmp.eq.s32.totalorder %s14, 0
      %p144 = por %p142, %p143
      %p145 = scmp.ne.s32.totalorder %s134, %s137
      %p146 = scmp.eq.s32.totalorder %s19, 1
      %p147 = por %p145, %p146
      %p148 = scmp.ne.s32.totalorder %s137, %s138
      %p149 = scmp.eq.s32.totalorder %s19, 0
      %p150 = por %p148, %p149
      %p151 = scmp.ne.s32.totalorder %s137, %s138
      %p152 = scmp.eq.s32.totalorder %s20, 1
      %p153 = por %p151, %p152
      %p155 = scmp.ne.s32.totalorder %s138, %s154
      %p156 = scmp.eq.s32.totalorder %s20, 0
      %p157 = por %p155, %p156
      %p158 = scmp.le.s32.totalorder 1, %s14
      %p159 = scmp.lt.s32.totalorder %s14, 3
      %p160 = pnand %p158, %p159
      %p161 = pneg %p160
      // Predicated region
      $region9: #{tpu_custom_call.1} parent=5 // pred_check
        _
      $region10: #{tpu_custom_call.1} parent=5 // pred_check_branch
        %163 = sbr.rel (%p160) target = $region12
      $region11: #{tpu_custom_call.1} parent=5 // pred_region
        %s164 = ssub.s32 %s14, 1
        // Predicated region
        $region13: #{tpu_custom_call.1} parent=11 // pred_check
          %p165 = pneg %p61
        $region14: #{tpu_custom_call.1} parent=11 // pred_check_branch
          %167 = sbr.rel (%p165) target = $region16
        $region15: #{tpu_custom_call.1} parent=11 // pred_region
          _
        $region16: #{tpu_custom_call.1} parent=11 // pred_fallthru
          _
        // Predicated region
        $region17: #{tpu_custom_call.1} parent=11 // pred_check
          %p168 = pneg %p82
        $region18: #{tpu_custom_call.1} parent=11 // pred_check_branch
          %170 = sbr.rel (%p168) target = $region20
        $region19: #{tpu_custom_call.1} parent=11 // pred_region
          _
        $region20: #{tpu_custom_call.1} parent=11 // pred_fallthru
          _
        // Predicated region
        $region21: #{tpu_custom_call.1} parent=11 // pred_check
          %p171 = pneg %p103
        $region22: #{tpu_custom_call.1} parent=11 // pred_check_branch
          %173 = sbr.rel (%p171) target = $region24
        $region23: #{tpu_custom_call.1} parent=11 // pred_region
          _
        $region24: #{tpu_custom_call.1} parent=11 // pred_fallthru
          _
        // Predicated region
        $region25: #{tpu_custom_call.1} parent=11 // pred_check
          %p174 = pneg %p124
        $region26: #{tpu_custom_call.1} parent=11 // pred_check_branch
          %176 = sbr.rel (%p174) target = $region28
        $region27: #{tpu_custom_call.1} parent=11 // pred_region
          _
        $region28: #{tpu_custom_call.1} parent=11 // pred_fallthru
          _
      $region12: #{tpu_custom_call.1} parent=5 // pred_fallthru
        _
      %p177 = scmp.lt.s32.totalorder %s14, 2
      // Predicated region
      $region29: #{tpu_custom_call.1} parent=5 // pred_check
        %p178 = pneg %p177
      $region30: #{tpu_custom_call.1} parent=5 // pred_check_branch
        %180 = sbr.rel (%p178) target = $region32
      $region31: #{tpu_custom_call.1} parent=5 // pred_region
        // Predicated region
        $region33: #{tpu_custom_call.1} parent=31 // pred_check
          %p181 = pneg %p34
        $region34: #{tpu_custom_call.1} parent=31 // pred_check_branch
          %183 = sbr.rel (%p181) target = $region36
        $region35: #{tpu_custom_call.1} parent=31 // pred_region
          %p184 = scmp.lt.s32.totalorder %s14, 1
          %s185 = scalar_select %p184, %s14, 1
          %s186 = smul.addr %s185, 8
          %s187 = scalar_lea.vmem %s0, %s186
        $region36: #{tpu_custom_call.1} parent=31 // pred_fallthru
          _
      $region32: #{tpu_custom_call.1} parent=5 // pred_fallthru
        _
      %p188 = scmp.le.s32.totalorder 1, %s14
      %p189 = scmp.lt.s32.totalorder %s14, 3
      %p190 = pnand %p188, %p189
      %p191 = pneg %p190
      // Predicated region
      $region37: #{tpu_custom_call.1} parent=5 // pred_check
        _
      $region38: #{tpu_custom_call.1} parent=5 // pred_check_branch
        %193 = sbr.rel (%p190) target = $region40
      $region39: #{tpu_custom_call.1} parent=5 // pred_region
        %s194 = ssub.s32 %s14, 1
        %p195 = scmp.lt.s32.totalorder %s19, 1
        %s196 = scalar_select %p195, %s19, 1
        %s197 = smul.addr %s196, 8
        %s198 = scalar_lea.vmem %s0, %s197
        %p199 = pneg %p40
        %p200 = pneg %p37
        %p201 = pneg %p61
        %p202 = pneg %p58
        %p203 = pneg %p82
        %p204 = pneg %p79
        %p205 = pneg %p103
        %p206 = pneg %p100
        %p207 = pneg %p124
        %p208 = pneg %p121
        %p209 = pneg %p150
        %p210 = pneg %p147
        %s211 = sand.u32 %s137, 1
        %s212 = scalar_lea.sflag [#allocation3], %s211
        %s213 = sand.u32 %s137, 1
        %s214 = smul.addr %s213, 8
        %s215 = scalar_lea.vmem [#allocation2], %s214
        %p216 = scmp.lt.s32.totalorder %s19, 1
        %s217 = scalar_select %p216, %s19, 1
        %s218 = smul.addr %s217, 8
        %s219 = scalar_lea.vmem %s0, %s218
        %v221 = vld [vmem:[%s219] sm:$0xff]
        %v222 = vlaneseq
        %v223 = vshrl.u32 %v222, 7
        %v224 = vlaneseq
        %v225 = vand.u32 %v224, 127
        %vm226 = vcmp.le.s32.totalorder %v225, %v223
        %v227 = vsel %vm226, 0.0, -1e+30
        %v228 = vld [vmem:[%s3] sm:$0xff]
        %v229 = vld [vmem:[%s3 + $0x8] sm:$0xff]
        %v230 = vld [vmem:[%s1] sm:$0xff]
        %v231 = vld [vmem:[%s1 + $0x8] sm:$0xff]
        %v232 = vld [vmem:[%s1 + $0x10] sm:$0xff]
        %v233 = vld [vmem:[%s1 + $0x18] sm:$0xff]
        %vm234 = vcmask 261120
        %v235 = vsel %vm234, %v221, 0.0
        %236 = vadd.xlane.f32.xlu0 %v235
        %v237 = vpop.xlane.xlu0 %236
        %v238 = vrcp.pop 32.0
        %v239 = vmul.f32 %v237, %v238
        %v240 = vsub.f32 %v221, %v239
        %v241 = vmul.f32 %v240, %v240
        %v242 = vsel %vm234, %v241, 0.0
        %243 = vadd.xlane.f32.xlu0 %v242
        %v244 = vpop.xlane.xlu0 %243
        %v245 = vmul.f32 %v244, %v238
        %v246 = vadd.f32 %v245, 1e-05
        %v247 = vrsqrt.pop %v246
        %v248 = vmul.f32 %v240, %v247
        %v249 = vlaneseq
        %v250 = vshrl.u32 %v249, 7
        %v251 = vsub.s32 0, %v250
        %v252 = vrot.slane %v228, %v251
        %v253 = vmul.f32 %v248, %v252
        %v254 = vlaneseq
        %v255 = vshrl.u32 %v254, 7
        %v256 = vsub.s32 1, %v255
        %v257 = vrot.slane %v228, %v256
        %v258 = vadd.f32 %v253, %v257
        %v259 = vpack.c.bf16 %v258, %v258
        %v264 = vunpack.c.l.b16 %v230
        %v265 = vunpack.c.l.b16 %v231
        %v266 = vunpack.c.l.b16 %v232
        %v267 = vunpack.c.l.b16 %v233
        %v268 = vpack.c.b16 %v265, %v264
        %v269 = vpack.c.b16 %v267, %v266
        %v273 = vsel %vm234, %v259, 0
        %275 = vmatprep.subr.bf16.mxu0 0
        %276 = vmatpush1.bf16.msra.mxu0 0
        %277 = vmatprep.subr.bf16.mxu0 0
        %278 = vmatpush1.bf16.msra.mxu0 0
        %279 = vmatprep.subr.bf16.mxu0 0
        %280 = vmatpush1.bf16.msra.mxu0 0
        %281 = vmatprep.subr.bf16.mxu0 0
        %282 = vmatpush1.bf16.msra.mxu0 0
        %283 = vmatprep.subr.bf16.mxu0 0
        %284 = vmatpush1.bf16.msra.mxu0 0
        %285 = vmatprep.subr.bf16.mxu0 0
        %286 = vmatpush1.bf16.msra.mxu0 0
        %287 = vmatprep.subr.bf16.mxu0 0
        %288 = vmatpush1.bf16.msra.mxu0 %v269
        %289 = vmatprep.subr.bf16.mxu0 0
        %290 = vmatpush1.bf16.msra.mxu0 %v268
        %291 = vmatprep.subr.bf16.mxu0 0
        %292 = vmatpush2.bf16.msra.mxu0 0
        %293 = vmatprep.subr.bf16.mxu0 0
        %294 = vmatpush2.bf16.msra.mxu0 0
        %295 = vmatprep.subr.bf16.mxu0 0
        %296 = vmatpush2.bf16.msra.mxu0 0
        %297 = vmatprep.subr.bf16.mxu0 0
        %298 = vmatpush2.bf16.msra.mxu0 0
        %299 = vmatprep.subr.bf16.mxu0 0
        %300 = vmatpush2.bf16.msra.mxu0 0
        %301 = vmatprep.subr.bf16.mxu0 0
        %302 = vmatpush2.bf16.msra.mxu0 0
        %303 = vmatprep.subr.bf16.mxu0 0
        %304 = vmatpush2.bf16.msra.mxu0 0
        %305 = vmatprep.subr.bf16.mxu0 0
        %306 = vmatpush2.bf16.msra.mxu0 0
        %307 = vmatprep.mubr.bf16.mxu0 0
        %308 = vmatmul.mubr.bf16.gmra.mxu0 %v273
        %v309 = vpop.f32.mrf.mxu0
        %v310 = vadd.f32 0.0, %v309
        %v311 = vpop.f32.mrf.mxu0
        %v312 = vpop.f32.mrf.mxu0
        %v313 = vpop.f32.mrf.mxu0
        %314 = vdwg.mxu0
        %v315 = vlaneseq
        %v316 = vshrl.u32 %v315, 7
        %v317 = vsub.s32 2, %v316
        %v318 = vrot.slane %v228, %v317
        %v319 = vadd.f32 %v310, %v318
        %321 = vrot.lane.b32.xlu0 %v319, 120
        %v322 = vpop.permute.xlu0 %321
        %323 = vrot.lane.b32.xlu0 %v319, 112
        %v324 = vpop.permute.xlu0 %323
        %325 = vrot.lane.b32.xlu0 %v319, 104
        %v326 = vpop.permute.xlu0 %325
        %v327 = vlaneseq
        %v328 = vshrl.u32 %v327, 7
        %v329 = vsub.s32 3, %v328
        %v330 = vrot.slane %v228, %v329
        %332 = vrot.lane.b32.xlu0 %v330, 32
        %v333 = vpop.permute.xlu0 %332
        %v335 = vadd.f32 %v310, %v333
        %337 = vrot.lane.b32.xlu0 %v335, 120
        %v338 = vpop.permute.xlu0 %337
        %339 = vrot.lane.b32.xlu0 %v335, 112
        %v340 = vpop.permute.xlu0 %339
        %341 = vrot.lane.b32.xlu0 %v335, 104
        %v342 = vpop.permute.xlu0 %341
        %v343 = vlaneseq
        %v344 = vshrl.u32 %v343, 7
        %v345 = vsub.s32 4, %v344
        %v346 = vrot.slane %v228, %v345
        %348 = vrot.lane.b32.xlu0 %v346, 64
        %v349 = vpop.permute.xlu0 %348
        %v351 = vadd.f32 %v310, %v349
        %353 = vrot.lane.b32.xlu0 %v351, 120
        %v354 = vpop.permute.xlu0 %353
        %355 = vrot.lane.b32.xlu0 %v351, 112
        %v356 = vpop.permute.xlu0 %355
        %357 = vrot.lane.b32.xlu0 %v351, 104
        %v358 = vpop.permute.xlu0 %357
        %359 = vrot.lane.b32.xlu0 %v335, 96
        %v360 = vpop.permute.xlu0 %359
        %vm361 = vcmask 64512
        %v362 = vsel %vm361, %v319, 0
        %v364 = vsel %vm361, %v360, 0
        %366 = vmatprep.subr.mxu0 0.0
        %367 = vmatpush1.xpose.msra.mxu0 0.0
        %368 = vmatprep.subr.mxu0 0.0
        %369 = vmatpush1.xpose.msra.mxu0 0.0
        %370 = vmatprep.subr.mxu0 0.0
        %371 = vmatpush1.xpose.msra.mxu0 0.0
        %372 = vmatprep.subr.mxu0 0.0
        %373 = vmatpush1.xpose.msra.mxu0 0.0
        %374 = vmatprep.subr.mxu0 0.0
        %375 = vmatpush1.xpose.msra.mxu0 0.0
        %376 = vmatprep.subr.mxu0 0.0
        %377 = vmatpush1.xpose.msra.mxu0 0.0
        %378 = vmatprep.subr.mxu0 0.0
        %379 = vmatpush1.xpose.msra.mxu0 0.0
        %380 = vmatprep.subr.mxu0 0.0
        %381 = vmatpush1.xpose.msra.mxu0 0.0
        %382 = vmatprep.subr.mxu0 0.0
        %383 = vmatpush1.xpose.msra.mxu0 0.0
        %384 = vmatprep.subr.mxu0 0.0
        %385 = vmatpush1.xpose.msra.mxu0 0.0
        %386 = vmatprep.subr.mxu0 0.0
        %387 = vmatpush1.xpose.msra.mxu0 0.0
        %388 = vmatprep.subr.mxu0 0.0
        %389 = vmatpush1.xpose.msra.mxu0 0.0
        %390 = vmatprep.subr.mxu0 0.0
        %391 = vmatpush1.xpose.msra.mxu0 0.0
        %392 = vmatprep.subr.mxu0 0.0
        %393 = vmatpush1.xpose.msra.mxu0 0.0
        %394 = vmatprep.subr.mxu0 0.0
        %395 = vmatpush1.xpose.msra.mxu0 0.0
        %396 = vmatprep.subr.mxu0 0.0
        %397 = vmatpush1.xpose.msra.mxu0 %v364
        %398 = vmatprep.subr.mxu0 0.0
        %399 = vmatpush2.xpose.msra.mxu0 0.0
        %400 = vmatprep.subr.mxu0 0.0
        %401 = vmatpush2.xpose.msra.mxu0 0.0
        %402 = vmatprep.subr.mxu0 0.0
        %403 = vmatpush2.xpose.msra.mxu0 0.0
        %404 = vmatprep.subr.mxu0 0.0
        %405 = vmatpush2.xpose.msra.mxu0 0.0
        %406 = vmatprep.subr.mxu0 0.0
        %407 = vmatpush2.xpose.msra.mxu0 0.0
        %408 = vmatprep.subr.mxu0 0.0
        %409 = vmatpush2.xpose.msra.mxu0 0.0
        %410 = vmatprep.subr.mxu0 0.0
        %411 = vmatpush2.xpose.msra.mxu0 0.0
        %412 = vmatprep.subr.mxu0 0.0
        %413 = vmatpush2.xpose.msra.mxu0 0.0
        %414 = vmatprep.subr.mxu0 0.0
        %415 = vmatpush2.xpose.msra.mxu0 0.0
        %416 = vmatprep.subr.mxu0 0.0
        %417 = vmatpush2.xpose.msra.mxu0 0.0
        %418 = vmatprep.subr.mxu0 0.0
        %419 = vmatpush2.xpose.msra.mxu0 0.0
        %420 = vmatprep.subr.mxu0 0.0
        %421 = vmatpush2.xpose.msra.mxu0 0.0
        %422 = vmatprep.subr.mxu0 0.0
        %423 = vmatpush2.xpose.msra.mxu0 0.0
        %424 = vmatprep.subr.mxu0 0.0
        %425 = vmatpush2.xpose.msra.mxu0 0.0
        %426 = vmatprep.subr.mxu0 0.0
        %427 = vmatpush2.xpose.msra.mxu0 0.0
        %428 = vmatprep.subr.mxu0 0.0
        %429 = vmatpush2.xpose.msra.mxu0 0.0
        %430 = vmatprep.mubr.f32.mxu0 0.0
        %431 = vmatmul.mubr.f32.gmra.mxu0 %v362
        %v432 = vpop.f32.mrf.mxu0
        %v433 = vadd.f32 0.0, %v432
        %v434 = vpop.f32.mrf.mxu0
        %435 = vdwg.mxu0
        %436 = vrot.lane.b32.xlu0 %v338, 96
        %v437 = vpop.permute.xlu0 %436
        %v438 = vsel %vm361, %v322, 0
        %v440 = vsel %vm361, %v437, 0
        %442 = vmatprep.subr.mxu0 0.0
        %443 = vmatpush1.xpose.msra.mxu0 0.0
        %444 = vmatprep.subr.mxu0 0.0
        %445 = vmatpush1.xpose.msra.mxu0 0.0
        %446 = vmatprep.subr.mxu0 0.0
        %447 = vmatpush1.xpose.msra.mxu0 0.0
        %448 = vmatprep.subr.mxu0 0.0
        %449 = vmatpush1.xpose.msra.mxu0 0.0
        %450 = vmatprep.subr.mxu0 0.0
        %451 = vmatpush1.xpose.msra.mxu0 0.0
        %452 = vmatprep.subr.mxu0 0.0
        %453 = vmatpush1.xpose.msra.mxu0 0.0
        %454 = vmatprep.subr.mxu0 0.0
        %455 = vmatpush1.xpose.msra.mxu0 0.0
        %456 = vmatprep.subr.mxu0 0.0
        %457 = vmatpush1.xpose.msra.mxu0 0.0
        %458 = vmatprep.subr.mxu0 0.0
        %459 = vmatpush1.xpose.msra.mxu0 0.0
        %460 = vmatprep.subr.mxu0 0.0
        %461 = vmatpush1.xpose.msra.mxu0 0.0
        %462 = vmatprep.subr.mxu0 0.0
        %463 = vmatpush1.xpose.msra.mxu0 0.0
        %464 = vmatprep.subr.mxu0 0.0
        %465 = vmatpush1.xpose.msra.mxu0 0.0
        %466 = vmatprep.subr.mxu0 0.0
        %467 = vmatpush1.xpose.msra.mxu0 0.0
        %468 = vmatprep.subr.mxu0 0.0
        %469 = vmatpush1.xpose.msra.mxu0 0.0
        %470 = vmatprep.subr.mxu0 0.0
        %471 = vmatpush1.xpose.msra.mxu0 0.0
        %472 = vmatprep.subr.mxu0 0.0
        %473 = vmatpush1.xpose.msra.mxu0 %v440
        %474 = vmatprep.subr.mxu0 0.0
        %475 = vmatpush2.xpose.msra.mxu0 0.0
        %476 = vmatprep.subr.mxu0 0.0
        %477 = vmatpush2.xpose.msra.mxu0 0.0
        %478 = vmatprep.subr.mxu0 0.0
        %479 = vmatpush2.xpose.msra.mxu0 0.0
        %480 = vmatprep.subr.mxu0 0.0
        %481 = vmatpush2.xpose.msra.mxu0 0.0
        %482 = vmatprep.subr.mxu0 0.0
        %483 = vmatpush2.xpose.msra.mxu0 0.0
        %484 = vmatprep.subr.mxu0 0.0
        %485 = vmatpush2.xpose.msra.mxu0 0.0
        %486 = vmatprep.subr.mxu0 0.0
        %487 = vmatpush2.xpose.msra.mxu0 0.0
        %488 = vmatprep.subr.mxu0 0.0
        %489 = vmatpush2.xpose.msra.mxu0 0.0
        %490 = vmatprep.subr.mxu0 0.0
        %491 = vmatpush2.xpose.msra.mxu0 0.0
        %492 = vmatprep.subr.mxu0 0.0
        %493 = vmatpush2.xpose.msra.mxu0 0.0
        %494 = vmatprep.subr.mxu0 0.0
        %495 = vmatpush2.xpose.msra.mxu0 0.0
        %496 = vmatprep.subr.mxu0 0.0
        %497 = vmatpush2.xpose.msra.mxu0 0.0
        %498 = vmatprep.subr.mxu0 0.0
        %499 = vmatpush2.xpose.msra.mxu0 0.0
        %500 = vmatprep.subr.mxu0 0.0
        %501 = vmatpush2.xpose.msra.mxu0 0.0
        %502 = vmatprep.subr.mxu0 0.0
        %503 = vmatpush2.xpose.msra.mxu0 0.0
        %504 = vmatprep.subr.mxu0 0.0
        %505 = vmatpush2.xpose.msra.mxu0 0.0
        %506 = vmatprep.mubr.f32.mxu0 0.0
        %507 = vmatmul.mubr.f32.gmra.mxu0 %v438
        %v508 = vpop.f32.mrf.mxu0
        %v509 = vadd.f32 0.0, %v508
        %v510 = vpop.f32.mrf.mxu0
        %511 = vdwg.mxu0
        %512 = vrot.lane.b32.xlu0 %v340, 96
        %v513 = vpop.permute.xlu0 %512
        %v514 = vsel %vm361, %v324, 0
        %v516 = vsel %vm361, %v513, 0
        %518 = vmatprep.subr.mxu0 0.0
        %519 = vmatpush1.xpose.msra.mxu0 0.0
        %520 = vmatprep.subr.mxu0 0.0
        %521 = vmatpush1.xpose.msra.mxu0 0.0
        %522 = vmatprep.subr.mxu0 0.0
        %523 = vmatpush1.xpose.msra.mxu0 0.0
        %524 = vmatprep.subr.mxu0 0.0
        %525 = vmatpush1.xpose.msra.mxu0 0.0
        %526 = vmatprep.subr.mxu0 0.0
        %527 = vmatpush1.xpose.msra.mxu0 0.0
        %528 = vmatprep.subr.mxu0 0.0
        %529 = vmatpush1.xpose.msra.mxu0 0.0
        %530 = vmatprep.subr.mxu0 0.0
        %531 = vmatpush1.xpose.msra.mxu0 0.0
        %532 = vmatprep.subr.mxu0 0.0
        %533 = vmatpush1.xpose.msra.mxu0 0.0
        %534 = vmatprep.subr.mxu0 0.0
        %535 = vmatpush1.xpose.msra.mxu0 0.0
        %536 = vmatprep.subr.mxu0 0.0
        %537 = vmatpush1.xpose.msra.mxu0 0.0
        %538 = vmatprep.subr.mxu0 0.0
        %539 = vmatpush1.xpose.msra.mxu0 0.0
        %540 = vmatprep.subr.mxu0 0.0
        %541 = vmatpush1.xpose.msra.mxu0 0.0
        %542 = vmatprep.subr.mxu0 0.0
        %543 = vmatpush1.xpose.msra.mxu0 0.0
        %544 = vmatprep.subr.mxu0 0.0
        %545 = vmatpush1.xpose.msra.mxu0 0.0
        %546 = vmatprep.subr.mxu0 0.0
        %547 = vmatpush1.xpose.msra.mxu0 0.0
        %548 = vmatprep.subr.mxu0 0.0
        %549 = vmatpush1.xpose.msra.mxu0 %v516
        %550 = vmatprep.subr.mxu0 0.0
        %551 = vmatpush2.xpose.msra.mxu0 0.0
        %552 = vmatprep.subr.mxu0 0.0
        %553 = vmatpush2.xpose.msra.mxu0 0.0
        %554 = vmatprep.subr.mxu0 0.0
        %555 = vmatpush2.xpose.msra.mxu0 0.0
        %556 = vmatprep.subr.mxu0 0.0
        %557 = vmatpush2.xpose.msra.mxu0 0.0
        %558 = vmatprep.subr.mxu0 0.0
        %559 = vmatpush2.xpose.msra.mxu0 0.0
        %560 = vmatprep.subr.mxu0 0.0
        %561 = vmatpush2.xpose.msra.mxu0 0.0
        %562 = vmatprep.subr.mxu0 0.0
        %563 = vmatpush2.xpose.msra.mxu0 0.0
        %564 = vmatprep.subr.mxu0 0.0
        %565 = vmatpush2.xpose.msra.mxu0 0.0
        %566 = vmatprep.subr.mxu0 0.0
        %567 = vmatpush2.xpose.msra.mxu0 0.0
        %568 = vmatprep.subr.mxu0 0.0
        %569 = vmatpush2.xpose.msra.mxu0 0.0
        %570 = vmatprep.subr.mxu0 0.0
        %571 = vmatpush2.xpose.msra.mxu0 0.0
        %572 = vmatprep.subr.mxu0 0.0
        %573 = vmatpush2.xpose.msra.mxu0 0.0
        %574 = vmatprep.subr.mxu0 0.0
        %575 = vmatpush2.xpose.msra.mxu0 0.0
        %576 = vmatprep.subr.mxu0 0.0
        %577 = vmatpush2.xpose.msra.mxu0 0.0
        %578 = vmatprep.subr.mxu0 0.0
        %579 = vmatpush2.xpose.msra.mxu0 0.0
        %580 = vmatprep.subr.mxu0 0.0
        %581 = vmatpush2.xpose.msra.mxu0 0.0
        %582 = vmatprep.mubr.f32.mxu0 0.0
        %583 = vmatmul.mubr.f32.gmra.mxu0 %v514
        %v584 = vpop.f32.mrf.mxu0
        %v585 = vadd.f32 0.0, %v584
        %v586 = vpop.f32.mrf.mxu0
        %587 = vdwg.mxu0
        %588 = vrot.lane.b32.xlu0 %v342, 96
        %v589 = vpop.permute.xlu0 %588
        %v590 = vsel %vm361, %v326, 0
        %v592 = vsel %vm361, %v589, 0
        %594 = vmatprep.subr.mxu0 0.0
        %595 = vmatpush1.xpose.msra.mxu0 0.0
        %596 = vmatprep.subr.mxu0 0.0
        %597 = vmatpush1.xpose.msra.mxu0 0.0
        %598 = vmatprep.subr.mxu0 0.0
        %599 = vmatpush1.xpose.msra.mxu0 0.0
        %600 = vmatprep.subr.mxu0 0.0
        %601 = vmatpush1.xpose.msra.mxu0 0.0
        %602 = vmatprep.subr.mxu0 0.0
        %603 = vmatpush1.xpose.msra.mxu0 0.0
        %604 = vmatprep.subr.mxu0 0.0
        %605 = vmatpush1.xpose.msra.mxu0 0.0
        %606 = vmatprep.subr.mxu0 0.0
        %607 = vmatpush1.xpose.msra.mxu0 0.0
        %608 = vmatprep.subr.mxu0 0.0
        %609 = vmatpush1.xpose.msra.mxu0 0.0
        %610 = vmatprep.subr.mxu0 0.0
        %611 = vmatpush1.xpose.msra.mxu0 0.0
        %612 = vmatprep.subr.mxu0 0.0
        %613 = vmatpush1.xpose.msra.mxu0 0.0
        %614 = vmatprep.subr.mxu0 0.0
        %615 = vmatpush1.xpose.msra.mxu0 0.0
        %616 = vmatprep.subr.mxu0 0.0
        %617 = vmatpush1.xpose.msra.mxu0 0.0
        %618 = vmatprep.subr.mxu0 0.0
        %619 = vmatpush1.xpose.msra.mxu0 0.0
        %620 = vmatprep.subr.mxu0 0.0
        %621 = vmatpush1.xpose.msra.mxu0 0.0
        %622 = vmatprep.subr.mxu0 0.0
        %623 = vmatpush1.xpose.msra.mxu0 0.0
        %624 = vmatprep.subr.mxu0 0.0
        %625 = vmatpush1.xpose.msra.mxu0 %v592
        %626 = vmatprep.subr.mxu0 0.0
        %627 = vmatpush2.xpose.msra.mxu0 0.0
        %628 = vmatprep.subr.mxu0 0.0
        %629 = vmatpush2.xpose.msra.mxu0 0.0
        %630 = vmatprep.subr.mxu0 0.0
        %631 = vmatpush2.xpose.msra.mxu0 0.0
        %632 = vmatprep.subr.mxu0 0.0
        %633 = vmatpush2.xpose.msra.mxu0 0.0
        %634 = vmatprep.subr.mxu0 0.0
        %635 = vmatpush2.xpose.msra.mxu0 0.0
        %636 = vmatprep.subr.mxu0 0.0
        %637 = vmatpush2.xpose.msra.mxu0 0.0
        %638 = vmatprep.subr.mxu0 0.0
        %639 = vmatpush2.xpose.msra.mxu0 0.0
        %640 = vmatprep.subr.mxu0 0.0
        %641 = vmatpush2.xpose.msra.mxu0 0.0
        %642 = vmatprep.subr.mxu0 0.0
        %643 = vmatpush2.xpose.msra.mxu0 0.0
        %644 = vmatprep.subr.mxu0 0.0
        %645 = vmatpush2.xpose.msra.mxu0 0.0
        %646 = vmatprep.subr.mxu0 0.0
        %647 = vmatpush2.xpose.msra.mxu0 0.0
        %648 = vmatprep.subr.mxu0 0.0
        %649 = vmatpush2.xpose.msra.mxu0 0.0
        %650 = vmatprep.subr.mxu0 0.0
        %651 = vmatpush2.xpose.msra.mxu0 0.0
        %652 = vmatprep.subr.mxu0 0.0
        %653 = vmatpush2.xpose.msra.mxu0 0.0
        %654 = vmatprep.subr.mxu0 0.0
        %655 = vmatpush2.xpose.msra.mxu0 0.0
        %656 = vmatprep.subr.mxu0 0.0
        %657 = vmatpush2.xpose.msra.mxu0 0.0
        %658 = vmatprep.mubr.f32.mxu0 0.0
        %659 = vmatmul.mubr.f32.gmra.mxu0 %v590
        %v660 = vpop.f32.mrf.mxu0
        %v661 = vadd.f32 0.0, %v660
        %v662 = vpop.f32.mrf.mxu0
        %663 = vdwg.mxu0
        %v664 = vmul.f32 %v433, 0.35355338
        %v665 = vmul.f32 %v509, 0.35355338
        %v666 = vmul.f32 %v585, 0.35355338
        %v667 = vmul.f32 %v661, 0.35355338
        %v668 = vadd.f32 %v664, %v227
        %v669 = vadd.f32 %v665, %v227
        %v670 = vadd.f32 %v666, %v227
        %v671 = vadd.f32 %v667, %v227
        %v672 = vsel %vm361, %v668, -inf
        %673 = vmax.xlane.f32.xlu0 %v672
        %v674 = vpop.xlane.xlu0 %673
        %v675 = vsel %vm361, %v669, -inf
        %676 = vmax.xlane.f32.xlu0 %v675
        %v677 = vpop.xlane.xlu0 %676
        %v678 = vsel %vm361, %v670, -inf
        %679 = vmax.xlane.f32.xlu0 %v678
        %v680 = vpop.xlane.xlu0 %679
        %v681 = vsel %vm361, %v671, -inf
        %682 = vmax.xlane.f32.xlu0 %v681
        %v683 = vpop.xlane.xlu0 %682
        %v684 = vsub.f32 %v668, %v674
        %v685 = vsub.f32 %v669, %v677
        %v686 = vsub.f32 %v670, %v680
        %v687 = vsub.f32 %v671, %v683
        %v688 = vmul.f32 %v684, 1.442695
        %v689 = vpow.pop %v688
        %v690 = vmul.f32 %v685, 1.442695
        %v691 = vpow.pop %v690
        %v692 = vmul.f32 %v686, 1.442695
        %v693 = vpow.pop %v692
        %v694 = vmul.f32 %v687, 1.442695
        %v695 = vpow.pop %v694
        %v696 = vsel %vm361, %v689, 0.0
        %697 = vadd.xlane.f32.xlu0 %v696
        %v698 = vpop.xlane.xlu0 %697
        %v699 = vsel %vm361, %v691, 0.0
        %700 = vadd.xlane.f32.xlu0 %v699
        %v701 = vpop.xlane.xlu0 %700
        %v702 = vsel %vm361, %v693, 0.0
        %703 = vadd.xlane.f32.xlu0 %v702
        %v704 = vpop.xlane.xlu0 %703
        %v705 = vsel %vm361, %v695, 0.0
        %706 = vadd.xlane.f32.xlu0 %v705
        %v707 = vpop.xlane.xlu0 %706
        %v708 = vrcp.pop %v698
        %v709 = vrcp.pop %v701
        %v710 = vrcp.pop %v704
        %v711 = vrcp.pop %v707
        %v712 = vmul.f32 %v689, %v708
        %v713 = vmul.f32 %v691, %v709
        %v714 = vmul.f32 %v693, %v710
        %v715 = vmul.f32 %v695, %v711
        %716 = vrot.lane.b32.xlu0 %v351, 64
        %v717 = vpop.permute.xlu0 %716
        %v720 = vsel %vm361, %v712, 0
        %722 = vmatprep.subr.mxu0 0.0
        %723 = vmatpush1.msra.mxu0 0.0
        %724 = vmatprep.subr.mxu0 0.0
        %725 = vmatpush1.msra.mxu0 0.0
        %726 = vmatprep.subr.mxu0 0.0
        %727 = vmatpush1.msra.mxu0 0.0
        %728 = vmatprep.subr.mxu0 0.0
        %729 = vmatpush1.msra.mxu0 0.0
        %730 = vmatprep.subr.mxu0 0.0
        %731 = vmatpush1.msra.mxu0 0.0
        %732 = vmatprep.subr.mxu0 0.0
        %733 = vmatpush1.msra.mxu0 0.0
        %734 = vmatprep.subr.mxu0 0.0
        %735 = vmatpush1.msra.mxu0 0.0
        %736 = vmatprep.subr.mxu0 0.0
        %737 = vmatpush1.msra.mxu0 0.0
        %738 = vmatprep.subr.mxu0 0.0
        %739 = vmatpush1.msra.mxu0 0.0
        %740 = vmatprep.subr.mxu0 0.0
        %741 = vmatpush1.msra.mxu0 0.0
        %742 = vmatprep.subr.mxu0 0.0
        %743 = vmatpush1.msra.mxu0 0.0
        %744 = vmatprep.subr.mxu0 0.0
        %745 = vmatpush1.msra.mxu0 0.0
        %746 = vmatprep.subr.mxu0 0.0
        %747 = vmatpush1.msra.mxu0 0.0
        %748 = vmatprep.subr.mxu0 0.0
        %749 = vmatpush1.msra.mxu0 0.0
        %750 = vmatprep.subr.mxu0 0.0
        %751 = vmatpush1.msra.mxu0 0.0
        %752 = vmatprep.subr.mxu0 0.0
        %753 = vmatpush1.msra.mxu0 %v717
        %754 = vmatprep.subr.mxu0 0.0
        %755 = vmatpush2.msra.mxu0 0.0
        %756 = vmatprep.subr.mxu0 0.0
        %757 = vmatpush2.msra.mxu0 0.0
        %758 = vmatprep.subr.mxu0 0.0
        %759 = vmatpush2.msra.mxu0 0.0
        %760 = vmatprep.subr.mxu0 0.0
        %761 = vmatpush2.msra.mxu0 0.0
        %762 = vmatprep.subr.mxu0 0.0
        %763 = vmatpush2.msra.mxu0 0.0
        %764 = vmatprep.subr.mxu0 0.0
        %765 = vmatpush2.msra.mxu0 0.0
        %766 = vmatprep.subr.mxu0 0.0
        %767 = vmatpush2.msra.mxu0 0.0
        %768 = vmatprep.subr.mxu0 0.0
        %769 = vmatpush2.msra.mxu0 0.0
        %770 = vmatprep.subr.mxu0 0.0
        %771 = vmatpush2.msra.mxu0 0.0
        %772 = vmatprep.subr.mxu0 0.0
        %773 = vmatpush2.msra.mxu0 0.0
        %774 = vmatprep.subr.mxu0 0.0
        %775 = vmatpush2.msra.mxu0 0.0
        %776 = vmatprep.subr.mxu0 0.0
        %777 = vmatpush2.msra.mxu0 0.0
        %778 = vmatprep.subr.mxu0 0.0
        %779 = vmatpush2.msra.mxu0 0.0
        %780 = vmatprep.subr.mxu0 0.0
        %781 = vmatpush2.msra.mxu0 0.0
        %782 = vmatprep.subr.mxu0 0.0
        %783 = vmatpush2.msra.mxu0 0.0
        %784 = vmatprep.subr.mxu0 0.0
        %785 = vmatpush2.msra.mxu0 0.0
        %786 = vmatprep.mubr.f32.mxu0 0.0
        %787 = vmatmul.mubr.f32.gmra.mxu0 %v720
        %v788 = vpop.f32.mrf.mxu0
        %v789 = vadd.f32 0.0, %v788
        %v790 = vpop.f32.mrf.mxu0
        %791 = vdwg.mxu0
        %792 = vrot.lane.b32.xlu0 %v354, 64
        %v793 = vpop.permute.xlu0 %792
        %v796 = vsel %vm361, %v713, 0
        %798 = vmatprep.subr.mxu0 0.0
        %799 = vmatpush1.msra.mxu0 0.0
        %800 = vmatprep.subr.mxu0 0.0
        %801 = vmatpush1.msra.mxu0 0.0
        %802 = vmatprep.subr.mxu0 0.0
        %803 = vmatpush1.msra.mxu0 0.0
        %804 = vmatprep.subr.mxu0 0.0
        %805 = vmatpush1.msra.mxu0 0.0
        %806 = vmatprep.subr.mxu0 0.0
        %807 = vmatpush1.msra.mxu0 0.0
        %808 = vmatprep.subr.mxu0 0.0
        %809 = vmatpush1.msra.mxu0 0.0
        %810 = vmatprep.subr.mxu0 0.0
        %811 = vmatpush1.msra.mxu0 0.0
        %812 = vmatprep.subr.mxu0 0.0
        %813 = vmatpush1.msra.mxu0 0.0
        %814 = vmatprep.subr.mxu0 0.0
        %815 = vmatpush1.msra.mxu0 0.0
        %816 = vmatprep.subr.mxu0 0.0
        %817 = vmatpush1.msra.mxu0 0.0
        %818 = vmatprep.subr.mxu0 0.0
        %819 = vmatpush1.msra.mxu0 0.0
        %820 = vmatprep.subr.mxu0 0.0
        %821 = vmatpush1.msra.mxu0 0.0
        %822 = vmatprep.subr.mxu0 0.0
        %823 = vmatpush1.msra.mxu0 0.0
        %824 = vmatprep.subr.mxu0 0.0
        %825 = vmatpush1.msra.mxu0 0.0
        %826 = vmatprep.subr.mxu0 0.0
        %827 = vmatpush1.msra.mxu0 0.0
        %828 = vmatprep.subr.mxu0 0.0
        %829 = vmatpush1.msra.mxu0 %v793
        %830 = vmatprep.subr.mxu0 0.0
        %831 = vmatpush2.msra.mxu0 0.0
        %832 = vmatprep.subr.mxu0 0.0
        %833 = vmatpush2.msra.mxu0 0.0
        %834 = vmatprep.subr.mxu0 0.0
        %835 = vmatpush2.msra.mxu0 0.0
        %836 = vmatprep.subr.mxu0 0.0
        %837 = vmatpush2.msra.mxu0 0.0
        %838 = vmatprep.subr.mxu0 0.0
        %839 = vmatpush2.msra.mxu0 0.0
        %840 = vmatprep.subr.mxu0 0.0
        %841 = vmatpush2.msra.mxu0 0.0
        %842 = vmatprep.subr.mxu0 0.0
        %843 = vmatpush2.msra.mxu0 0.0
        %844 = vmatprep.subr.mxu0 0.0
        %845 = vmatpush2.msra.mxu0 0.0
        %846 = vmatprep.subr.mxu0 0.0
        %847 = vmatpush2.msra.mxu0 0.0
        %848 = vmatprep.subr.mxu0 0.0
        %849 = vmatpush2.msra.mxu0 0.0
        %850 = vmatprep.subr.mxu0 0.0
        %851 = vmatpush2.msra.mxu0 0.0
        %852 = vmatprep.subr.mxu0 0.0
        %853 = vmatpush2.msra.mxu0 0.0
        %854 = vmatprep.subr.mxu0 0.0
        %855 = vmatpush2.msra.mxu0 0.0
        %856 = vmatprep.subr.mxu0 0.0
        %857 = vmatpush2.msra.mxu0 0.0
        %858 = vmatprep.subr.mxu0 0.0
        %859 = vmatpush2.msra.mxu0 0.0
        %860 = vmatprep.subr.mxu0 0.0
        %861 = vmatpush2.msra.mxu0 0.0
        %862 = vmatprep.mubr.f32.mxu0 0.0
        %863 = vmatmul.mubr.f32.gmra.mxu0 %v796
        %v864 = vpop.f32.mrf.mxu0
        %v865 = vadd.f32 0.0, %v864
        %v866 = vpop.f32.mrf.mxu0
        %867 = vdwg.mxu0
        %868 = vrot.lane.b32.xlu0 %v356, 64
        %v869 = vpop.permute.xlu0 %868
        %v872 = vsel %vm361, %v714, 0
        %874 = vmatprep.subr.mxu0 0.0
        %875 = vmatpush1.msra.mxu0 0.0
        %876 = vmatprep.subr.mxu0 0.0
        %877 = vmatpush1.msra.mxu0 0.0
        %878 = vmatprep.subr.mxu0 0.0
        %879 = vmatpush1.msra.mxu0 0.0
        %880 = vmatprep.subr.mxu0 0.0
        %881 = vmatpush1.msra.mxu0 0.0
        %882 = vmatprep.subr.mxu0 0.0
        %883 = vmatpush1.msra.mxu0 0.0
        %884 = vmatprep.subr.mxu0 0.0
        %885 = vmatpush1.msra.mxu0 0.0
        %886 = vmatprep.subr.mxu0 0.0
        %887 = vmatpush1.msra.mxu0 0.0
        %888 = vmatprep.subr.mxu0 0.0
        %889 = vmatpush1.msra.mxu0 0.0
        %890 = vmatprep.subr.mxu0 0.0
        %891 = vmatpush1.msra.mxu0 0.0
        %892 = vmatprep.subr.mxu0 0.0
        %893 = vmatpush1.msra.mxu0 0.0
        %894 = vmatprep.subr.mxu0 0.0
        %895 = vmatpush1.msra.mxu0 0.0
        %896 = vmatprep.subr.mxu0 0.0
        %897 = vmatpush1.msra.mxu0 0.0
        %898 = vmatprep.subr.mxu0 0.0
        %899 = vmatpush1.msra.mxu0 0.0
        %900 = vmatprep.subr.mxu0 0.0
        %901 = vmatpush1.msra.mxu0 0.0
        %902 = vmatprep.subr.mxu0 0.0
        %903 = vmatpush1.msra.mxu0 0.0
        %904 = vmatprep.subr.mxu0 0.0
        %905 = vmatpush1.msra.mxu0 %v869
        %906 = vmatprep.subr.mxu0 0.0
        %907 = vmatpush2.msra.mxu0 0.0
        %908 = vmatprep.subr.mxu0 0.0
        %909 = vmatpush2.msra.mxu0 0.0
        %910 = vmatprep.subr.mxu0 0.0
        %911 = vmatpush2.msra.mxu0 0.0
        %912 = vmatprep.subr.mxu0 0.0
        %913 = vmatpush2.msra.mxu0 0.0
        %914 = vmatprep.subr.mxu0 0.0
        %915 = vmatpush2.msra.mxu0 0.0
        %916 = vmatprep.subr.mxu0 0.0
        %917 = vmatpush2.msra.mxu0 0.0
        %918 = vmatprep.subr.mxu0 0.0
        %919 = vmatpush2.msra.mxu0 0.0
        %920 = vmatprep.subr.mxu0 0.0
        %921 = vmatpush2.msra.mxu0 0.0
        %922 = vmatprep.subr.mxu0 0.0
        %923 = vmatpush2.msra.mxu0 0.0
        %924 = vmatprep.subr.mxu0 0.0
        %925 = vmatpush2.msra.mxu0 0.0
        %926 = vmatprep.subr.mxu0 0.0
        %927 = vmatpush2.msra.mxu0 0.0
        %928 = vmatprep.subr.mxu0 0.0
        %929 = vmatpush2.msra.mxu0 0.0
        %930 = vmatprep.subr.mxu0 0.0
        %931 = vmatpush2.msra.mxu0 0.0
        %932 = vmatprep.subr.mxu0 0.0
        %933 = vmatpush2.msra.mxu0 0.0
        %934 = vmatprep.subr.mxu0 0.0
        %935 = vmatpush2.msra.mxu0 0.0
        %936 = vmatprep.subr.mxu0 0.0
        %937 = vmatpush2.msra.mxu0 0.0
        %938 = vmatprep.mubr.f32.mxu0 0.0
        %939 = vmatmul.mubr.f32.gmra.mxu0 %v872
        %v940 = vpop.f32.mrf.mxu0
        %v941 = vadd.f32 0.0, %v940
        %v942 = vpop.f32.mrf.mxu0
        %943 = vdwg.mxu0
        %944 = vrot.lane.b32.xlu0 %v358, 64
        %v945 = vpop.permute.xlu0 %944
        %v948 = vsel %vm361, %v715, 0
        %950 = vmatprep.subr.mxu0 0.0
        %951 = vmatpush1.msra.mxu0 0.0
        %952 = vmatprep.subr.mxu0 0.0
        %953 = vmatpush1.msra.mxu0 0.0
        %954 = vmatprep.subr.mxu0 0.0
        %955 = vmatpush1.msra.mxu0 0.0
        %956 = vmatprep.subr.mxu0 0.0
        %957 = vmatpush1.msra.mxu0 0.0
        %958 = vmatprep.subr.mxu0 0.0
        %959 = vmatpush1.msra.mxu0 0.0
        %960 = vmatprep.subr.mxu0 0.0
        %961 = vmatpush1.msra.mxu0 0.0
        %962 = vmatprep.subr.mxu0 0.0
        %963 = vmatpush1.msra.mxu0 0.0
        %964 = vmatprep.subr.mxu0 0.0
        %965 = vmatpush1.msra.mxu0 0.0
        %966 = vmatprep.subr.mxu0 0.0
        %967 = vmatpush1.msra.mxu0 0.0
        %968 = vmatprep.subr.mxu0 0.0
        %969 = vmatpush1.msra.mxu0 0.0
        %970 = vmatprep.subr.mxu0 0.0
        %971 = vmatpush1.msra.mxu0 0.0
        %972 = vmatprep.subr.mxu0 0.0
        %973 = vmatpush1.msra.mxu0 0.0
        %974 = vmatprep.subr.mxu0 0.0
        %975 = vmatpush1.msra.mxu0 0.0
        %976 = vmatprep.subr.mxu0 0.0
        %977 = vmatpush1.msra.mxu0 0.0
        %978 = vmatprep.subr.mxu0 0.0
        %979 = vmatpush1.msra.mxu0 0.0
        %980 = vmatprep.subr.mxu0 0.0
        %981 = vmatpush1.msra.mxu0 %v945
        %982 = vmatprep.subr.mxu0 0.0
        %983 = vmatpush2.msra.mxu0 0.0
        %984 = vmatprep.subr.mxu0 0.0
        %985 = vmatpush2.msra.mxu0 0.0
        %986 = vmatprep.subr.mxu0 0.0
        %987 = vmatpush2.msra.mxu0 0.0
        %988 = vmatprep.subr.mxu0 0.0
        %989 = vmatpush2.msra.mxu0 0.0
        %990 = vmatprep.subr.mxu0 0.0
        %991 = vmatpush2.msra.mxu0 0.0
        %992 = vmatprep.subr.mxu0 0.0
        %993 = vmatpush2.msra.mxu0 0.0
        %994 = vmatprep.subr.mxu0 0.0
        %995 = vmatpush2.msra.mxu0 0.0
        %996 = vmatprep.subr.mxu0 0.0
        %997 = vmatpush2.msra.mxu0 0.0
        %998 = vmatprep.subr.mxu0 0.0
        %999 = vmatpush2.msra.mxu0 0.0
        %1000 = vmatprep.subr.mxu0 0.0
        %1001 = vmatpush2.msra.mxu0 0.0
        %1002 = vmatprep.subr.mxu0 0.0
        %1003 = vmatpush2.msra.mxu0 0.0
        %1004 = vmatprep.subr.mxu0 0.0
        %1005 = vmatpush2.msra.mxu0 0.0
        %1006 = vmatprep.subr.mxu0 0.0
        %1007 = vmatpush2.msra.mxu0 0.0
        %1008 = vmatprep.subr.mxu0 0.0
        %1009 = vmatpush2.msra.mxu0 0.0
        %1010 = vmatprep.subr.mxu0 0.0
        %1011 = vmatpush2.msra.mxu0 0.0
        %1012 = vmatprep.subr.mxu0 0.0
        %1013 = vmatpush2.msra.mxu0 0.0
        %1014 = vmatprep.mubr.f32.mxu0 0.0
        %1015 = vmatmul.mubr.f32.gmra.mxu0 %v948
        %v1016 = vpop.f32.mrf.mxu0
        %v1017 = vadd.f32 0.0, %v1016
        %v1018 = vpop.f32.mrf.mxu0
        %1019 = vdwg.mxu0
        %1021 = vrot.lane.b32.xlu0 %v865, 8
        %v1022 = vpop.permute.xlu0 %1021
        %1025 = vrot.lane.b32.xlu0 %v941, 16
        %v1026 = vpop.permute.xlu0 %1025
        %1029 = vrot.lane.b32.xlu0 %v1017, 24
        %v1030 = vpop.permute.xlu0 %1029
        %v1032 = vsel %vm361, %v789, %v1022
        %vm1033 = vcmask 130048
        %v1034 = vsel %vm1033, %v1032, %v1026
        %vm1035 = vcmask 195584
        %v1036 = vsel %vm1035, %v1034, %v1030
        %v1037 = vpack.c.bf16 %v1036, %v1036
        %1038 = vrot.lane.b32.xlu0 %v268, 32
        %v1039 = vpop.permute.xlu0 %1038
        %1040 = vrot.lane.b32.xlu0 %v269, 32
        %v1041 = vpop.permute.xlu0 %1040
        %v1045 = vsel %vm234, %v1037, 0
        %1047 = vmatprep.subr.bf16.mxu0 0
        %1048 = vmatpush1.bf16.msra.mxu0 0
        %1049 = vmatprep.subr.bf16.mxu0 0
        %1050 = vmatpush1.bf16.msra.mxu0 0
        %1051 = vmatprep.subr.bf16.mxu0 0
        %1052 = vmatpush1.bf16.msra.mxu0 0
        %1053 = vmatprep.subr.bf16.mxu0 0
        %1054 = vmatpush1.bf16.msra.mxu0 0
        %1055 = vmatprep.subr.bf16.mxu0 0
        %1056 = vmatpush1.bf16.msra.mxu0 0
        %1057 = vmatprep.subr.bf16.mxu0 0
        %1058 = vmatpush1.bf16.msra.mxu0 0
        %1059 = vmatprep.subr.bf16.mxu0 0
        %1060 = vmatpush1.bf16.msra.mxu0 %v1041
        %1061 = vmatprep.subr.bf16.mxu0 0
        %1062 = vmatpush1.bf16.msra.mxu0 %v1039
        %1063 = vmatprep.subr.bf16.mxu0 0
        %1064 = vmatpush2.bf16.msra.mxu0 0
        %1065 = vmatprep.subr.bf16.mxu0 0
        %1066 = vmatpush2.bf16.msra.mxu0 0
        %1067 = vmatprep.subr.bf16.mxu0 0
        %1068 = vmatpush2.bf16.msra.mxu0 0
        %1069 = vmatprep.subr.bf16.mxu0 0
        %1070 = vmatpush2.bf16.msra.mxu0 0
        %1071 = vmatprep.subr.bf16.mxu0 0
        %1072 = vmatpush2.bf16.msra.mxu0 0
        %1073 = vmatprep.subr.bf16.mxu0 0
        %1074 = vmatpush2.bf16.msra.mxu0 0
        %1075 = vmatprep.subr.bf16.mxu0 0
        %1076 = vmatpush2.bf16.msra.mxu0 0
        %1077 = vmatprep.subr.bf16.mxu0 0
        %1078 = vmatpush2.bf16.msra.mxu0 0
        %1079 = vmatprep.mubr.bf16.mxu0 0
        %1080 = vmatmul.mubr.bf16.gmra.mxu0 %v1045
        %v1081 = vpop.f32.mrf.mxu0
        %v1082 = vadd.f32 0.0, %v1081
        %v1083 = vpop.f32.mrf.mxu0
        %v1084 = vpop.f32.mrf.mxu0
        %v1085 = vpop.f32.mrf.mxu0
        %1086 = vdwg.mxu0
        %v1087 = vadd.f32 %v221, %v1082
        %v1088 = vlaneseq
        %v1089 = vshrl.u32 %v1088, 7
        %v1090 = vsub.s32 5, %v1089
        %v1091 = vrot.slane %v228, %v1090
        %v1092 = vadd.f32 %v1087, %v1091
        %v1093 = vsel %vm234, %v1092, 0.0
        %1094 = vadd.xlane.f32.xlu0 %v1093
        %v1095 = vpop.xlane.xlu0 %1094
        %v1096 = vmul.f32 %v1095, %v238
        %v1097 = vsub.f32 %v1092, %v1096
        %v1098 = vmul.f32 %v1097, %v1097
        %v1099 = vsel %vm234, %v1098, 0.0
        %1100 = vadd.xlane.f32.xlu0 %v1099
        %v1101 = vpop.xlane.xlu0 %1100
        %v1102 = vmul.f32 %v1101, %v238
        %v1103 = vadd.f32 %v1102, 1e-05
        %v1104 = vrsqrt.pop %v1103
        %v1105 = vmul.f32 %v1097, %v1104
        %v1106 = vlaneseq
        %v1107 = vshrl.u32 %v1106, 7
        %v1108 = vsub.s32 6, %v1107
        %v1109 = vrot.slane %v228, %v1108
        %v1110 = vmul.f32 %v1105, %v1109
        %v1111 = vlaneseq
        %v1112 = vshrl.u32 %v1111, 7
        %v1113 = vsub.s32 7, %v1112
        %v1114 = vrot.slane %v228, %v1113
        %v1115 = vadd.f32 %v1110, %v1114
        %v1117 = vrot.slane %v229, 1
        %1118 = vrot.lane.b32.xlu0 %v1117, 32
        %v1119 = vpop.permute.xlu0 %1118
        %v1121 = vrot.slane %v229, 2
        %1122 = vrot.lane.b32.xlu0 %v1121, 64
        %v1123 = vpop.permute.xlu0 %1122
        %v1125 = vrot.slane %v229, 3
        %1126 = vrot.lane.b32.xlu0 %v1125, 96
        %v1127 = vpop.permute.xlu0 %1126
        %v1129 = vsel %vm234, %v229, %v1119
        %vm1130 = vcmask 523264
        %v1131 = vsel %vm1130, %v1129, %v1123
        %vm1132 = vcmask 785408
        %v1133 = vsel %vm1132, %v1131, %v1127
        %v1134 = vpack.c.bf16 %v1115, %v1115
        %v1135 = vlaneseq
        %v1136 = vshrl.u32 %v1135, 7
        %v1137 = vsub.s32 0, %v1136
        %v1138 = vrot.slane %v1133, %v1137
        %v1139 = vunpack.c.h.b16 %v230
        %v1140 = vunpack.c.h.b16 %v231
        %v1141 = vunpack.c.h.b16 %v232
        %v1142 = vunpack.c.h.b16 %v233
        %v1143 = vpack.c.b16 %v1140, %v1139
        %v1144 = vpack.c.b16 %v1142, %v1141
        %v1148 = vsel %vm234, %v1134, 0
        %1150 = vmatprep.subr.bf16.mxu0 0
        %1151 = vmatpush1.bf16.msra.mxu0 0
        %1152 = vmatprep.subr.bf16.mxu0 0
        %1153 = vmatpush1.bf16.msra.mxu0 0
        %1154 = vmatprep.subr.bf16.mxu0 0
        %1155 = vmatpush1.bf16.msra.mxu0 0
        %1156 = vmatprep.subr.bf16.mxu0 0
        %1157 = vmatpush1.bf16.msra.mxu0 0
        %1158 = vmatprep.subr.bf16.mxu0 0
        %1159 = vmatpush1.bf16.msra.mxu0 0
        %1160 = vmatprep.subr.bf16.mxu0 0
        %1161 = vmatpush1.bf16.msra.mxu0 0
        %1162 = vmatprep.subr.bf16.mxu0 0
        %1163 = vmatpush1.bf16.msra.mxu0 %v1144
        %1164 = vmatprep.subr.bf16.mxu0 0
        %1165 = vmatpush1.bf16.msra.mxu0 %v1143
        %1166 = vmatprep.subr.bf16.mxu0 0
        %1167 = vmatpush2.bf16.msra.mxu0 0
        %1168 = vmatprep.subr.bf16.mxu0 0
        %1169 = vmatpush2.bf16.msra.mxu0 0
        %1170 = vmatprep.subr.bf16.mxu0 0
        %1171 = vmatpush2.bf16.msra.mxu0 0
        %1172 = vmatprep.subr.bf16.mxu0 0
        %1173 = vmatpush2.bf16.msra.mxu0 0
        %1174 = vmatprep.subr.bf16.mxu0 0
        %1175 = vmatpush2.bf16.msra.mxu0 0
        %1176 = vmatprep.subr.bf16.mxu0 0
        %1177 = vmatpush2.bf16.msra.mxu0 0
        %1178 = vmatprep.subr.bf16.mxu0 0
        %1179 = vmatpush2.bf16.msra.mxu0 0
        %1180 = vmatprep.subr.bf16.mxu0 0
        %1181 = vmatpush2.bf16.msra.mxu0 0
        %1182 = vmatprep.mubr.bf16.mxu0 0
        %1183 = vmatmul.mubr.bf16.gmra.mxu0 %v1148
        %v1184 = vpop.f32.mrf.mxu0
        %v1185 = vadd.f32 %v1138, %v1184
        %v1186 = vpop.f32.mrf.mxu0
        %v1187 = vpop.f32.mrf.mxu0
        %v1188 = vpop.f32.mrf.mxu0
        %1189 = vdwg.mxu0
        %v1190 = vmul.f32 %v1185, 0.5
        %v1191 = vmul.f32 %v1185, 0.044715
        %v1192 = vmul.f32 %v1191, %v1185
        %v1193 = vmul.f32 %v1192, %v1185
        %v1194 = vadd.f32 %v1185, %v1193
        %v1195 = vmul.f32 %v1194, 0.7978846
        %v1196 = vtanh.pop %v1195
        %v1197 = vadd.f32 %v1196, 1.0
        %v1198 = vmul.f32 %v1190, %v1197
        %v1199 = vpack.c.bf16 %v1198, %v1198
        %v1200 = vld [vmem:[%s2] sm:$0xf]
        %v1201 = vld [vmem:[%s2 + $0x4] sm:$0xf]
        %v1202 = vld [vmem:[%s2 + $0x8] sm:$0xf]
        %v1203 = vld [vmem:[%s2 + $0xc] sm:$0xf]
        %v1204 = vld [vmem:[%s2 + $0x10] sm:$0xf]
        %v1205 = vld [vmem:[%s2 + $0x14] sm:$0xf]
        %v1206 = vld [vmem:[%s2 + $0x18] sm:$0xf]
        %v1207 = vld [vmem:[%s2 + $0x1c] sm:$0xf]
        %v1208 = vld [vmem:[%s2 + $0x20] sm:$0xf]
        %v1209 = vld [vmem:[%s2 + $0x24] sm:$0xf]
        %v1210 = vld [vmem:[%s2 + $0x28] sm:$0xf]
        %v1211 = vld [vmem:[%s2 + $0x2c] sm:$0xf]
        %v1212 = vld [vmem:[%s2 + $0x30] sm:$0xf]
        %v1213 = vld [vmem:[%s2 + $0x34] sm:$0xf]
        %v1214 = vld [vmem:[%s2 + $0x38] sm:$0xf]
        %v1215 = vld [vmem:[%s2 + $0x3c] sm:$0xf]
        %v1232 = vunpack.c.l.b16 %v1200
        %v1233 = vunpack.c.l.b16 %v1201
        %v1234 = vunpack.c.l.b16 %v1202
        %v1235 = vunpack.c.l.b16 %v1203
        %v1236 = vunpack.c.l.b16 %v1204
        %v1237 = vunpack.c.l.b16 %v1205
        %v1238 = vunpack.c.l.b16 %v1206
        %v1239 = vunpack.c.l.b16 %v1207
        %v1240 = vunpack.c.l.b16 %v1208
        %v1241 = vunpack.c.l.b16 %v1209
        %v1242 = vunpack.c.l.b16 %v1210
        %v1243 = vunpack.c.l.b16 %v1211
        %v1244 = vunpack.c.l.b16 %v1212
        %v1245 = vunpack.c.l.b16 %v1213
        %v1246 = vunpack.c.l.b16 %v1214
        %v1247 = vunpack.c.l.b16 %v1215
        %v1248 = vpack.c.b16 %v1233, %v1232
        %v1249 = vpack.c.b16 %v1235, %v1234
        %v1250 = vpack.c.b16 %v1237, %v1236
        %v1251 = vpack.c.b16 %v1239, %v1238
        %v1252 = vpack.c.b16 %v1241, %v1240
        %v1253 = vpack.c.b16 %v1243, %v1242
        %v1254 = vpack.c.b16 %v1245, %v1244
        %v1255 = vpack.c.b16 %v1247, %v1246
        %1264 = vmatprep.subr.bf16.mxu0 0
        %1265 = vmatpush1.bf16.msra.mxu0 %v1255
        %1266 = vmatprep.subr.bf16.mxu0 0
        %1267 = vmatpush1.bf16.msra.mxu0 %v1254
        %1268 = vmatprep.subr.bf16.mxu0 0
        %1269 = vmatpush1.bf16.msra.mxu0 %v1253
        %1270 = vmatprep.subr.bf16.mxu0 0
        %1271 = vmatpush1.bf16.msra.mxu0 %v1252
        %1272 = vmatprep.subr.bf16.mxu0 0
        %1273 = vmatpush1.bf16.msra.mxu0 %v1251
        %1274 = vmatprep.subr.bf16.mxu0 0
        %1275 = vmatpush1.bf16.msra.mxu0 %v1250
        %1276 = vmatprep.subr.bf16.mxu0 0
        %1277 = vmatpush1.bf16.msra.mxu0 %v1249
        %1278 = vmatprep.subr.bf16.mxu0 0
        %1279 = vmatpush1.bf16.msra.mxu0 %v1248
        %1280 = vmatprep.subr.bf16.mxu0 0
        %1281 = vmatpush2.bf16.msra.mxu0 0
        %1282 = vmatprep.subr.bf16.mxu0 0
        %1283 = vmatpush2.bf16.msra.mxu0 0
        %1284 = vmatprep.subr.bf16.mxu0 0
        %1285 = vmatpush2.bf16.msra.mxu0 0
        %1286 = vmatprep.subr.bf16.mxu0 0
        %1287 = vmatpush2.bf16.msra.mxu0 0
        %1288 = vmatprep.subr.bf16.mxu0 0
        %1289 = vmatpush2.bf16.msra.mxu0 0
        %1290 = vmatprep.subr.bf16.mxu0 0
        %1291 = vmatpush2.bf16.msra.mxu0 0
        %1292 = vmatprep.subr.bf16.mxu0 0
        %1293 = vmatpush2.bf16.msra.mxu0 0
        %1294 = vmatprep.subr.bf16.mxu0 0
        %1295 = vmatpush2.bf16.msra.mxu0 0
        %1296 = vmatprep.mubr.bf16.mxu0 0
        %1297 = vmatmul.mubr.bf16.gmra.mxu0 %v1199
        %v1298 = vpop.f32.mrf.mxu0
        %v1299 = vadd.f32 0.0, %v1298
        %v1300 = vpop.f32.mrf.mxu0
        %v1301 = vpop.f32.mrf.mxu0
        %v1302 = vpop.f32.mrf.mxu0
        %1303 = vdwg.mxu0
        %v1304 = vadd.f32 %v1092, %v1299
        %v1305 = vlaneseq
        %v1306 = vshrl.u32 %v1305, 7
        %v1307 = vsub.s32 4, %v1306
        %v1308 = vrot.slane %v229, %v1307
        %v1309 = vadd.f32 %v1304, %v1308
        %s1310 = scalar_lea.vmem %s3, 16
        %v1311 = vld [vmem:[%s1310] sm:$0xff]
        %v1312 = vld [vmem:[%s1310 + $0x8] sm:$0xff]
        %s1313 = scalar_lea.vmem %s1, 32
        %v1314 = vld [vmem:[%s1313] sm:$0xff]
        %v1315 = vld [vmem:[%s1313 + $0x8] sm:$0xff]
        %v1316 = vld [vmem:[%s1313 + $0x10] sm:$0xff]
        %v1317 = vld [vmem:[%s1313 + $0x18] sm:$0xff]
        %v1318 = vsel %vm234, %v1309, 0.0
        %1319 = vadd.xlane.f32.xlu0 %v1318
        %v1320 = vpop.xlane.xlu0 %1319
        %v1321 = vmul.f32 %v1320, %v238
        %v1322 = vsub.f32 %v1309, %v1321
        %v1323 = vmul.f32 %v1322, %v1322
        %v1324 = vsel %vm234, %v1323, 0.0
        %1325 = vadd.xlane.f32.xlu0 %v1324
        %v1326 = vpop.xlane.xlu0 %1325
        %v1327 = vmul.f32 %v1326, %v238
        %v1328 = vadd.f32 %v1327, 1e-05
        %v1329 = vrsqrt.pop %v1328
        %v1330 = vmul.f32 %v1322, %v1329
        %v1331 = vlaneseq
        %v1332 = vshrl.u32 %v1331, 7
        %v1333 = vsub.s32 0, %v1332
        %v1334 = vrot.slane %v1311, %v1333
        %v1335 = vmul.f32 %v1330, %v1334
        %v1336 = vlaneseq
        %v1337 = vshrl.u32 %v1336, 7
        %v1338 = vsub.s32 1, %v1337
        %v1339 = vrot.slane %v1311, %v1338
        %v1340 = vadd.f32 %v1335, %v1339
        %v1341 = vpack.c.bf16 %v1340, %v1340
        %v1346 = vunpack.c.l.b16 %v1314
        %v1347 = vunpack.c.l.b16 %v1315
        %v1348 = vunpack.c.l.b16 %v1316
        %v1349 = vunpack.c.l.b16 %v1317
        %v1350 = vpack.c.b16 %v1347, %v1346
        %v1351 = vpack.c.b16 %v1349, %v1348
        %v1355 = vsel %vm234, %v1341, 0
        %1357 = vmatprep.subr.bf16.mxu0 0
        %1358 = vmatpush1.bf16.msra.mxu0 0
        %1359 = vmatprep.subr.bf16.mxu0 0
        %1360 = vmatpush1.bf16.msra.mxu0 0
        %1361 = vmatprep.subr.bf16.mxu0 0
        %1362 = vmatpush1.bf16.msra.mxu0 0
        %1363 = vmatprep.subr.bf16.mxu0 0
        %1364 = vmatpush1.bf16.msra.mxu0 0
        %1365 = vmatprep.subr.bf16.mxu0 0
        %1366 = vmatpush1.bf16.msra.mxu0 0
        %1367 = vmatprep.subr.bf16.mxu0 0
        %1368 = vmatpush1.bf16.msra.mxu0 0
        %1369 = vmatprep.subr.bf16.mxu0 0
        %1370 = vmatpush1.bf16.msra.mxu0 %v1351
        %1371 = vmatprep.subr.bf16.mxu0 0
        %1372 = vmatpush1.bf16.msra.mxu0 %v1350
        %1373 = vmatprep.subr.bf16.mxu0 0
        %1374 = vmatpush2.bf16.msra.mxu0 0
        %1375 = vmatprep.subr.bf16.mxu0 0
        %1376 = vmatpush2.bf16.msra.mxu0 0
        %1377 = vmatprep.subr.bf16.mxu0 0
        %1378 = vmatpush2.bf16.msra.mxu0 0
        %1379 = vmatprep.subr.bf16.mxu0 0
        %1380 = vmatpush2.bf16.msra.mxu0 0
        %1381 = vmatprep.subr.bf16.mxu0 0
        %1382 = vmatpush2.bf16.msra.mxu0 0
        %1383 = vmatprep.subr.bf16.mxu0 0
        %1384 = vmatpush2.bf16.msra.mxu0 0
        %1385 = vmatprep.subr.bf16.mxu0 0
        %1386 = vmatpush2.bf16.msra.mxu0 0
        %1387 = vmatprep.subr.bf16.mxu0 0
        %1388 = vmatpush2.bf16.msra.mxu0 0
        %1389 = vmatprep.mubr.bf16.mxu0 0
        %1390 = vmatmul.mubr.bf16.gmra.mxu0 %v1355
        %v1391 = vpop.f32.mrf.mxu0
        %v1392 = vadd.f32 0.0, %v1391
        %v1393 = vpop.f32.mrf.mxu0
        %v1394 = vpop.f32.mrf.mxu0
        %v1395 = vpop.f32.mrf.mxu0
        %1396 = vdwg.mxu0
        %v1397 = vlaneseq
        %v1398 = vshrl.u32 %v1397, 7
        %v1399 = vsub.s32 2, %v1398
        %v1400 = vrot.slane %v1311, %v1399
        %v1401 = vadd.f32 %v1392, %v1400
        %1403 = vrot.lane.b32.xlu0 %v1401, 120
        %v1404 = vpop.permute.xlu0 %1403
        %1405 = vrot.lane.b32.xlu0 %v1401, 112
        %v1406 = vpop.permute.xlu0 %1405
        %1407 = vrot.lane.b32.xlu0 %v1401, 104
        %v1408 = vpop.permute.xlu0 %1407
        %v1409 = vlaneseq
        %v1410 = vshrl.u32 %v1409, 7
        %v1411 = vsub.s32 3, %v1410
        %v1412 = vrot.slane %v1311, %v1411
        %1414 = vrot.lane.b32.xlu0 %v1412, 32
        %v1415 = vpop.permute.xlu0 %1414
        %v1417 = vadd.f32 %v1392, %v1415
        %1419 = vrot.lane.b32.xlu0 %v1417, 120
        %v1420 = vpop.permute.xlu0 %1419
        %1421 = vrot.lane.b32.xlu0 %v1417, 112
        %v1422 = vpop.permute.xlu0 %1421
        %1423 = vrot.lane.b32.xlu0 %v1417, 104
        %v1424 = vpop.permute.xlu0 %1423
        %v1425 = vlaneseq
        %v1426 = vshrl.u32 %v1425, 7
        %v1427 = vsub.s32 4, %v1426
        %v1428 = vrot.slane %v1311, %v1427
        %1430 = vrot.lane.b32.xlu0 %v1428, 64
        %v1431 = vpop.permute.xlu0 %1430
        %v1433 = vadd.f32 %v1392, %v1431
        %1435 = vrot.lane.b32.xlu0 %v1433, 120
        %v1436 = vpop.permute.xlu0 %1435
        %1437 = vrot.lane.b32.xlu0 %v1433, 112
        %v1438 = vpop.permute.xlu0 %1437
        %1439 = vrot.lane.b32.xlu0 %v1433, 104
        %v1440 = vpop.permute.xlu0 %1439
        %1441 = vrot.lane.b32.xlu0 %v1417, 96
        %v1442 = vpop.permute.xlu0 %1441
        %v1443 = vsel %vm361, %v1401, 0
        %v1445 = vsel %vm361, %v1442, 0
        %1447 = vmatprep.subr.mxu0 0.0
        %1448 = vmatpush1.xpose.msra.mxu0 0.0
        %1449 = vmatprep.subr.mxu0 0.0
        %1450 = vmatpush1.xpose.msra.mxu0 0.0
        %1451 = vmatprep.subr.mxu0 0.0
        %1452 = vmatpush1.xpose.msra.mxu0 0.0
        %1453 = vmatprep.subr.mxu0 0.0
        %1454 = vmatpush1.xpose.msra.mxu0 0.0
        %1455 = vmatprep.subr.mxu0 0.0
        %1456 = vmatpush1.xpose.msra.mxu0 0.0
        %1457 = vmatprep.subr.mxu0 0.0
        %1458 = vmatpush1.xpose.msra.mxu0 0.0
        %1459 = vmatprep.subr.mxu0 0.0
        %1460 = vmatpush1.xpose.msra.mxu0 0.0
        %1461 = vmatprep.subr.mxu0 0.0
        %1462 = vmatpush1.xpose.msra.mxu0 0.0
        %1463 = vmatprep.subr.mxu0 0.0
        %1464 = vmatpush1.xpose.msra.mxu0 0.0
        %1465 = vmatprep.subr.mxu0 0.0
        %1466 = vmatpush1.xpose.msra.mxu0 0.0
        %1467 = vmatprep.subr.mxu0 0.0
        %1468 = vmatpush1.xpose.msra.mxu0 0.0
        %1469 = vmatprep.subr.mxu0 0.0
        %1470 = vmatpush1.xpose.msra.mxu0 0.0
        %1471 = vmatprep.subr.mxu0 0.0
        %1472 = vmatpush1.xpose.msra.mxu0 0.0
        %1473 = vmatprep.subr.mxu0 0.0
        %1474 = vmatpush1.xpose.msra.mxu0 0.0
        %1475 = vmatprep.subr.mxu0 0.0
        %1476 = vmatpush1.xpose.msra.mxu0 0.0
        %1477 = vmatprep.subr.mxu0 0.0
        %1478 = vmatpush1.xpose.msra.mxu0 %v1445
        %1479 = vmatprep.subr.mxu0 0.0
        %1480 = vmatpush2.xpose.msra.mxu0 0.0
        %1481 = vmatprep.subr.mxu0 0.0
        %1482 = vmatpush2.xpose.msra.mxu0 0.0
        %1483 = vmatprep.subr.mxu0 0.0
        %1484 = vmatpush2.xpose.msra.mxu0 0.0
        %1485 = vmatprep.subr.mxu0 0.0
        %1486 = vmatpush2.xpose.msra.mxu0 0.0
        %1487 = vmatprep.subr.mxu0 0.0
        %1488 = vmatpush2.xpose.msra.mxu0 0.0
        %1489 = vmatprep.subr.mxu0 0.0
        %1490 = vmatpush2.xpose.msra.mxu0 0.0
        %1491 = vmatprep.subr.mxu0 0.0
        %1492 = vmatpush2.xpose.msra.mxu0 0.0
        %1493 = vmatprep.subr.mxu0 0.0
        %1494 = vmatpush2.xpose.msra.mxu0 0.0
        %1495 = vmatprep.subr.mxu0 0.0
        %1496 = vmatpush2.xpose.msra.mxu0 0.0
        %1497 = vmatprep.subr.mxu0 0.0
        %1498 = vmatpush2.xpose.msra.mxu0 0.0
        %1499 = vmatprep.subr.mxu0 0.0
        %1500 = vmatpush2.xpose.msra.mxu0 0.0
        %1501 = vmatprep.subr.mxu0 0.0
        %1502 = vmatpush2.xpose.msra.mxu0 0.0
        %1503 = vmatprep.subr.mxu0 0.0
        %1504 = vmatpush2.xpose.msra.mxu0 0.0
        %1505 = vmatprep.subr.mxu0 0.0
        %1506 = vmatpush2.xpose.msra.mxu0 0.0
        %1507 = vmatprep.subr.mxu0 0.0
        %1508 = vmatpush2.xpose.msra.mxu0 0.0
        %1509 = vmatprep.subr.mxu0 0.0
        %1510 = vmatpush2.xpose.msra.mxu0 0.0
        %1511 = vmatprep.mubr.f32.mxu0 0.0
        %1512 = vmatmul.mubr.f32.gmra.mxu0 %v1443
        %v1513 = vpop.f32.mrf.mxu0
        %v1514 = vadd.f32 0.0, %v1513
        %v1515 = vpop.f32.mrf.mxu0
        %1516 = vdwg.mxu0
        %1517 = vrot.lane.b32.xlu0 %v1420, 96
        %v1518 = vpop.permute.xlu0 %1517
        %v1519 = vsel %vm361, %v1404, 0
        %v1521 = vsel %vm361, %v1518, 0
        %1523 = vmatprep.subr.mxu0 0.0
        %1524 = vmatpush1.xpose.msra.mxu0 0.0
        %1525 = vmatprep.subr.mxu0 0.0
        %1526 = vmatpush1.xpose.msra.mxu0 0.0
        %1527 = vmatprep.subr.mxu0 0.0
        %1528 = vmatpush1.xpose.msra.mxu0 0.0
        %1529 = vmatprep.subr.mxu0 0.0
        %1530 = vmatpush1.xpose.msra.mxu0 0.0
        %1531 = vmatprep.subr.mxu0 0.0
        %1532 = vmatpush1.xpose.msra.mxu0 0.0
        %1533 = vmatprep.subr.mxu0 0.0
        %1534 = vmatpush1.xpose.msra.mxu0 0.0
        %1535 = vmatprep.subr.mxu0 0.0
        %1536 = vmatpush1.xpose.msra.mxu0 0.0
        %1537 = vmatprep.subr.mxu0 0.0
        %1538 = vmatpush1.xpose.msra.mxu0 0.0
        %1539 = vmatprep.subr.mxu0 0.0
        %1540 = vmatpush1.xpose.msra.mxu0 0.0
        %1541 = vmatprep.subr.mxu0 0.0
        %1542 = vmatpush1.xpose.msra.mxu0 0.0
        %1543 = vmatprep.subr.mxu0 0.0
        %1544 = vmatpush1.xpose.msra.mxu0 0.0
        %1545 = vmatprep.subr.mxu0 0.0
        %1546 = vmatpush1.xpose.msra.mxu0 0.0
        %1547 = vmatprep.subr.mxu0 0.0
        %1548 = vmatpush1.xpose.msra.mxu0 0.0
        %1549 = vmatprep.subr.mxu0 0.0
        %1550 = vmatpush1.xpose.msra.mxu0 0.0
        %1551 = vmatprep.subr.mxu0 0.0
        %1552 = vmatpush1.xpose.msra.mxu0 0.0
        %1553 = vmatprep.subr.mxu0 0.0
        %1554 = vmatpush1.xpose.msra.mxu0 %v1521
        %1555 = vmatprep.subr.mxu0 0.0
        %1556 = vmatpush2.xpose.msra.mxu0 0.0
        %1557 = vmatprep.subr.mxu0 0.0
        %1558 = vmatpush2.xpose.msra.mxu0 0.0
        %1559 = vmatprep.subr.mxu0 0.0
        %1560 = vmatpush2.xpose.msra.mxu0 0.0
        %1561 = vmatprep.subr.mxu0 0.0
        %1562 = vmatpush2.xpose.msra.mxu0 0.0
        %1563 = vmatprep.subr.mxu0 0.0
        %1564 = vmatpush2.xpose.msra.mxu0 0.0
        %1565 = vmatprep.subr.mxu0 0.0
        %1566 = vmatpush2.xpose.msra.mxu0 0.0
        %1567 = vmatprep.subr.mxu0 0.0
        %1568 = vmatpush2.xpose.msra.mxu0 0.0
        %1569 = vmatprep.subr.mxu0 0.0
        %1570 = vmatpush2.xpose.msra.mxu0 0.0
        %1571 = vmatprep.subr.mxu0 0.0
        %1572 = vmatpush2.xpose.msra.mxu0 0.0
        %1573 = vmatprep.subr.mxu0 0.0
        %1574 = vmatpush2.xpose.msra.mxu0 0.0
        %1575 = vmatprep.subr.mxu0 0.0
        %1576 = vmatpush2.xpose.msra.mxu0 0.0
        %1577 = vmatprep.subr.mxu0 0.0
        %1578 = vmatpush2.xpose.msra.mxu0 0.0
        %1579 = vmatprep.subr.mxu0 0.0
        %1580 = vmatpush2.xpose.msra.mxu0 0.0
        %1581 = vmatprep.subr.mxu0 0.0
        %1582 = vmatpush2.xpose.msra.mxu0 0.0
        %1583 = vmatprep.subr.mxu0 0.0
        %1584 = vmatpush2.xpose.msra.mxu0 0.0
        %1585 = vmatprep.subr.mxu0 0.0
        %1586 = vmatpush2.xpose.msra.mxu0 0.0
        %1587 = vmatprep.mubr.f32.mxu0 0.0
        %1588 = vmatmul.mubr.f32.gmra.mxu0 %v1519
        %v1589 = vpop.f32.mrf.mxu0
        %v1590 = vadd.f32 0.0, %v1589
        %v1591 = vpop.f32.mrf.mxu0
        %1592 = vdwg.mxu0
        %1593 = vrot.lane.b32.xlu0 %v1422, 96
        %v1594 = vpop.permute.xlu0 %1593
        %v1595 = vsel %vm361, %v1406, 0
        %v1597 = vsel %vm361, %v1594, 0
        %1599 = vmatprep.subr.mxu0 0.0
        %1600 = vmatpush1.xpose.msra.mxu0 0.0
        %1601 = vmatprep.subr.mxu0 0.0
        %1602 = vmatpush1.xpose.msra.mxu0 0.0
        %1603 = vmatprep.subr.mxu0 0.0
        %1604 = vmatpush1.xpose.msra.mxu0 0.0
        %1605 = vmatprep.subr.mxu0 0.0
        %1606 = vmatpush1.xpose.msra.mxu0 0.0
        %1607 = vmatprep.subr.mxu0 0.0
        %1608 = vmatpush1.xpose.msra.mxu0 0.0
        %1609 = vmatprep.subr.mxu0 0.0
        %1610 = vmatpush1.xpose.msra.mxu0 0.0
        %1611 = vmatprep.subr.mxu0 0.0
        %1612 = vmatpush1.xpose.msra.mxu0 0.0
        %1613 = vmatprep.subr.mxu0 0.0
        %1614 = vmatpush1.xpose.msra.mxu0 0.0
        %1615 = vmatprep.subr.mxu0 0.0
        %1616 = vmatpush1.xpose.msra.mxu0 0.0
        %1617 = vmatprep.subr.mxu0 0.0
        %1618 = vmatpush1.xpose.msra.mxu0 0.0
        %1619 = vmatprep.subr.mxu0 0.0
        %1620 = vmatpush1.xpose.msra.mxu0 0.0
        %1621 = vmatprep.subr.mxu0 0.0
        %1622 = vmatpush1.xpose.msra.mxu0 0.0
        %1623 = vmatprep.subr.mxu0 0.0
        %1624 = vmatpush1.xpose.msra.mxu0 0.0
        %1625 = vmatprep.subr.mxu0 0.0
        %1626 = vmatpush1.xpose.msra.mxu0 0.0
        %1627 = vmatprep.subr.mxu0 0.0
        %1628 = vmatpush1.xpose.msra.mxu0 0.0
        %1629 = vmatprep.subr.mxu0 0.0
        %1630 = vmatpush1.xpose.msra.mxu0 %v1597
        %1631 = vmatprep.subr.mxu0 0.0
        %1632 = vmatpush2.xpose.msra.mxu0 0.0
        %1633 = vmatprep.subr.mxu0 0.0
        %1634 = vmatpush2.xpose.msra.mxu0 0.0
        %1635 = vmatprep.subr.mxu0 0.0
        %1636 = vmatpush2.xpose.msra.mxu0 0.0
        %1637 = vmatprep.subr.mxu0 0.0
        %1638 = vmatpush2.xpose.msra.mxu0 0.0
        %1639 = vmatprep.subr.mxu0 0.0
        %1640 = vmatpush2.xpose.msra.mxu0 0.0
        %1641 = vmatprep.subr.mxu0 0.0
        %1642 = vmatpush2.xpose.msra.mxu0 0.0
        %1643 = vmatprep.subr.mxu0 0.0
        %1644 = vmatpush2.xpose.msra.mxu0 0.0
        %1645 = vmatprep.subr.mxu0 0.0
        %1646 = vmatpush2.xpose.msra.mxu0 0.0
        %1647 = vmatprep.subr.mxu0 0.0
        %1648 = vmatpush2.xpose.msra.mxu0 0.0
        %1649 = vmatprep.subr.mxu0 0.0
        %1650 = vmatpush2.xpose.msra.mxu0 0.0
        %1651 = vmatprep.subr.mxu0 0.0
        %1652 = vmatpush2.xpose.msra.mxu0 0.0
        %1653 = vmatprep.subr.mxu0 0.0
        %1654 = vmatpush2.xpose.msra.mxu0 0.0
        %1655 = vmatprep.subr.mxu0 0.0
        %1656 = vmatpush2.xpose.msra.mxu0 0.0
        %1657 = vmatprep.subr.mxu0 0.0
        %1658 = vmatpush2.xpose.msra.mxu0 0.0
        %1659 = vmatprep.subr.mxu0 0.0
        %1660 = vmatpush2.xpose.msra.mxu0 0.0
        %1661 = vmatprep.subr.mxu0 0.0
        %1662 = vmatpush2.xpose.msra.mxu0 0.0
        %1663 = vmatprep.mubr.f32.mxu0 0.0
        %1664 = vmatmul.mubr.f32.gmra.mxu0 %v1595
        %v1665 = vpop.f32.mrf.mxu0
        %v1666 = vadd.f32 0.0, %v1665
        %v1667 = vpop.f32.mrf.mxu0
        %1668 = vdwg.mxu0
        %1669 = vrot.lane.b32.xlu0 %v1424, 96
        %v1670 = vpop.permute.xlu0 %1669
        %v1671 = vsel %vm361, %v1408, 0
        %v1673 = vsel %vm361, %v1670, 0
        %1675 = vmatprep.subr.mxu0 0.0
        %1676 = vmatpush1.xpose.msra.mxu0 0.0
        %1677 = vmatprep.subr.mxu0 0.0
        %1678 = vmatpush1.xpose.msra.mxu0 0.0
        %1679 = vmatprep.subr.mxu0 0.0
        %1680 = vmatpush1.xpose.msra.mxu0 0.0
        %1681 = vmatprep.subr.mxu0 0.0
        %1682 = vmatpush1.xpose.msra.mxu0 0.0
        %1683 = vmatprep.subr.mxu0 0.0
        %1684 = vmatpush1.xpose.msra.mxu0 0.0
        %1685 = vmatprep.subr.mxu0 0.0
        %1686 = vmatpush1.xpose.msra.mxu0 0.0
        %1687 = vmatprep.subr.mxu0 0.0
        %1688 = vmatpush1.xpose.msra.mxu0 0.0
        %1689 = vmatprep.subr.mxu0 0.0
        %1690 = vmatpush1.xpose.msra.mxu0 0.0
        %1691 = vmatprep.subr.mxu0 0.0
        %1692 = vmatpush1.xpose.msra.mxu0 0.0
        %1693 = vmatprep.subr.mxu0 0.0
        %1694 = vmatpush1.xpose.msra.mxu0 0.0
        %1695 = vmatprep.subr.mxu0 0.0
        %1696 = vmatpush1.xpose.msra.mxu0 0.0
        %1697 = vmatprep.subr.mxu0 0.0
        %1698 = vmatpush1.xpose.msra.mxu0 0.0
        %1699 = vmatprep.subr.mxu0 0.0
        %1700 = vmatpush1.xpose.msra.mxu0 0.0
        %1701 = vmatprep.subr.mxu0 0.0
        %1702 = vmatpush1.xpose.msra.mxu0 0.0
        %1703 = vmatprep.subr.mxu0 0.0
        %1704 = vmatpush1.xpose.msra.mxu0 0.0
        %1705 = vmatprep.subr.mxu0 0.0
        %1706 = vmatpush1.xpose.msra.mxu0 %v1673
        %1707 = vmatprep.subr.mxu0 0.0
        %1708 = vmatpush2.xpose.msra.mxu0 0.0
        %1709 = vmatprep.subr.mxu0 0.0
        %1710 = vmatpush2.xpose.msra.mxu0 0.0
        %1711 = vmatprep.subr.mxu0 0.0
        %1712 = vmatpush2.xpose.msra.mxu0 0.0
        %1713 = vmatprep.subr.mxu0 0.0
        %1714 = vmatpush2.xpose.msra.mxu0 0.0
        %1715 = vmatprep.subr.mxu0 0.0
        %1716 = vmatpush2.xpose.msra.mxu0 0.0
        %1717 = vmatprep.subr.mxu0 0.0
        %1718 = vmatpush2.xpose.msra.mxu0 0.0
        %1719 = vmatprep.subr.mxu0 0.0
        %1720 = vmatpush2.xpose.msra.mxu0 0.0
        %1721 = vmatprep.subr.mxu0 0.0
        %1722 = vmatpush2.xpose.msra.mxu0 0.0
        %1723 = vmatprep.subr.mxu0 0.0
        %1724 = vmatpush2.xpose.msra.mxu0 0.0
        %1725 = vmatprep.subr.mxu0 0.0
        %1726 = vmatpush2.xpose.msra.mxu0 0.0
        %1727 = vmatprep.subr.mxu0 0.0
        %1728 = vmatpush2.xpose.msra.mxu0 0.0
        %1729 = vmatprep.subr.mxu0 0.0
        %1730 = vmatpush2.xpose.msra.mxu0 0.0
        %1731 = vmatprep.subr.mxu0 0.0
        %1732 = vmatpush2.xpose.msra.mxu0 0.0
        %1733 = vmatprep.subr.mxu0 0.0
        %1734 = vmatpush2.xpose.msra.mxu0 0.0
        %1735 = vmatprep.subr.mxu0 0.0
        %1736 = vmatpush2.xpose.msra.mxu0 0.0
        %1737 = vmatprep.subr.mxu0 0.0
        %1738 = vmatpush2.xpose.msra.mxu0 0.0
        %1739 = vmatprep.mubr.f32.mxu0 0.0
        %1740 = vmatmul.mubr.f32.gmra.mxu0 %v1671
        %v1741 = vpop.f32.mrf.mxu0
        %v1742 = vadd.f32 0.0, %v1741
        %v1743 = vpop.f32.mrf.mxu0
        %1744 = vdwg.mxu0
        %v1745 = vmul.f32 %v1514, 0.35355338
        %v1746 = vmul.f32 %v1590, 0.35355338
        %v1747 = vmul.f32 %v1666, 0.35355338
        %v1748 = vmul.f32 %v1742, 0.35355338
        %v1749 = vadd.f32 %v1745, %v227
        %v1750 = vadd.f32 %v1746, %v227
        %v1751 = vadd.f32 %v1747, %v227
        %v1752 = vadd.f32 %v1748, %v227
        %v1753 = vsel %vm361, %v1749, -inf
        %1754 = vmax.xlane.f32.xlu0 %v1753
        %v1755 = vpop.xlane.xlu0 %1754
        %v1756 = vsel %vm361, %v1750, -inf
        %1757 = vmax.xlane.f32.xlu0 %v1756
        %v1758 = vpop.xlane.xlu0 %1757
        %v1759 = vsel %vm361, %v1751, -inf
        %1760 = vmax.xlane.f32.xlu0 %v1759
        %v1761 = vpop.xlane.xlu0 %1760
        %v1762 = vsel %vm361, %v1752, -inf
        %1763 = vmax.xlane.f32.xlu0 %v1762
        %v1764 = vpop.xlane.xlu0 %1763
        %v1765 = vsub.f32 %v1749, %v1755
        %v1766 = vsub.f32 %v1750, %v1758
        %v1767 = vsub.f32 %v1751, %v1761
        %v1768 = vsub.f32 %v1752, %v1764
        %v1769 = vmul.f32 %v1765, 1.442695
        %v1770 = vpow.pop %v1769
        %v1771 = vmul.f32 %v1766, 1.442695
        %v1772 = vpow.pop %v1771
        %v1773 = vmul.f32 %v1767, 1.442695
        %v1774 = vpow.pop %v1773
        %v1775 = vmul.f32 %v1768, 1.442695
        %v1776 = vpow.pop %v1775
        %v1777 = vsel %vm361, %v1770, 0.0
        %1778 = vadd.xlane.f32.xlu0 %v1777
        %v1779 = vpop.xlane.xlu0 %1778
        %v1780 = vsel %vm361, %v1772, 0.0
        %1781 = vadd.xlane.f32.xlu0 %v1780
        %v1782 = vpop.xlane.xlu0 %1781
        %v1783 = vsel %vm361, %v1774, 0.0
        %1784 = vadd.xlane.f32.xlu0 %v1783
        %v1785 = vpop.xlane.xlu0 %1784
        %v1786 = vsel %vm361, %v1776, 0.0
        %1787 = vadd.xlane.f32.xlu0 %v1786
        %v1788 = vpop.xlane.xlu0 %1787
        %v1789 = vrcp.pop %v1779
        %v1790 = vrcp.pop %v1782
        %v1791 = vrcp.pop %v1785
        %v1792 = vrcp.pop %v1788
        %v1793 = vmul.f32 %v1770, %v1789
        %v1794 = vmul.f32 %v1772, %v1790
        %v1795 = vmul.f32 %v1774, %v1791
        %v1796 = vmul.f32 %v1776, %v1792
        %1797 = vrot.lane.b32.xlu0 %v1433, 64
        %v1798 = vpop.permute.xlu0 %1797
        %v1801 = vsel %vm361, %v1793, 0
        %1803 = vmatprep.subr.mxu0 0.0
        %1804 = vmatpush1.msra.mxu0 0.0
        %1805 = vmatprep.subr.mxu0 0.0
        %1806 = vmatpush1.msra.mxu0 0.0
        %1807 = vmatprep.subr.mxu0 0.0
        %1808 = vmatpush1.msra.mxu0 0.0
        %1809 = vmatprep.subr.mxu0 0.0
        %1810 = vmatpush1.msra.mxu0 0.0
        %1811 = vmatprep.subr.mxu0 0.0
        %1812 = vmatpush1.msra.mxu0 0.0
        %1813 = vmatprep.subr.mxu0 0.0
        %1814 = vmatpush1.msra.mxu0 0.0
        %1815 = vmatprep.subr.mxu0 0.0
        %1816 = vmatpush1.msra.mxu0 0.0
        %1817 = vmatprep.subr.mxu0 0.0
        %1818 = vmatpush1.msra.mxu0 0.0
        %1819 = vmatprep.subr.mxu0 0.0
        %1820 = vmatpush1.msra.mxu0 0.0
        %1821 = vmatprep.subr.mxu0 0.0
        %1822 = vmatpush1.msra.mxu0 0.0
        %1823 = vmatprep.subr.mxu0 0.0
        %1824 = vmatpush1.msra.mxu0 0.0
        %1825 = vmatprep.subr.mxu0 0.0
        %1826 = vmatpush1.msra.mxu0 0.0
        %1827 = vmatprep.subr.mxu0 0.0
        %1828 = vmatpush1.msra.mxu0 0.0
        %1829 = vmatprep.subr.mxu0 0.0
        %1830 = vmatpush1.msra.mxu0 0.0
        %1831 = vmatprep.subr.mxu0 0.0
        %1832 = vmatpush1.msra.mxu0 0.0
        %1833 = vmatprep.subr.mxu0 0.0
        %1834 = vmatpush1.msra.mxu0 %v1798
        %1835 = vmatprep.subr.mxu0 0.0
        %1836 = vmatpush2.msra.mxu0 0.0
        %1837 = vmatprep.subr.mxu0 0.0
        %1838 = vmatpush2.msra.mxu0 0.0
        %1839 = vmatprep.subr.mxu0 0.0
        %1840 = vmatpush2.msra.mxu0 0.0
        %1841 = vmatprep.subr.mxu0 0.0
        %1842 = vmatpush2.msra.mxu0 0.0
        %1843 = vmatprep.subr.mxu0 0.0
        %1844 = vmatpush2.msra.mxu0 0.0
        %1845 = vmatprep.subr.mxu0 0.0
        %1846 = vmatpush2.msra.mxu0 0.0
        %1847 = vmatprep.subr.mxu0 0.0
        %1848 = vmatpush2.msra.mxu0 0.0
        %1849 = vmatprep.subr.mxu0 0.0
        %1850 = vmatpush2.msra.mxu0 0.0
        %1851 = vmatprep.subr.mxu0 0.0
        %1852 = vmatpush2.msra.mxu0 0.0
        %1853 = vmatprep.subr.mxu0 0.0
        %1854 = vmatpush2.msra.mxu0 0.0
        %1855 = vmatprep.subr.mxu0 0.0
        %1856 = vmatpush2.msra.mxu0 0.0
        %1857 = vmatprep.subr.mxu0 0.0
        %1858 = vmatpush2.msra.mxu0 0.0
        %1859 = vmatprep.subr.mxu0 0.0
        %1860 = vmatpush2.msra.mxu0 0.0
        %1861 = vmatprep.subr.mxu0 0.0
        %1862 = vmatpush2.msra.mxu0 0.0
        %1863 = vmatprep.subr.mxu0 0.0
        %1864 = vmatpush2.msra.mxu0 0.0
        %1865 = vmatprep.subr.mxu0 0.0
        %1866 = vmatpush2.msra.mxu0 0.0
        %1867 = vmatprep.mubr.f32.mxu0 0.0
        %1868 = vmatmul.mubr.f32.gmra.mxu0 %v1801
        %v1869 = vpop.f32.mrf.mxu0
        %v1870 = vadd.f32 0.0, %v1869
        %v1871 = vpop.f32.mrf.mxu0
        %1872 = vdwg.mxu0
        %1873 = vrot.lane.b32.xlu0 %v1436, 64
        %v1874 = vpop.permute.xlu0 %1873
        %v1877 = vsel %vm361, %v1794, 0
        %1879 = vmatprep.subr.mxu0 0.0
        %1880 = vmatpush1.msra.mxu0 0.0
        %1881 = vmatprep.subr.mxu0 0.0
        %1882 = vmatpush1.msra.mxu0 0.0
        %1883 = vmatprep.subr.mxu0 0.0
        %1884 = vmatpush1.msra.mxu0 0.0
        %1885 = vmatprep.subr.mxu0 0.0
        %1886 = vmatpush1.msra.mxu0 0.0
        %1887 = vmatprep.subr.mxu0 0.0
        %1888 = vmatpush1.msra.mxu0 0.0
        %1889 = vmatprep.subr.mxu0 0.0
        %1890 = vmatpush1.msra.mxu0 0.0
        %1891 = vmatprep.subr.mxu0 0.0
        %1892 = vmatpush1.msra.mxu0 0.0
        %1893 = vmatprep.subr.mxu0 0.0
        %1894 = vmatpush1.msra.mxu0 0.0
        %1895 = vmatprep.subr.mxu0 0.0
        %1896 = vmatpush1.msra.mxu0 0.0
        %1897 = vmatprep.subr.mxu0 0.0
        %1898 = vmatpush1.msra.mxu0 0.0
        %1899 = vmatprep.subr.mxu0 0.0
        %1900 = vmatpush1.msra.mxu0 0.0
        %1901 = vmatprep.subr.mxu0 0.0
        %1902 = vmatpush1.msra.mxu0 0.0
        %1903 = vmatprep.subr.mxu0 0.0
        %1904 = vmatpush1.msra.mxu0 0.0
        %1905 = vmatprep.subr.mxu0 0.0
        %1906 = vmatpush1.msra.mxu0 0.0
        %1907 = vmatprep.subr.mxu0 0.0
        %1908 = vmatpush1.msra.mxu0 0.0
        %1909 = vmatprep.subr.mxu0 0.0
        %1910 = vmatpush1.msra.mxu0 %v1874
        %1911 = vmatprep.subr.mxu0 0.0
        %1912 = vmatpush2.msra.mxu0 0.0
        %1913 = vmatprep.subr.mxu0 0.0
        %1914 = vmatpush2.msra.mxu0 0.0
        %1915 = vmatprep.subr.mxu0 0.0
        %1916 = vmatpush2.msra.mxu0 0.0
        %1917 = vmatprep.subr.mxu0 0.0
        %1918 = vmatpush2.msra.mxu0 0.0
        %1919 = vmatprep.subr.mxu0 0.0
        %1920 = vmatpush2.msra.mxu0 0.0
        %1921 = vmatprep.subr.mxu0 0.0
        %1922 = vmatpush2.msra.mxu0 0.0
        %1923 = vmatprep.subr.mxu0 0.0
        %1924 = vmatpush2.msra.mxu0 0.0
        %1925 = vmatprep.subr.mxu0 0.0
        %1926 = vmatpush2.msra.mxu0 0.0
        %1927 = vmatprep.subr.mxu0 0.0
        %1928 = vmatpush2.msra.mxu0 0.0
        %1929 = vmatprep.subr.mxu0 0.0
        %1930 = vmatpush2.msra.mxu0 0.0
        %1931 = vmatprep.subr.mxu0 0.0
        %1932 = vmatpush2.msra.mxu0 0.0
        %1933 = vmatprep.subr.mxu0 0.0
        %1934 = vmatpush2.msra.mxu0 0.0
        %1935 = vmatprep.subr.mxu0 0.0
        %1936 = vmatpush2.msra.mxu0 0.0
        %1937 = vmatprep.subr.mxu0 0.0
        %1938 = vmatpush2.msra.mxu0 0.0
        %1939 = vmatprep.subr.mxu0 0.0
        %1940 = vmatpush2.msra.mxu0 0.0
        %1941 = vmatprep.subr.mxu0 0.0
        %1942 = vmatpush2.msra.mxu0 0.0
        %1943 = vmatprep.mubr.f32.mxu0 0.0
        %1944 = vmatmul.mubr.f32.gmra.mxu0 %v1877
        %v1945 = vpop.f32.mrf.mxu0
        %v1946 = vadd.f32 0.0, %v1945
        %v1947 = vpop.f32.mrf.mxu0
        %1948 = vdwg.mxu0
        %1949 = vrot.lane.b32.xlu0 %v1438, 64
        %v1950 = vpop.permute.xlu0 %1949
        %v1953 = vsel %vm361, %v1795, 0
        %1955 = vmatprep.subr.mxu0 0.0
        %1956 = vmatpush1.msra.mxu0 0.0
        %1957 = vmatprep.subr.mxu0 0.0
        %1958 = vmatpush1.msra.mxu0 0.0
        %1959 = vmatprep.subr.mxu0 0.0
        %1960 = vmatpush1.msra.mxu0 0.0
        %1961 = vmatprep.subr.mxu0 0.0
        %1962 = vmatpush1.msra.mxu0 0.0
        %1963 = vmatprep.subr.mxu0 0.0
        %1964 = vmatpush1.msra.mxu0 0.0
        %1965 = vmatprep.subr.mxu0 0.0
        %1966 = vmatpush1.msra.mxu0 0.0
        %1967 = vmatprep.subr.mxu0 0.0
        %1968 = vmatpush1.msra.mxu0 0.0
        %1969 = vmatprep.subr.mxu0 0.0
        %1970 = vmatpush1.msra.mxu0 0.0
        %1971 = vmatprep.subr.mxu0 0.0
        %1972 = vmatpush1.msra.mxu0 0.0
        %1973 = vmatprep.subr.mxu0 0.0
        %1974 = vmatpush1.msra.mxu0 0.0
        %1975 = vmatprep.subr.mxu0 0.0
        %1976 = vmatpush1.msra.mxu0 0.0
        %1977 = vmatprep.subr.mxu0 0.0
        %1978 = vmatpush1.msra.mxu0 0.0
        %1979 = vmatprep.subr.mxu0 0.0
        %1980 = vmatpush1.msra.mxu0 0.0
        %1981 = vmatprep.subr.mxu0 0.0
        %1982 = vmatpush1.msra.mxu0 0.0
        %1983 = vmatprep.subr.mxu0 0.0
        %1984 = vmatpush1.msra.mxu0 0.0
        %1985 = vmatprep.subr.mxu0 0.0
        %1986 = vmatpush1.msra.mxu0 %v1950
        %1987 = vmatprep.subr.mxu0 0.0
        %1988 = vmatpush2.msra.mxu0 0.0
        %1989 = vmatprep.subr.mxu0 0.0
        %1990 = vmatpush2.msra.mxu0 0.0
        %1991 = vmatprep.subr.mxu0 0.0
        %1992 = vmatpush2.msra.mxu0 0.0
        %1993 = vmatprep.subr.mxu0 0.0
        %1994 = vmatpush2.msra.mxu0 0.0
        %1995 = vmatprep.subr.mxu0 0.0
        %1996 = vmatpush2.msra.mxu0 0.0
        %1997 = vmatprep.subr.mxu0 0.0
        %1998 = vmatpush2.msra.mxu0 0.0
        %1999 = vmatprep.subr.mxu0 0.0
        %2000 = vmatpush2.msra.mxu0 0.0
        %2001 = vmatprep.subr.mxu0 0.0
        %2002 = vmatpush2.msra.mxu0 0.0
        %2003 = vmatprep.subr.mxu0 0.0
        %2004 = vmatpush2.msra.mxu0 0.0
        %2005 = vmatprep.subr.mxu0 0.0
        %2006 = vmatpush2.msra.mxu0 0.0
        %2007 = vmatprep.subr.mxu0 0.0
        %2008 = vmatpush2.msra.mxu0 0.0
        %2009 = vmatprep.subr.mxu0 0.0
        %2010 = vmatpush2.msra.mxu0 0.0
        %2011 = vmatprep.subr.mxu0 0.0
        %2012 = vmatpush2.msra.mxu0 0.0
        %2013 = vmatprep.subr.mxu0 0.0
        %2014 = vmatpush2.msra.mxu0 0.0
        %2015 = vmatprep.subr.mxu0 0.0
        %2016 = vmatpush2.msra.mxu0 0.0
        %2017 = vmatprep.subr.mxu0 0.0
        %2018 = vmatpush2.msra.mxu0 0.0
        %2019 = vmatprep.mubr.f32.mxu0 0.0
        %2020 = vmatmul.mubr.f32.gmra.mxu0 %v1953
        %v2021 = vpop.f32.mrf.mxu0
        %v2022 = vadd.f32 0.0, %v2021
        %v2023 = vpop.f32.mrf.mxu0
        %2024 = vdwg.mxu0
        %2025 = vrot.lane.b32.xlu0 %v1440, 64
        %v2026 = vpop.permute.xlu0 %2025
        %v2029 = vsel %vm361, %v1796, 0
        %2031 = vmatprep.subr.mxu0 0.0
        %2032 = vmatpush1.msra.mxu0 0.0
        %2033 = vmatprep.subr.mxu0 0.0
        %2034 = vmatpush1.msra.mxu0 0.0
        %2035 = vmatprep.subr.mxu0 0.0
        %2036 = vmatpush1.msra.mxu0 0.0
        %2037 = vmatprep.subr.mxu0 0.0
        %2038 = vmatpush1.msra.mxu0 0.0
        %2039 = vmatprep.subr.mxu0 0.0
        %2040 = vmatpush1.msra.mxu0 0.0
        %2041 = vmatprep.subr.mxu0 0.0
        %2042 = vmatpush1.msra.mxu0 0.0
        %2043 = vmatprep.subr.mxu0 0.0
        %2044 = vmatpush1.msra.mxu0 0.0
        %2045 = vmatprep.subr.mxu0 0.0
        %2046 = vmatpush1.msra.mxu0 0.0
        %2047 = vmatprep.subr.mxu0 0.0
        %2048 = vmatpush1.msra.mxu0 0.0
        %2049 = vmatprep.subr.mxu0 0.0
        %2050 = vmatpush1.msra.mxu0 0.0
        %2051 = vmatprep.subr.mxu0 0.0
        %2052 = vmatpush1.msra.mxu0 0.0
        %2053 = vmatprep.subr.mxu0 0.0
        %2054 = vmatpush1.msra.mxu0 0.0
        %2055 = vmatprep.subr.mxu0 0.0
        %2056 = vmatpush1.msra.mxu0 0.0
        %2057 = vmatprep.subr.mxu0 0.0
        %2058 = vmatpush1.msra.mxu0 0.0
        %2059 = vmatprep.subr.mxu0 0.0
        %2060 = vmatpush1.msra.mxu0 0.0
        %2061 = vmatprep.subr.mxu0 0.0
        %2062 = vmatpush1.msra.mxu0 %v2026
        %2063 = vmatprep.subr.mxu0 0.0
        %2064 = vmatpush2.msra.mxu0 0.0
        %2065 = vmatprep.subr.mxu0 0.0
        %2066 = vmatpush2.msra.mxu0 0.0
        %2067 = vmatprep.subr.mxu0 0.0
        %2068 = vmatpush2.msra.mxu0 0.0
        %2069 = vmatprep.subr.mxu0 0.0
        %2070 = vmatpush2.msra.mxu0 0.0
        %2071 = vmatprep.subr.mxu0 0.0
        %2072 = vmatpush2.msra.mxu0 0.0
        %2073 = vmatprep.subr.mxu0 0.0
        %2074 = vmatpush2.msra.mxu0 0.0
        %2075 = vmatprep.subr.mxu0 0.0
        %2076 = vmatpush2.msra.mxu0 0.0
        %2077 = vmatprep.subr.mxu0 0.0
        %2078 = vmatpush2.msra.mxu0 0.0
        %2079 = vmatprep.subr.mxu0 0.0
        %2080 = vmatpush2.msra.mxu0 0.0
        %2081 = vmatprep.subr.mxu0 0.0
        %2082 = vmatpush2.msra.mxu0 0.0
        %2083 = vmatprep.subr.mxu0 0.0
        %2084 = vmatpush2.msra.mxu0 0.0
        %2085 = vmatprep.subr.mxu0 0.0
        %2086 = vmatpush2.msra.mxu0 0.0
        %2087 = vmatprep.subr.mxu0 0.0
        %2088 = vmatpush2.msra.mxu0 0.0
        %2089 = vmatprep.subr.mxu0 0.0
        %2090 = vmatpush2.msra.mxu0 0.0
        %2091 = vmatprep.subr.mxu0 0.0
        %2092 = vmatpush2.msra.mxu0 0.0
        %2093 = vmatprep.subr.mxu0 0.0
        %2094 = vmatpush2.msra.mxu0 0.0
        %2095 = vmatprep.mubr.f32.mxu0 0.0
        %2096 = vmatmul.mubr.f32.gmra.mxu0 %v2029
        %v2097 = vpop.f32.mrf.mxu0
        %v2098 = vadd.f32 0.0, %v2097
        %v2099 = vpop.f32.mrf.mxu0
        %2100 = vdwg.mxu0
        %2102 = vrot.lane.b32.xlu0 %v1946, 8
        %v2103 = vpop.permute.xlu0 %2102
        %2106 = vrot.lane.b32.xlu0 %v2022, 16
        %v2107 = vpop.permute.xlu0 %2106
        %2110 = vrot.lane.b32.xlu0 %v2098, 24
        %v2111 = vpop.permute.xlu0 %2110
        %v2113 = vsel %vm361, %v1870, %v2103
        %v2114 = vsel %vm1033, %v2113, %v2107
        %v2115 = vsel %vm1035, %v2114, %v2111
        %v2116 = vpack.c.bf16 %v2115, %v2115
        %2117 = vrot.lane.b32.xlu0 %v1350, 32
        %v2118 = vpop.permute.xlu0 %2117
        %2119 = vrot.lane.b32.xlu0 %v1351, 32
        %v2120 = vpop.permute.xlu0 %2119
        %v2124 = vsel %vm234, %v2116, 0
        %2126 = vmatprep.subr.bf16.mxu0 0
        %2127 = vmatpush1.bf16.msra.mxu0 0
        %2128 = vmatprep.subr.bf16.mxu0 0
        %2129 = vmatpush1.bf16.msra.mxu0 0
        %2130 = vmatprep.subr.bf16.mxu0 0
        %2131 = vmatpush1.bf16.msra.mxu0 0
        %2132 = vmatprep.subr.bf16.mxu0 0
        %2133 = vmatpush1.bf16.msra.mxu0 0
        %2134 = vmatprep.subr.bf16.mxu0 0
        %2135 = vmatpush1.bf16.msra.mxu0 0
        %2136 = vmatprep.subr.bf16.mxu0 0
        %2137 = vmatpush1.bf16.msra.mxu0 0
        %2138 = vmatprep.subr.bf16.mxu0 0
        %2139 = vmatpush1.bf16.msra.mxu0 %v2120
        %2140 = vmatprep.subr.bf16.mxu0 0
        %2141 = vmatpush1.bf16.msra.mxu0 %v2118
        %2142 = vmatprep.subr.bf16.mxu0 0
        %2143 = vmatpush2.bf16.msra.mxu0 0
        %2144 = vmatprep.subr.bf16.mxu0 0
        %2145 = vmatpush2.bf16.msra.mxu0 0
        %2146 = vmatprep.subr.bf16.mxu0 0
        %2147 = vmatpush2.bf16.msra.mxu0 0
        %2148 = vmatprep.subr.bf16.mxu0 0
        %2149 = vmatpush2.bf16.msra.mxu0 0
        %2150 = vmatprep.subr.bf16.mxu0 0
        %2151 = vmatpush2.bf16.msra.mxu0 0
        %2152 = vmatprep.subr.bf16.mxu0 0
        %2153 = vmatpush2.bf16.msra.mxu0 0
        %2154 = vmatprep.subr.bf16.mxu0 0
        %2155 = vmatpush2.bf16.msra.mxu0 0
        %2156 = vmatprep.subr.bf16.mxu0 0
        %2157 = vmatpush2.bf16.msra.mxu0 0
        %2158 = vmatprep.mubr.bf16.mxu0 0
        %2159 = vmatmul.mubr.bf16.gmra.mxu0 %v2124
        %v2160 = vpop.f32.mrf.mxu0
        %v2161 = vadd.f32 0.0, %v2160
        %v2162 = vpop.f32.mrf.mxu0
        %v2163 = vpop.f32.mrf.mxu0
        %v2164 = vpop.f32.mrf.mxu0
        %2165 = vdwg.mxu0
        %v2166 = vadd.f32 %v1309, %v2161
        %v2167 = vlaneseq
        %v2168 = vshrl.u32 %v2167, 7
        %v2169 = vsub.s32 5, %v2168
        %v2170 = vrot.slane %v1311, %v2169
        %v2171 = vadd.f32 %v2166, %v2170
        %v2172 = vsel %vm234, %v2171, 0.0
        %2173 = vadd.xlane.f32.xlu0 %v2172
        %v2174 = vpop.xlane.xlu0 %2173
        %v2175 = vmul.f32 %v2174, %v238
        %v2176 = vsub.f32 %v2171, %v2175
        %v2177 = vmul.f32 %v2176, %v2176
        %v2178 = vsel %vm234, %v2177, 0.0
        %2179 = vadd.xlane.f32.xlu0 %v2178
        %v2180 = vpop.xlane.xlu0 %2179
        %v2181 = vmul.f32 %v2180, %v238
        %v2182 = vadd.f32 %v2181, 1e-05
        %v2183 = vrsqrt.pop %v2182
        %v2184 = vmul.f32 %v2176, %v2183
        %v2185 = vlaneseq
        %v2186 = vshrl.u32 %v2185, 7
        %v2187 = vsub.s32 6, %v2186
        %v2188 = vrot.slane %v1311, %v2187
        %v2189 = vmul.f32 %v2184, %v2188
        %v2190 = vlaneseq
        %v2191 = vshrl.u32 %v2190, 7
        %v2192 = vsub.s32 7, %v2191
        %v2193 = vrot.slane %v1311, %v2192
        %v2194 = vadd.f32 %v2189, %v2193
        %v2196 = vrot.slane %v1312, 1
        %2197 = vrot.lane.b32.xlu0 %v2196, 32
        %v2198 = vpop.permute.xlu0 %2197
        %v2200 = vrot.slane %v1312, 2
        %2201 = vrot.lane.b32.xlu0 %v2200, 64
        %v2202 = vpop.permute.xlu0 %2201
        %v2204 = vrot.slane %v1312, 3
        %2205 = vrot.lane.b32.xlu0 %v2204, 96
        %v2206 = vpop.permute.xlu0 %2205
        %v2208 = vsel %vm234, %v1312, %v2198
        %v2209 = vsel %vm1130, %v2208, %v2202
        %v2210 = vsel %vm1132, %v2209, %v2206
        %v2211 = vpack.c.bf16 %v2194, %v2194
        %v2212 = vlaneseq
        %v2213 = vshrl.u32 %v2212, 7
        %v2214 = vsub.s32 0, %v2213
        %v2215 = vrot.slane %v2210, %v2214
        %v2216 = vunpack.c.h.b16 %v1314
        %v2217 = vunpack.c.h.b16 %v1315
        %v2218 = vunpack.c.h.b16 %v1316
        %v2219 = vunpack.c.h.b16 %v1317
        %v2220 = vpack.c.b16 %v2217, %v2216
        %v2221 = vpack.c.b16 %v2219, %v2218
        %v2225 = vsel %vm234, %v2211, 0
        %2227 = vmatprep.subr.bf16.mxu0 0
        %2228 = vmatpush1.bf16.msra.mxu0 0
        %2229 = vmatprep.subr.bf16.mxu0 0
        %2230 = vmatpush1.bf16.msra.mxu0 0
        %2231 = vmatprep.subr.bf16.mxu0 0
        %2232 = vmatpush1.bf16.msra.mxu0 0
        %2233 = vmatprep.subr.bf16.mxu0 0
        %2234 = vmatpush1.bf16.msra.mxu0 0
        %2235 = vmatprep.subr.bf16.mxu0 0
        %2236 = vmatpush1.bf16.msra.mxu0 0
        %2237 = vmatprep.subr.bf16.mxu0 0
        %2238 = vmatpush1.bf16.msra.mxu0 0
        %2239 = vmatprep.subr.bf16.mxu0 0
        %2240 = vmatpush1.bf16.msra.mxu0 %v2221
        %2241 = vmatprep.subr.bf16.mxu0 0
        %2242 = vmatpush1.bf16.msra.mxu0 %v2220
        %2243 = vmatprep.subr.bf16.mxu0 0
        %2244 = vmatpush2.bf16.msra.mxu0 0
        %2245 = vmatprep.subr.bf16.mxu0 0
        %2246 = vmatpush2.bf16.msra.mxu0 0
        %2247 = vmatprep.subr.bf16.mxu0 0
        %2248 = vmatpush2.bf16.msra.mxu0 0
        %2249 = vmatprep.subr.bf16.mxu0 0
        %2250 = vmatpush2.bf16.msra.mxu0 0
        %2251 = vmatprep.subr.bf16.mxu0 0
        %2252 = vmatpush2.bf16.msra.mxu0 0
        %2253 = vmatprep.subr.bf16.mxu0 0
        %2254 = vmatpush2.bf16.msra.mxu0 0
        %2255 = vmatprep.subr.bf16.mxu0 0
        %2256 = vmatpush2.bf16.msra.mxu0 0
        %2257 = vmatprep.subr.bf16.mxu0 0
        %2258 = vmatpush2.bf16.msra.mxu0 0
        %2259 = vmatprep.mubr.bf16.mxu0 0
        %2260 = vmatmul.mubr.bf16.gmra.mxu0 %v2225
        %v2261 = vpop.f32.mrf.mxu0
        %v2262 = vadd.f32 %v2215, %v2261
        %v2263 = vpop.f32.mrf.mxu0
        %v2264 = vpop.f32.mrf.mxu0
        %v2265 = vpop.f32.mrf.mxu0
        %2266 = vdwg.mxu0
        %v2267 = vmul.f32 %v2262, 0.5
        %v2268 = vmul.f32 %v2262, 0.044715
        %v2269 = vmul.f32 %v2268, %v2262
        %v2270 = vmul.f32 %v2269, %v2262
        %v2271 = vadd.f32 %v2262, %v2270
        %v2272 = vmul.f32 %v2271, 0.7978846
        %v2273 = vtanh.pop %v2272
        %v2274 = vadd.f32 %v2273, 1.0
        %v2275 = vmul.f32 %v2267, %v2274
        %v2276 = vpack.c.bf16 %v2275, %v2275
        %s2277 = scalar_lea.vmem %s2, 64
        %v2278 = vld [vmem:[%s2277] sm:$0xf]
        %v2279 = vld [vmem:[%s2277 + $0x4] sm:$0xf]
        %v2280 = vld [vmem:[%s2277 + $0x8] sm:$0xf]
        %v2281 = vld [vmem:[%s2277 + $0xc] sm:$0xf]
        %v2282 = vld [vmem:[%s2277 + $0x10] sm:$0xf]
        %v2283 = vld [vmem:[%s2277 + $0x14] sm:$0xf]
        %v2284 = vld [vmem:[%s2277 + $0x18] sm:$0xf]
        %v2285 = vld [vmem:[%s2277 + $0x1c] sm:$0xf]
        %v2286 = vld [vmem:[%s2277 + $0x20] sm:$0xf]
        %v2287 = vld [vmem:[%s2277 + $0x24] sm:$0xf]
        %v2288 = vld [vmem:[%s2277 + $0x28] sm:$0xf]
        %v2289 = vld [vmem:[%s2277 + $0x2c] sm:$0xf]
        %v2290 = vld [vmem:[%s2277 + $0x30] sm:$0xf]
        %v2291 = vld [vmem:[%s2277 + $0x34] sm:$0xf]
        %v2292 = vld [vmem:[%s2277 + $0x38] sm:$0xf]
        %v2293 = vld [vmem:[%s2277 + $0x3c] sm:$0xf]
        %v2310 = vunpack.c.l.b16 %v2278
        %v2311 = vunpack.c.l.b16 %v2279
        %v2312 = vunpack.c.l.b16 %v2280
        %v2313 = vunpack.c.l.b16 %v2281
        %v2314 = vunpack.c.l.b16 %v2282
        %v2315 = vunpack.c.l.b16 %v2283
        %v2316 = vunpack.c.l.b16 %v2284
        %v2317 = vunpack.c.l.b16 %v2285
        %v2318 = vunpack.c.l.b16 %v2286
        %v2319 = vunpack.c.l.b16 %v2287
        %v2320 = vunpack.c.l.b16 %v2288
        %v2321 = vunpack.c.l.b16 %v2289
        %v2322 = vunpack.c.l.b16 %v2290
        %v2323 = vunpack.c.l.b16 %v2291
        %v2324 = vunpack.c.l.b16 %v2292
        %v2325 = vunpack.c.l.b16 %v2293
        %v2326 = vpack.c.b16 %v2311, %v2310
        %v2327 = vpack.c.b16 %v2313, %v2312
        %v2328 = vpack.c.b16 %v2315, %v2314
        %v2329 = vpack.c.b16 %v2317, %v2316
        %v2330 = vpack.c.b16 %v2319, %v2318
        %v2331 = vpack.c.b16 %v2321, %v2320
        %v2332 = vpack.c.b16 %v2323, %v2322
        %v2333 = vpack.c.b16 %v2325, %v2324
        %2342 = vmatprep.subr.bf16.mxu0 0
        %2343 = vmatpush1.bf16.msra.mxu0 %v2333
        %2344 = vmatprep.subr.bf16.mxu0 0
        %2345 = vmatpush1.bf16.msra.mxu0 %v2332
        %2346 = vmatprep.subr.bf16.mxu0 0
        %2347 = vmatpush1.bf16.msra.mxu0 %v2331
        %2348 = vmatprep.subr.bf16.mxu0 0
        %2349 = vmatpush1.bf16.msra.mxu0 %v2330
        %2350 = vmatprep.subr.bf16.mxu0 0
        %2351 = vmatpush1.bf16.msra.mxu0 %v2329
        %2352 = vmatprep.subr.bf16.mxu0 0
        %2353 = vmatpush1.bf16.msra.mxu0 %v2328
        %2354 = vmatprep.subr.bf16.mxu0 0
        %2355 = vmatpush1.bf16.msra.mxu0 %v2327
        %2356 = vmatprep.subr.bf16.mxu0 0
        %2357 = vmatpush1.bf16.msra.mxu0 %v2326
        %2358 = vmatprep.subr.bf16.mxu0 0
        %2359 = vmatpush2.bf16.msra.mxu0 0
        %2360 = vmatprep.subr.bf16.mxu0 0
        %2361 = vmatpush2.bf16.msra.mxu0 0
        %2362 = vmatprep.subr.bf16.mxu0 0
        %2363 = vmatpush2.bf16.msra.mxu0 0
        %2364 = vmatprep.subr.bf16.mxu0 0
        %2365 = vmatpush2.bf16.msra.mxu0 0
        %2366 = vmatprep.subr.bf16.mxu0 0
        %2367 = vmatpush2.bf16.msra.mxu0 0
        %2368 = vmatprep.subr.bf16.mxu0 0
        %2369 = vmatpush2.bf16.msra.mxu0 0
        %2370 = vmatprep.subr.bf16.mxu0 0
        %2371 = vmatpush2.bf16.msra.mxu0 0
        %2372 = vmatprep.subr.bf16.mxu0 0
        %2373 = vmatpush2.bf16.msra.mxu0 0
        %2374 = vmatprep.mubr.bf16.mxu0 0
        %2375 = vmatmul.mubr.bf16.gmra.mxu0 %v2276
        %v2376 = vpop.f32.mrf.mxu0
        %v2377 = vadd.f32 0.0, %v2376
        %v2378 = vpop.f32.mrf.mxu0
        %v2379 = vpop.f32.mrf.mxu0
        %v2380 = vpop.f32.mrf.mxu0
        %2381 = vdwg.mxu0
        %v2382 = vadd.f32 %v2171, %v2377
        %v2383 = vlaneseq
        %v2384 = vshrl.u32 %v2383, 7
        %v2385 = vsub.s32 4, %v2384
        %v2386 = vrot.slane %v1312, %v2385
        %v2387 = vadd.f32 %v2382, %v2386
        %s2388 = scalar_lea.vmem %s3, 32
        %v2389 = vld [vmem:[%s2388] sm:$0xff]
        %v2390 = vsel %vm234, %v2387, 0.0
        %2391 = vadd.xlane.f32.xlu0 %v2390
        %v2392 = vpop.xlane.xlu0 %2391
        %v2393 = vmul.f32 %v2392, %v238
        %v2394 = vsub.f32 %v2387, %v2393
        %v2395 = vmul.f32 %v2394, %v2394
        %v2396 = vsel %vm234, %v2395, 0.0
        %2397 = vadd.xlane.f32.xlu0 %v2396
        %v2398 = vpop.xlane.xlu0 %2397
        %v2399 = vmul.f32 %v2398, %v238
        %v2400 = vadd.f32 %v2399, 1e-05
        %v2401 = vrsqrt.pop %v2400
        %v2402 = vmul.f32 %v2394, %v2401
        %v2403 = vlaneseq
        %v2404 = vshrl.u32 %v2403, 7
        %v2405 = vsub.s32 0, %v2404
        %v2406 = vrot.slane %v2389, %v2405
        %v2407 = vmul.f32 %v2402, %v2406
        %v2408 = vlaneseq
        %v2409 = vshrl.u32 %v2408, 7
        %v2410 = vsub.s32 1, %v2409
        %v2411 = vrot.slane %v2389, %v2410
        %v2412 = vadd.f32 %v2407, %v2411
        %v2413 = vpack.c.bf16 %v2412, %v2412
        %v2414 = vld [vmem:[%s4] sm:$0xf]
        %v2415 = vld [vmem:[%s4 + $0x4] sm:$0xf]
        %v2416 = vld [vmem:[%s4 + $0x8] sm:$0xf]
        %v2417 = vld [vmem:[%s4 + $0xc] sm:$0xf]
        %v2422 = vunpack.c.l.b16 %v2414
        %v2423 = vunpack.c.l.b16 %v2415
        %v2424 = vunpack.c.l.b16 %v2416
        %v2425 = vunpack.c.l.b16 %v2417
        %v2426 = vpack.c.b16 %v2423, %v2422
        %v2427 = vpack.c.b16 %v2425, %v2424
        %v2431 = vsel %vm234, %v2413, 0
        %2433 = vmatprep.subr.bf16.mxu0 0
        %2434 = vmatpush1.bf16.msra.mxu0 0
        %2435 = vmatprep.subr.bf16.mxu0 0
        %2436 = vmatpush1.bf16.msra.mxu0 0
        %2437 = vmatprep.subr.bf16.mxu0 0
        %2438 = vmatpush1.bf16.msra.mxu0 0
        %2439 = vmatprep.subr.bf16.mxu0 0
        %2440 = vmatpush1.bf16.msra.mxu0 0
        %2441 = vmatprep.subr.bf16.mxu0 0
        %2442 = vmatpush1.bf16.msra.mxu0 0
        %2443 = vmatprep.subr.bf16.mxu0 0
        %2444 = vmatpush1.bf16.msra.mxu0 0
        %2445 = vmatprep.subr.bf16.mxu0 0
        %2446 = vmatpush1.bf16.msra.mxu0 %v2427
        %2447 = vmatprep.subr.bf16.mxu0 0
        %2448 = vmatpush1.bf16.msra.mxu0 %v2426
        %2449 = vmatprep.subr.bf16.mxu0 0
        %2450 = vmatpush2.bf16.msra.mxu0 0
        %2451 = vmatprep.subr.bf16.mxu0 0
        %2452 = vmatpush2.bf16.msra.mxu0 0
        %2453 = vmatprep.subr.bf16.mxu0 0
        %2454 = vmatpush2.bf16.msra.mxu0 0
        %2455 = vmatprep.subr.bf16.mxu0 0
        %2456 = vmatpush2.bf16.msra.mxu0 0
        %2457 = vmatprep.subr.bf16.mxu0 0
        %2458 = vmatpush2.bf16.msra.mxu0 0
        %2459 = vmatprep.subr.bf16.mxu0 0
        %2460 = vmatpush2.bf16.msra.mxu0 0
        %2461 = vmatprep.subr.bf16.mxu0 0
        %2462 = vmatpush2.bf16.msra.mxu0 0
        %2463 = vmatprep.subr.bf16.mxu0 0
        %2464 = vmatpush2.bf16.msra.mxu0 0
        %2465 = vmatprep.mubr.bf16.mxu0 0
        %2466 = vmatmul.mubr.bf16.gmra.mxu0 %v2431
        %v2467 = vpop.f32.mrf.mxu0
        %v2468 = vadd.f32 0.0, %v2467
        %v2469 = vpop.f32.mrf.mxu0
        %v2470 = vpop.f32.mrf.mxu0
        %v2471 = vpop.f32.mrf.mxu0
        %2472 = vdwg.mxu0
        %2473 = vst [vmem:[%s215] sm:$0xff] %v2468
        %s2474 = sand.u32 %s137, 1
        %s2475 = scalar_lea.sflag [#allocation3], %s2474
        %s2476 = sand.u32 %s137, 1
        %s2477 = smul.addr %s2476, 8
        %s2478 = scalar_lea.vmem [#allocation2], %s2477
        // Predicated region
        $region41: #{tpu_custom_call.1} parent=39 // pred_check
          %p2479 = pneg %p147
        $region42: #{tpu_custom_call.1} parent=39 // pred_check_branch
          %2481 = sbr.rel (%p2479) target = $region44
        $region43: #{tpu_custom_call.1} parent=39 // pred_region
          %s2483 = ssub.s32 128, 128
          %2484 = vsyncadd %s2475, %s2483
          %s2485 = smul.addr %s19, 128
          %s2486 = scalar_lea.hbm %s5, %s2485
          %s2488 = sshll.u32 %s2478, 4
          %s2489 = int_to_ptr.vmem [resolvable:$true] %s2488
          %2491 = dma.vmem_to_hbm [thread:$0]  %s2489, 128, %s2486, %s2475
        $region44: #{tpu_custom_call.1} parent=39 // pred_fallthru
          _
      $region40: #{tpu_custom_call.1} parent=5 // pred_fallthru
        _
      %p2492 = scmp.le.s32.totalorder 2, %s14
      // Predicated region
      $region45: #{tpu_custom_call.1} parent=5 // pred_check
        %p2493 = pneg %p2492
      $region46: #{tpu_custom_call.1} parent=5 // pred_check_branch
        %2495 = sbr.rel (%p2493) target = $region48
      $region47: #{tpu_custom_call.1} parent=5 // pred_region
        %s2496 = ssub.s32 %s14, 2
        // Predicated region
        $region49: #{tpu_custom_call.1} parent=47 // pred_check
          %p2497 = pneg %p153
        $region50: #{tpu_custom_call.1} parent=47 // pred_check_branch
          %2499 = sbr.rel (%p2497) target = $region52
        $region51: #{tpu_custom_call.1} parent=47 // pred_region
          %s2500 = sand.u32 %s138, 1
          %s2501 = scalar_lea.sflag [#allocation3], %s2500
          %s2502 = sand.u32 %s138, 1
          %s2503 = smul.addr %s2502, 8
          %s2504 = scalar_lea.vmem [#allocation2], %s2503
          %2505 = dma.done %s2501, 128
        $region52: #{tpu_custom_call.1} parent=47 // pred_fallthru
          _
      $region48: #{tpu_custom_call.1} parent=5 // pred_fallthru
        _
    $region6: #{tpu_custom_call.1} parent=1 // loop_footer
      %s18 = sadd.s32 1, %s14
    $region7: #{tpu_custom_call.1} parent=1 // loop_footer_branch
      %13 = sbr.rel target = $region3
    $region8: #{tpu_custom_call.1} parent=1 // loop_exit
      _
    %2506 = vsyncpa [#allocation3], 1
    %s2507 = scalar_lea.sflag [#allocation3], 1
    %2508 = vsyncpa %s2507, 1

</llo_original>
